<compile_context>
chip_gen: v6e
topology: v6e:2x2x1
jax: 0.10.0
libtpu: 0.0.40
codegen_flags: <defaults>
</compile_context>

<pallas_src>
import jax
import jax.numpy as jnp
import numpy as np
from jax.experimental import pallas as pl
from jax.experimental.pallas import tpu as pltpu


# ----------------------------------------------------------------------------
# Fused Pallas kernel: one image per grid step.
# Activation layout inside the kernel: (rows = y, cols = c * W + x).
# ----------------------------------------------------------------------------
def _lenet_fused_kernel(x_ref, w1_ref, b1_ref, l1_ref, r1_ref,
                        w2_ref, b2_ref, l2_ref, r2_ref,
                        w3_ref, b3_ref, wf1_ref, bf1_ref, wf2_ref, bf2_ref,
                        o_ref):
    f32 = jnp.float32

    # Input: zero-padded 32x32 image; clamp fused here (clamp(0)=0 so the
    # zero padding is unaffected).
    xp = jnp.clip(x_ref[0], 0.0, 1.0)                       # (32, 32)

    # conv1 (1->6, k=5, pad=2) as 5 row-shifted matmuls -> (28, 6*28)
    acc = jnp.dot(xp[0:28, :], w1_ref[0], preferred_element_type=f32)
    for i in range(1, 5):
        acc = acc + jnp.dot(xp[i:i + 28, :], w1_ref[i],
                            preferred_element_type=f32)
    y1 = jnp.maximum(acc + b1_ref[...], 0.0)                # (28, 168)

    # pool1: 2x2 avg via (left row-avg) @ y1 @ (right block-diag) -> (14, 6*14)
    p1 = jnp.dot(jnp.dot(l1_ref[...], y1, preferred_element_type=f32),
                 r1_ref[...], preferred_element_type=f32)   # (14, 84)

    # conv2 (6->16, k=5) -> (10, 16*10)
    acc = jnp.dot(p1[0:10, :], w2_ref[0], preferred_element_type=f32)
    for i in range(1, 5):
        acc = acc + jnp.dot(p1[i:i + 10, :], w2_ref[i],
                            preferred_element_type=f32)
    y2 = jnp.maximum(acc + b2_ref[...], 0.0)                # (10, 160)

    # pool2 -> (5, 16*5)
    p2 = jnp.dot(jnp.dot(l2_ref[...], y2, preferred_element_type=f32),
                 r2_ref[...], preferred_element_type=f32)   # (5, 80)

    # conv3 (16->120, k=5, full contraction) -> (1, 128) lane-dense padded
    acc = jnp.dot(p2[0:1, :], w3_ref[0], preferred_element_type=f32)
    for i in range(1, 5):
        acc = acc + jnp.dot(p2[i:i + 1, :], w3_ref[i],
                            preferred_element_type=f32)
    y3 = jnp.maximum(acc + b3_ref[...], 0.0)                # (1, 128)

    # fc1 (120->84) + ReLU, padded to 128 lanes
    y4 = jnp.maximum(jnp.dot(y3, wf1_ref[...], preferred_element_type=f32)
                     + bf1_ref[...], 0.0)                   # (1, 128)

    # fc2 (84->10), padded to 128 lanes (cols 10..127 are exactly zero)
    y5 = jnp.dot(y4, wf2_ref[...], preferred_element_type=f32) + bf2_ref[...]

    o_ref[0] = y5                                           # (1, 128)


# ----------------------------------------------------------------------------
# One-time host-side weight preparation (hoisted out of the forward path).
# ----------------------------------------------------------------------------
def prepare_lenet_constants(params):
    def band(w, win, wout, pad_to=None):
        # w: (Cout, Cin, k, k) ->  (k, Cin*win, Cout*wout[padded])
        # W[i][ci*win + xo + j, co*wout + xo] = w[co, ci, i, j]
        w = np.asarray(w, np.float32)
        cout, cin, k, _ = w.shape
        ncols = cout * wout if pad_to is None else max(cout * wout, pad_to)
        W = np.zeros((k, cin * win, ncols), np.float32)
        for i in range(k):
            for co in range(cout):
                for ci in range(cin):
                    for j in range(k):
                        for xo in range(wout):
                            W[i, ci * win + xo + j, co * wout + xo] = w[co, ci, i, j]
        return W

    def pool_left(hout, scale=0.25):
        L = np.zeros((hout, 2 * hout), np.float32)
        for yo in range(hout):
            L[yo, 2 * yo] = scale
            L[yo, 2 * yo + 1] = scale
        return L

    def pool_right(c, win):
        wout = win // 2
        R = np.zeros((c * win, c * wout), np.float32)
        for ci in range(c):
            for xo in range(wout):
                R[ci * win + 2 * xo, ci * wout + xo] = 1.0
                R[ci * win + 2 * xo + 1, ci * wout + xo] = 1.0
        return R

    def bias_row(b, wout, pad_to=None):
        row = np.repeat(np.asarray(b, np.float32), wout)
        if pad_to is not None and row.shape[0] < pad_to:
            row = np.pad(row, (0, pad_to - row.shape[0]))
        return row[None, :]

    c = {}
    c["w1"] = band(params["conv1_w"], 32, 28)             # (5, 32, 168)
    c["b1"] = bias_row(params["conv1_b"], 28)              # (1, 168)
    c["l1"] = pool_left(14)                                # (14, 28)
    c["r1"] = pool_right(6, 28)                            # (168, 84)
    c["w2"] = band(params["conv2_w"], 14, 10)              # (5, 84, 160)
    c["b2"] = bias_row(params["conv2_b"], 10)              # (1, 160)
    c["l2"] = pool_left(5)                                 # (5, 10)
    c["r2"] = pool_right(16, 10)                           # (160, 80)
    c["w3"] = band(params["conv3_w"], 5, 1, pad_to=128)    # (5, 80, 128)
    c["b3"] = bias_row(params["conv3_b"], 1, pad_to=128)   # (1, 128)
    wf1 = np.zeros((128, 128), np.float32)
    wf1[:120, :84] = np.asarray(params["fc1_w"], np.float32).T
    c["wf1"] = wf1
    c["bf1"] = bias_row(params["fc1_b"], 1, pad_to=128)
    wf2 = np.zeros((128, 128), np.float32)
    wf2[:84, :10] = np.asarray(params["fc2_w"], np.float32).T
    c["wf2"] = wf2
    c["bf2"] = bias_row(params["fc2_b"], 1, pad_to=128)
    return {k: jnp.asarray(v) for k, v in c.items()}


# ----------------------------------------------------------------------------
# Forward: one fused pallas_call, grid over the batch.
# ----------------------------------------------------------------------------
def lenet_forward(x, consts):
    n, _, h, w = x.shape
    x2 = x.reshape(n, h, w)
    xpad = jnp.pad(x2, ((0, 0), (2, 2), (2, 2)))           # (N, 32, 32)

    def full(arr):
        nd = arr.ndim
        return pl.BlockSpec(arr.shape, lambda b, _nd=nd: (0,) * _nd)

    in_specs = [
        pl.BlockSpec((1, 32, 32), lambda b: (b, 0, 0)),
        full(consts["w1"]), full(consts["b1"]),
        full(consts["l1"]), full(consts["r1"]),
        full(consts["w2"]), full(consts["b2"]),
        full(consts["l2"]), full(consts["r2"]),
        full(consts["w3"]), full(consts["b3"]),
        full(consts["wf1"]), full(consts["bf1"]),
        full(consts["wf2"]), full(consts["bf2"]),
    ]

    out = pl.pallas_call(
        _lenet_fused_kernel,
        out_shape=jax.ShapeDtypeStruct((n, 1, 128), jnp.float32),
        grid=(n,),
        in_specs=in_specs,
        out_specs=pl.BlockSpec((1, 1, 128), lambda b: (b, 0, 0)),
        compiler_params=pltpu.CompilerParams(
            dimension_semantics=("parallel",)),
    )(xpad,
      consts["w1"], consts["b1"], consts["l1"], consts["r1"],
      consts["w2"], consts["b2"], consts["l2"], consts["r2"],
      consts["w3"], consts["b3"],
      consts["wf1"], consts["bf1"], consts["wf2"], consts["bf2"])

    return out.reshape(n, 128)[:, :10]


# ----------------------------------------------------------------------------
# Pure-JAX reference (for correctness check)
# ----------------------------------------------------------------------------
def lenet_reference(x, params):
    hi = jax.lax.Precision.HIGHEST

    def conv(x, w, b, pad):
        y = jax.lax.conv_general_dilated(
            x, w, window_strides=(1, 1),
            padding=[(pad, pad), (pad, pad)],
            dimension_numbers=("NCHW", "OIHW", "NCHW"),
            precision=hi,
        )
        return y + b.reshape(1, -1, 1, 1)

    def pool(x):
        n, c, h, w = x.shape
        return x.reshape(n, c, h // 2, 2, w // 2, 2).mean(axis=(3, 5))

    x = jnp.clip(x, 0.0, 1.0)
    x = jax.nn.relu(conv(x, params["conv1_w"], params["conv1_b"], 2))
    x = pool(x)
    x = jax.nn.relu(conv(x, params["conv2_w"], params["conv2_b"], 0))
    x = pool(x)
    x = jax.nn.relu(conv(x, params["conv3_w"], params["conv3_b"], 0))
    x = x.reshape(x.shape[0], -1)
    x = jax.nn.relu(x @ params["fc1_w"].T + params["fc1_b"])
    x = x @ params["fc2_w"].T + params["fc2_b"]
    return x


# ----------------------------------------------------------------------------
# Deterministic parameter init (same shapes as the PyTorch module)
# ----------------------------------------------------------------------------
def init_params(key):
    shapes = {
        "conv1_w": (6, 1, 5, 5),    "conv1_b": (6,),
        "conv2_w": (16, 6, 5, 5),   "conv2_b": (16,),
        "conv3_w": (120, 16, 5, 5), "conv3_b": (120,),
        "fc1_w": (84, 120),         "fc1_b": (84,),
        "fc2_w": (10, 84),          "fc2_b": (10,),
    }
    params = {}
    keys = jax.random.split(key, len(shapes))
    for (name, shape), k in zip(shapes.items(), keys):
        fan_in = int(np.prod(shape[1:])) if len(shape) > 1 else shape[0]
        scale = 1.0 / np.sqrt(fan_in)
        params[name] = scale * jax.random.normal(k, shape, dtype=jnp.float32)
    return params


if __name__ == "__main__":
    key = jax.random.PRNGKey(0)
    k_param, k_x = jax.random.split(key)
    params = init_params(k_param)
    consts = prepare_lenet_constants(params)      # one-time weight prep

    # LeNet expects 28x28 single-channel images; small batch of 2.
    x = jax.random.uniform(k_x, (2, 1, 28, 28), dtype=jnp.float32,
                           minval=-0.2, maxval=1.2)

    fwd = jax.jit(lenet_forward)
    out = jax.block_until_ready(fwd(x, consts))

    ref = jax.block_until_ready(lenet_reference(x, params))
    np.testing.assert_allclose(np.asarray(out), np.asarray(ref),
                               rtol=2e-3, atol=2e-3)
    assert out.shape == (2, 10)

    print("KERNEL_OK")
</pallas_src>

<mosaic_0001>
module attributes {stable_mosaic.version = 11 : i64} {
  func.func @_lenet_fused_kernel(%arg0: i32, %arg1: memref<1x32x32xf32, #tpu.memory_space<vmem>>, %arg2: memref<5x32x168xf32, #tpu.memory_space<vmem>>, %arg3: memref<1x168xf32, #tpu.memory_space<vmem>>, %arg4: memref<14x28xf32, #tpu.memory_space<vmem>>, %arg5: memref<168x84xf32, #tpu.memory_space<vmem>>, %arg6: memref<5x84x160xf32, #tpu.memory_space<vmem>>, %arg7: memref<1x160xf32, #tpu.memory_space<vmem>>, %arg8: memref<5x10xf32, #tpu.memory_space<vmem>>, %arg9: memref<160x80xf32, #tpu.memory_space<vmem>>, %arg10: memref<5x80x128xf32, #tpu.memory_space<vmem>>, %arg11: memref<1x128xf32, #tpu.memory_space<vmem>>, %arg12: memref<128x128xf32, #tpu.memory_space<vmem>>, %arg13: memref<1x128xf32, #tpu.memory_space<vmem>>, %arg14: memref<128x128xf32, #tpu.memory_space<vmem>>, %arg15: memref<1x128xf32, #tpu.memory_space<vmem>>, %arg16: memref<1x1x128xf32, #tpu.memory_space<vmem>>) attributes {dimension_semantics = [#tpu.dimension_semantics<parallel>], iteration_bounds = array<i64: 2>, scalar_prefetch = 0 : i64, scratch_operands = 0 : i64, tpu.core_type = #tpu.core_type<tc>, window_params = [{transform_indices = @transform_0, window_bounds = array<i64: 1, 32, 32>}, {pipeline_mode = #tpu.pipeline_mode<synchronous>, transform_indices = @transform_1, window_bounds = array<i64: 5, 32, 168>}, {pipeline_mode = #tpu.pipeline_mode<synchronous>, transform_indices = @transform_2, window_bounds = array<i64: 1, 168>}, {pipeline_mode = #tpu.pipeline_mode<synchronous>, transform_indices = @transform_3, window_bounds = array<i64: 14, 28>}, {pipeline_mode = #tpu.pipeline_mode<synchronous>, transform_indices = @transform_4, window_bounds = array<i64: 168, 84>}, {pipeline_mode = #tpu.pipeline_mode<synchronous>, transform_indices = @transform_5, window_bounds = array<i64: 5, 84, 160>}, {pipeline_mode = #tpu.pipeline_mode<synchronous>, transform_indices = @transform_6, window_bounds = array<i64: 1, 160>}, {pipeline_mode = #tpu.pipeline_mode<synchronous>, transform_indices = @transform_7, window_bounds = array<i64: 5, 10>}, {pipeline_mode = #tpu.pipeline_mode<synchronous>, transform_indices = @transform_8, window_bounds = array<i64: 160, 80>}, {pipeline_mode = #tpu.pipeline_mode<synchronous>, transform_indices = @transform_9, window_bounds = array<i64: 5, 80, 128>}, {pipeline_mode = #tpu.pipeline_mode<synchronous>, transform_indices = @transform_10, window_bounds = array<i64: 1, 128>}, {pipeline_mode = #tpu.pipeline_mode<synchronous>, transform_indices = @transform_11, window_bounds = array<i64: 128, 128>}, {pipeline_mode = #tpu.pipeline_mode<synchronous>, transform_indices = @transform_12, window_bounds = array<i64: 1, 128>}, {pipeline_mode = #tpu.pipeline_mode<synchronous>, transform_indices = @transform_13, window_bounds = array<i64: 128, 128>}, {pipeline_mode = #tpu.pipeline_mode<synchronous>, transform_indices = @transform_14, window_bounds = array<i64: 1, 128>}, {transform_indices = @transform_15, window_bounds = array<i64: 1, 1, 128>}]} {
    %c0 = arith.constant 0 : index
    %c0_0 = arith.constant 0 : index
    %c0_1 = arith.constant 0 : index
    %0 = vector.load %arg1[%c0, %c0_0, %c0_1] : memref<1x32x32xf32, #tpu.memory_space<vmem>>, vector<1x32x32xf32>
    %1 = vector.shape_cast %0 : vector<1x32x32xf32> to vector<32x32xf32>
    %cst = arith.constant 0.000000e+00 : f32
    %cst_2 = arith.constant 1.000000e+00 : f32
    %2 = vector.broadcast %cst : f32 to vector<32x32xf32>
    %3 = arith.maximumf %2, %1 : vector<32x32xf32>
    %4 = vector.broadcast %cst_2 : f32 to vector<32x32xf32>
    %5 = arith.minimumf %4, %3 : vector<32x32xf32>
    %6 = vector.extract_strided_slice %5 {offsets = [0, 0], sizes = [28, 32], strides = [1, 1]} : vector<32x32xf32> to vector<28x32xf32>
    %c0_3 = arith.constant 0 : index
    %c0_4 = arith.constant 0 : index
    %c0_5 = arith.constant 0 : index
    %7 = vector.load %arg2[%c0_3, %c0_4, %c0_5] : memref<5x32x168xf32, #tpu.memory_space<vmem>>, vector<1x32x168xf32>
    %8 = vector.shape_cast %7 : vector<1x32x168xf32> to vector<32x168xf32>
    %cst_6 = arith.constant dense<0.000000e+00> : vector<28x168xf32>
    %9 = tpu.matmul %6, %8, %cst_6 {dimension_numbers = #tpu.dot_dimension_numbers<[1], [0], [0], [1], [0, 0, 1, 1], [], []>} : vector<28x32xf32>, vector<32x168xf32>, vector<28x168xf32> -> vector<28x168xf32>
    %10 = vector.extract_strided_slice %5 {offsets = [1, 0], sizes = [28, 32], strides = [1, 1]} : vector<32x32xf32> to vector<28x32xf32>
    %c1 = arith.constant 1 : index
    %c0_7 = arith.constant 0 : index
    %c0_8 = arith.constant 0 : index
    %11 = vector.load %arg2[%c1, %c0_7, %c0_8] : memref<5x32x168xf32, #tpu.memory_space<vmem>>, vector<1x32x168xf32>
    %12 = vector.shape_cast %11 : vector<1x32x168xf32> to vector<32x168xf32>
    %cst_9 = arith.constant dense<0.000000e+00> : vector<28x168xf32>
    %13 = tpu.matmul %10, %12, %cst_9 {dimension_numbers = #tpu.dot_dimension_numbers<[1], [0], [0], [1], [0, 0, 1, 1], [], []>} : vector<28x32xf32>, vector<32x168xf32>, vector<28x168xf32> -> vector<28x168xf32>
    %14 = arith.addf %9, %13 : vector<28x168xf32>
    %15 = vector.extract_strided_slice %5 {offsets = [2, 0], sizes = [28, 32], strides = [1, 1]} : vector<32x32xf32> to vector<28x32xf32>
    %c2 = arith.constant 2 : index
    %c0_10 = arith.constant 0 : index
    %c0_11 = arith.constant 0 : index
    %16 = vector.load %arg2[%c2, %c0_10, %c0_11] : memref<5x32x168xf32, #tpu.memory_space<vmem>>, vector<1x32x168xf32>
    %17 = vector.shape_cast %16 : vector<1x32x168xf32> to vector<32x168xf32>
    %cst_12 = arith.constant dense<0.000000e+00> : vector<28x168xf32>
    %18 = tpu.matmul %15, %17, %cst_12 {dimension_numbers = #tpu.dot_dimension_numbers<[1], [0], [0], [1], [0, 0, 1, 1], [], []>} : vector<28x32xf32>, vector<32x168xf32>, vector<28x168xf32> -> vector<28x168xf32>
    %19 = arith.addf %14, %18 : vector<28x168xf32>
    %20 = vector.extract_strided_slice %5 {offsets = [3, 0], sizes = [28, 32], strides = [1, 1]} : vector<32x32xf32> to vector<28x32xf32>
    %c3 = arith.constant 3 : index
    %c0_13 = arith.constant 0 : index
    %c0_14 = arith.constant 0 : index
    %21 = vector.load %arg2[%c3, %c0_13, %c0_14] : memref<5x32x168xf32, #tpu.memory_space<vmem>>, vector<1x32x168xf32>
    %22 = vector.shape_cast %21 : vector<1x32x168xf32> to vector<32x168xf32>
    %cst_15 = arith.constant dense<0.000000e+00> : vector<28x168xf32>
    %23 = tpu.matmul %20, %22, %cst_15 {dimension_numbers = #tpu.dot_dimension_numbers<[1], [0], [0], [1], [0, 0, 1, 1], [], []>} : vector<28x32xf32>, vector<32x168xf32>, vector<28x168xf32> -> vector<28x168xf32>
    %24 = arith.addf %19, %23 : vector<28x168xf32>
    %25 = vector.extract_strided_slice %5 {offsets = [4, 0], sizes = [28, 32], strides = [1, 1]} : vector<32x32xf32> to vector<28x32xf32>
    %c4 = arith.constant 4 : index
    %c0_16 = arith.constant 0 : index
    %c0_17 = arith.constant 0 : index
    %26 = vector.load %arg2[%c4, %c0_16, %c0_17] : memref<5x32x168xf32, #tpu.memory_space<vmem>>, vector<1x32x168xf32>
    %27 = vector.shape_cast %26 : vector<1x32x168xf32> to vector<32x168xf32>
    %cst_18 = arith.constant dense<0.000000e+00> : vector<28x168xf32>
    %28 = tpu.matmul %25, %27, %cst_18 {dimension_numbers = #tpu.dot_dimension_numbers<[1], [0], [0], [1], [0, 0, 1, 1], [], []>} : vector<28x32xf32>, vector<32x168xf32>, vector<28x168xf32> -> vector<28x168xf32>
    %29 = arith.addf %24, %28 : vector<28x168xf32>
    %c0_19 = arith.constant 0 : index
    %c0_20 = arith.constant 0 : index
    %30 = vector.load %arg3[%c0_19, %c0_20] : memref<1x168xf32, #tpu.memory_space<vmem>>, vector<1x168xf32>
    %31 = vector.broadcast %30 : vector<1x168xf32> to vector<28x168xf32>
    %32 = arith.addf %29, %31 : vector<28x168xf32>
    %cst_21 = arith.constant 0.000000e+00 : f32
    %33 = vector.broadcast %cst_21 : f32 to vector<28x168xf32>
    %34 = arith.maximumf %32, %33 : vector<28x168xf32>
    %c0_22 = arith.constant 0 : index
    %c0_23 = arith.constant 0 : index
    %35 = vector.load %arg4[%c0_22, %c0_23] : memref<14x28xf32, #tpu.memory_space<vmem>>, vector<14x28xf32>
    %cst_24 = arith.constant dense<0.000000e+00> : vector<14x168xf32>
    %36 = tpu.matmul %35, %34, %cst_24 {dimension_numbers = #tpu.dot_dimension_numbers<[1], [0], [0], [1], [0, 0, 1, 1], [], []>} : vector<14x28xf32>, vector<28x168xf32>, vector<14x168xf32> -> vector<14x168xf32>
    %c0_25 = arith.constant 0 : index
    %c0_26 = arith.constant 0 : index
    %37 = vector.load %arg5[%c0_25, %c0_26] : memref<168x84xf32, #tpu.memory_space<vmem>>, vector<168x84xf32>
    %cst_27 = arith.constant dense<0.000000e+00> : vector<14x84xf32>
    %38 = tpu.matmul %36, %37, %cst_27 {dimension_numbers = #tpu.dot_dimension_numbers<[1], [0], [0], [1], [0, 0, 1, 1], [], []>} : vector<14x168xf32>, vector<168x84xf32>, vector<14x84xf32> -> vector<14x84xf32>
    %39 = vector.extract_strided_slice %38 {offsets = [0, 0], sizes = [10, 84], strides = [1, 1]} : vector<14x84xf32> to vector<10x84xf32>
    %c0_28 = arith.constant 0 : index
    %c0_29 = arith.constant 0 : index
    %c0_30 = arith.constant 0 : index
    %40 = vector.load %arg6[%c0_28, %c0_29, %c0_30] : memref<5x84x160xf32, #tpu.memory_space<vmem>>, vector<1x84x160xf32>
    %41 = vector.shape_cast %40 : vector<1x84x160xf32> to vector<84x160xf32>
    %cst_31 = arith.constant dense<0.000000e+00> : vector<10x160xf32>
    %42 = tpu.matmul %39, %41, %cst_31 {dimension_numbers = #tpu.dot_dimension_numbers<[1], [0], [0], [1], [0, 0, 1, 1], [], []>} : vector<10x84xf32>, vector<84x160xf32>, vector<10x160xf32> -> vector<10x160xf32>
    %43 = vector.extract_strided_slice %38 {offsets = [1, 0], sizes = [10, 84], strides = [1, 1]} : vector<14x84xf32> to vector<10x84xf32>
    %c1_32 = arith.constant 1 : index
    %c0_33 = arith.constant 0 : index
    %c0_34 = arith.constant 0 : index
    %44 = vector.load %arg6[%c1_32, %c0_33, %c0_34] : memref<5x84x160xf32, #tpu.memory_space<vmem>>, vector<1x84x160xf32>
    %45 = vector.shape_cast %44 : vector<1x84x160xf32> to vector<84x160xf32>
    %cst_35 = arith.constant dense<0.000000e+00> : vector<10x160xf32>
    %46 = tpu.matmul %43, %45, %cst_35 {dimension_numbers = #tpu.dot_dimension_numbers<[1], [0], [0], [1], [0, 0, 1, 1], [], []>} : vector<10x84xf32>, vector<84x160xf32>, vector<10x160xf32> -> vector<10x160xf32>
    %47 = arith.addf %42, %46 : vector<10x160xf32>
    %48 = vector.extract_strided_slice %38 {offsets = [2, 0], sizes = [10, 84], strides = [1, 1]} : vector<14x84xf32> to vector<10x84xf32>
    %c2_36 = arith.constant 2 : index
    %c0_37 = arith.constant 0 : index
    %c0_38 = arith.constant 0 : index
    %49 = vector.load %arg6[%c2_36, %c0_37, %c0_38] : memref<5x84x160xf32, #tpu.memory_space<vmem>>, vector<1x84x160xf32>
    %50 = vector.shape_cast %49 : vector<1x84x160xf32> to vector<84x160xf32>
    %cst_39 = arith.constant dense<0.000000e+00> : vector<10x160xf32>
    %51 = tpu.matmul %48, %50, %cst_39 {dimension_numbers = #tpu.dot_dimension_numbers<[1], [0], [0], [1], [0, 0, 1, 1], [], []>} : vector<10x84xf32>, vector<84x160xf32>, vector<10x160xf32> -> vector<10x160xf32>
    %52 = arith.addf %47, %51 : vector<10x160xf32>
    %53 = vector.extract_strided_slice %38 {offsets = [3, 0], sizes = [10, 84], strides = [1, 1]} : vector<14x84xf32> to vector<10x84xf32>
    %c3_40 = arith.constant 3 : index
    %c0_41 = arith.constant 0 : index
    %c0_42 = arith.constant 0 : index
    %54 = vector.load %arg6[%c3_40, %c0_41, %c0_42] : memref<5x84x160xf32, #tpu.memory_space<vmem>>, vector<1x84x160xf32>
    %55 = vector.shape_cast %54 : vector<1x84x160xf32> to vector<84x160xf32>
    %cst_43 = arith.constant dense<0.000000e+00> : vector<10x160xf32>
    %56 = tpu.matmul %53, %55, %cst_43 {dimension_numbers = #tpu.dot_dimension_numbers<[1], [0], [0], [1], [0, 0, 1, 1], [], []>} : vector<10x84xf32>, vector<84x160xf32>, vector<10x160xf32> -> vector<10x160xf32>
    %57 = arith.addf %52, %56 : vector<10x160xf32>
    %58 = vector.extract_strided_slice %38 {offsets = [4, 0], sizes = [10, 84], strides = [1, 1]} : vector<14x84xf32> to vector<10x84xf32>
    %c4_44 = arith.constant 4 : index
    %c0_45 = arith.constant 0 : index
    %c0_46 = arith.constant 0 : index
    %59 = vector.load %arg6[%c4_44, %c0_45, %c0_46] : memref<5x84x160xf32, #tpu.memory_space<vmem>>, vector<1x84x160xf32>
    %60 = vector.shape_cast %59 : vector<1x84x160xf32> to vector<84x160xf32>
    %cst_47 = arith.constant dense<0.000000e+00> : vector<10x160xf32>
    %61 = tpu.matmul %58, %60, %cst_47 {dimension_numbers = #tpu.dot_dimension_numbers<[1], [0], [0], [1], [0, 0, 1, 1], [], []>} : vector<10x84xf32>, vector<84x160xf32>, vector<10x160xf32> -> vector<10x160xf32>
    %62 = arith.addf %57, %61 : vector<10x160xf32>
    %c0_48 = arith.constant 0 : index
    %c0_49 = arith.constant 0 : index
    %63 = vector.load %arg7[%c0_48, %c0_49] : memref<1x160xf32, #tpu.memory_space<vmem>>, vector<1x160xf32>
    %64 = vector.broadcast %63 : vector<1x160xf32> to vector<10x160xf32>
    %65 = arith.addf %62, %64 : vector<10x160xf32>
    %cst_50 = arith.constant 0.000000e+00 : f32
    %66 = vector.broadcast %cst_50 : f32 to vector<10x160xf32>
    %67 = arith.maximumf %65, %66 : vector<10x160xf32>
    %c0_51 = arith.constant 0 : index
    %c0_52 = arith.constant 0 : index
    %68 = vector.load %arg8[%c0_51, %c0_52] : memref<5x10xf32, #tpu.memory_space<vmem>>, vector<5x10xf32>
    %cst_53 = arith.constant dense<0.000000e+00> : vector<5x160xf32>
    %69 = tpu.matmul %68, %67, %cst_53 {dimension_numbers = #tpu.dot_dimension_numbers<[1], [0], [0], [1], [0, 0, 1, 1], [], []>} : vector<5x10xf32>, vector<10x160xf32>, vector<5x160xf32> -> vector<5x160xf32>
    %c0_54 = arith.constant 0 : index
    %c0_55 = arith.constant 0 : index
    %70 = vector.load %arg9[%c0_54, %c0_55] : memref<160x80xf32, #tpu.memory_space<vmem>>, vector<160x80xf32>
    %cst_56 = arith.constant dense<0.000000e+00> : vector<5x80xf32>
    %71 = tpu.matmul %69, %70, %cst_56 {dimension_numbers = #tpu.dot_dimension_numbers<[1], [0], [0], [1], [0, 0, 1, 1], [], []>} : vector<5x160xf32>, vector<160x80xf32>, vector<5x80xf32> -> vector<5x80xf32>
    %72 = vector.extract_strided_slice %71 {offsets = [0, 0], sizes = [1, 80], strides = [1, 1]} : vector<5x80xf32> to vector<1x80xf32>
    %c0_57 = arith.constant 0 : index
    %c0_58 = arith.constant 0 : index
    %c0_59 = arith.constant 0 : index
    %73 = vector.load %arg10[%c0_57, %c0_58, %c0_59] : memref<5x80x128xf32, #tpu.memory_space<vmem>>, vector<1x80x128xf32>
    %74 = vector.shape_cast %73 : vector<1x80x128xf32> to vector<80x128xf32>
    %cst_60 = arith.constant dense<0.000000e+00> : vector<1x128xf32>
    %75 = tpu.matmul %72, %74, %cst_60 {dimension_numbers = #tpu.dot_dimension_numbers<[1], [0], [0], [1], [0, 0, 1, 1], [], []>} : vector<1x80xf32>, vector<80x128xf32>, vector<1x128xf32> -> vector<1x128xf32>
    %76 = vector.extract_strided_slice %71 {offsets = [1, 0], sizes = [1, 80], strides = [1, 1]} : vector<5x80xf32> to vector<1x80xf32>
    %c1_61 = arith.constant 1 : index
    %c0_62 = arith.constant 0 : index
    %c0_63 = arith.constant 0 : index
    %77 = vector.load %arg10[%c1_61, %c0_62, %c0_63] : memref<5x80x128xf32, #tpu.memory_space<vmem>>, vector<1x80x128xf32>
    %78 = vector.shape_cast %77 : vector<1x80x128xf32> to vector<80x128xf32>
    %cst_64 = arith.constant dense<0.000000e+00> : vector<1x128xf32>
    %79 = tpu.matmul %76, %78, %cst_64 {dimension_numbers = #tpu.dot_dimension_numbers<[1], [0], [0], [1], [0, 0, 1, 1], [], []>} : vector<1x80xf32>, vector<80x128xf32>, vector<1x128xf32> -> vector<1x128xf32>
    %80 = arith.addf %75, %79 : vector<1x128xf32>
    %81 = vector.extract_strided_slice %71 {offsets = [2, 0], sizes = [1, 80], strides = [1, 1]} : vector<5x80xf32> to vector<1x80xf32>
    %c2_65 = arith.constant 2 : index
    %c0_66 = arith.constant 0 : index
    %c0_67 = arith.constant 0 : index
    %82 = vector.load %arg10[%c2_65, %c0_66, %c0_67] : memref<5x80x128xf32, #tpu.memory_space<vmem>>, vector<1x80x128xf32>
    %83 = vector.shape_cast %82 : vector<1x80x128xf32> to vector<80x128xf32>
    %cst_68 = arith.constant dense<0.000000e+00> : vector<1x128xf32>
    %84 = tpu.matmul %81, %83, %cst_68 {dimension_numbers = #tpu.dot_dimension_numbers<[1], [0], [0], [1], [0, 0, 1, 1], [], []>} : vector<1x80xf32>, vector<80x128xf32>, vector<1x128xf32> -> vector<1x128xf32>
    %85 = arith.addf %80, %84 : vector<1x128xf32>
    %86 = vector.extract_strided_slice %71 {offsets = [3, 0], sizes = [1, 80], strides = [1, 1]} : vector<5x80xf32> to vector<1x80xf32>
    %c3_69 = arith.constant 3 : index
    %c0_70 = arith.constant 0 : index
    %c0_71 = arith.constant 0 : index
    %87 = vector.load %arg10[%c3_69, %c0_70, %c0_71] : memref<5x80x128xf32, #tpu.memory_space<vmem>>, vector<1x80x128xf32>
    %88 = vector.shape_cast %87 : vector<1x80x128xf32> to vector<80x128xf32>
    %cst_72 = arith.constant dense<0.000000e+00> : vector<1x128xf32>
    %89 = tpu.matmul %86, %88, %cst_72 {dimension_numbers = #tpu.dot_dimension_numbers<[1], [0], [0], [1], [0, 0, 1, 1], [], []>} : vector<1x80xf32>, vector<80x128xf32>, vector<1x128xf32> -> vector<1x128xf32>
    %90 = arith.addf %85, %89 : vector<1x128xf32>
    %91 = vector.extract_strided_slice %71 {offsets = [4, 0], sizes = [1, 80], strides = [1, 1]} : vector<5x80xf32> to vector<1x80xf32>
    %c4_73 = arith.constant 4 : index
    %c0_74 = arith.constant 0 : index
    %c0_75 = arith.constant 0 : index
    %92 = vector.load %arg10[%c4_73, %c0_74, %c0_75] : memref<5x80x128xf32, #tpu.memory_space<vmem>>, vector<1x80x128xf32>
    %93 = vector.shape_cast %92 : vector<1x80x128xf32> to vector<80x128xf32>
    %cst_76 = arith.constant dense<0.000000e+00> : vector<1x128xf32>
    %94 = tpu.matmul %91, %93, %cst_76 {dimension_numbers = #tpu.dot_dimension_numbers<[1], [0], [0], [1], [0, 0, 1, 1], [], []>} : vector<1x80xf32>, vector<80x128xf32>, vector<1x128xf32> -> vector<1x128xf32>
    %95 = arith.addf %90, %94 : vector<1x128xf32>
    %c0_77 = arith.constant 0 : index
    %c0_78 = arith.constant 0 : index
    %96 = vector.load %arg11[%c0_77, %c0_78] : memref<1x128xf32, #tpu.memory_space<vmem>>, vector<1x128xf32>
    %97 = arith.addf %95, %96 : vector<1x128xf32>
    %cst_79 = arith.constant 0.000000e+00 : f32
    %98 = vector.broadcast %cst_79 : f32 to vector<1x128xf32>
    %99 = arith.maximumf %97, %98 : vector<1x128xf32>
    %c0_80 = arith.constant 0 : index
    %c0_81 = arith.constant 0 : index
    %100 = vector.load %arg12[%c0_80, %c0_81] : memref<128x128xf32, #tpu.memory_space<vmem>>, vector<128x128xf32>
    %cst_82 = arith.constant dense<0.000000e+00> : vector<1x128xf32>
    %101 = tpu.matmul %99, %100, %cst_82 {dimension_numbers = #tpu.dot_dimension_numbers<[1], [0], [0], [1], [0, 0, 1, 1], [], []>} : vector<1x128xf32>, vector<128x128xf32>, vector<1x128xf32> -> vector<1x128xf32>
    %c0_83 = arith.constant 0 : index
    %c0_84 = arith.constant 0 : index
    %102 = vector.load %arg13[%c0_83, %c0_84] : memref<1x128xf32, #tpu.memory_space<vmem>>, vector<1x128xf32>
    %103 = arith.addf %101, %102 : vector<1x128xf32>
    %cst_85 = arith.constant 0.000000e+00 : f32
    %104 = vector.broadcast %cst_85 : f32 to vector<1x128xf32>
    %105 = arith.maximumf %103, %104 : vector<1x128xf32>
    %c0_86 = arith.constant 0 : index
    %c0_87 = arith.constant 0 : index
    %106 = vector.load %arg14[%c0_86, %c0_87] : memref<128x128xf32, #tpu.memory_space<vmem>>, vector<128x128xf32>
    %cst_88 = arith.constant dense<0.000000e+00> : vector<1x128xf32>
    %107 = tpu.matmul %105, %106, %cst_88 {dimension_numbers = #tpu.dot_dimension_numbers<[1], [0], [0], [1], [0, 0, 1, 1], [], []>} : vector<1x128xf32>, vector<128x128xf32>, vector<1x128xf32> -> vector<1x128xf32>
    %c0_89 = arith.constant 0 : index
    %c0_90 = arith.constant 0 : index
    %108 = vector.load %arg15[%c0_89, %c0_90] : memref<1x128xf32, #tpu.memory_space<vmem>>, vector<1x128xf32>
    %109 = arith.addf %107, %108 : vector<1x128xf32>
    %c0_91 = arith.constant 0 : index
    %c0_92 = arith.constant 0 : index
    %c0_93 = arith.constant 0 : index
    %110 = vector.load %arg16[%c0_91, %c0_92, %c0_93] : memref<1x1x128xf32, #tpu.memory_space<vmem>>, vector<1x1x128xf32>
    %111 = vector.shape_cast %110 : vector<1x1x128xf32> to vector<1x128xf32>
    %112 = vector.shape_cast %109 : vector<1x128xf32> to vector<1x1x128xf32>
    tpu.vector_store %arg16[%c0_91, %c0_92, %c0_93], %112 {strides = array<i32>} : memref<1x1x128xf32, #tpu.memory_space<vmem>>, vector<1x1x128xf32>,
    return
  }
  func.func @transform_0(%arg0: i32) -> (i32, i32, i32) {
    %c0_i32 = arith.constant 0 : i32
    %c0_i32_0 = arith.constant 0 : i32
    %c0_i32_1 = arith.constant 0 : i32
    return %arg0, %c0_i32, %c0_i32_0 : i32, i32, i32
  }
  func.func @transform_1(%arg0: i32) -> (i32, i32, i32) {
    %c0_i32 = arith.constant 0 : i32
    %c0_i32_0 = arith.constant 0 : i32
    %c0_i32_1 = arith.constant 0 : i32
    %c0_i32_2 = arith.constant 0 : i32
    return %c0_i32, %c0_i32_0, %c0_i32_1 : i32, i32, i32
  }
  func.func @transform_2(%arg0: i32) -> (i32, i32) {
    %c0_i32 = arith.constant 0 : i32
    %c0_i32_0 = arith.constant 0 : i32
    %c0_i32_1 = arith.constant 0 : i32
    return %c0_i32, %c0_i32_0 : i32, i32
  }
  func.func @transform_3(%arg0: i32) -> (i32, i32) {
    %c0_i32 = arith.constant 0 : i32
    %c0_i32_0 = arith.constant 0 : i32
    %c0_i32_1 = arith.constant 0 : i32
    return %c0_i32, %c0_i32_0 : i32, i32
  }
  func.func @transform_4(%arg0: i32) -> (i32, i32) {
    %c0_i32 = arith.constant 0 : i32
    %c0_i32_0 = arith.constant 0 : i32
    %c0_i32_1 = arith.constant 0 : i32
    return %c0_i32, %c0_i32_0 : i32, i32
  }
  func.func @transform_5(%arg0: i32) -> (i32, i32, i32) {
    %c0_i32 = arith.constant 0 : i32
    %c0_i32_0 = arith.constant 0 : i32
    %c0_i32_1 = arith.constant 0 : i32
    %c0_i32_2 = arith.constant 0 : i32
    return %c0_i32, %c0_i32_0, %c0_i32_1 : i32, i32, i32
  }
  func.func @transform_6(%arg0: i32) -> (i32, i32) {
    %c0_i32 = arith.constant 0 : i32
    %c0_i32_0 = arith.constant 0 : i32
    %c0_i32_1 = arith.constant 0 : i32
    return %c0_i32, %c0_i32_0 : i32, i32
  }
  func.func @transform_7(%arg0: i32) -> (i32, i32) {
    %c0_i32 = arith.constant 0 : i32
    %c0_i32_0 = arith.constant 0 : i32
    %c0_i32_1 = arith.constant 0 : i32
    return %c0_i32, %c0_i32_0 : i32, i32
  }
  func.func @transform_8(%arg0: i32) -> (i32, i32) {
    %c0_i32 = arith.constant 0 : i32
    %c0_i32_0 = arith.constant 0 : i32
    %c0_i32_1 = arith.constant 0 : i32
    return %c0_i32, %c0_i32_0 : i32, i32
  }
  func.func @transform_9(%arg0: i32) -> (i32, i32, i32) {
    %c0_i32 = arith.constant 0 : i32
    %c0_i32_0 = arith.constant 0 : i32
    %c0_i32_1 = arith.constant 0 : i32
    %c0_i32_2 = arith.constant 0 : i32
    return %c0_i32, %c0_i32_0, %c0_i32_1 : i32, i32, i32
  }
  func.func @transform_10(%arg0: i32) -> (i32, i32) {
    %c0_i32 = arith.constant 0 : i32
    %c0_i32_0 = arith.constant 0 : i32
    %c0_i32_1 = arith.constant 0 : i32
    return %c0_i32, %c0_i32_0 : i32, i32
  }
  func.func @transform_11(%arg0: i32) -> (i32, i32) {
    %c0_i32 = arith.constant 0 : i32
    %c0_i32_0 = arith.constant 0 : i32
    %c0_i32_1 = arith.constant 0 : i32
    return %c0_i32, %c0_i32_0 : i32, i32
  }
  func.func @transform_12(%arg0: i32) -> (i32, i32) {
    %c0_i32 = arith.constant 0 : i32
    %c0_i32_0 = arith.constant 0 : i32
    %c0_i32_1 = arith.constant 0 : i32
    return %c0_i32, %c0_i32_0 : i32, i32
  }
  func.func @transform_13(%arg0: i32) -> (i32, i32) {
    %c0_i32 = arith.constant 0 : i32
    %c0_i32_0 = arith.constant 0 : i32
    %c0_i32_1 = arith.constant 0 : i32
    return %c0_i32, %c0_i32_0 : i32, i32
  }
  func.func @transform_14(%arg0: i32) -> (i32, i32) {
    %c0_i32 = arith.constant 0 : i32
    %c0_i32_0 = arith.constant 0 : i32
    %c0_i32_1 = arith.constant 0 : i32
    return %c0_i32, %c0_i32_0 : i32, i32
  }
  func.func @transform_15(%arg0: i32) -> (i32, i32, i32) {
    %c0_i32 = arith.constant 0 : i32
    %c0_i32_0 = arith.constant 0 : i32
    %c0_i32_1 = arith.constant 0 : i32
    return %arg0, %c0_i32, %c0_i32_0 : i32, i32, i32
  }
}

</mosaic_0001>

<llo_original>
// kernel: lenet_forward.1
$region0: #{lenet_forward.1}
  #allocation0 [shape = 'u32[]', space=smem, size = 0x4, offset = 0x4, fixed_abs, tag = 'smem constant byte address 0x4 - core index']
  #allocation1 [shape = 'u32[144,128]{1,0:T(1,128)}', space=vmem, size = 0x12000, scoped, tag = 'internal scratch']
  %s0 = inlined_call_operand.vmem [shape: f32[2,32,32], index: 0, kind: input, shape index: {}]
  %s1 = inlined_call_operand.vmem [shape: f32[5,32,168], index: 1, kind: input, shape index: {}]
  %s2 = inlined_call_operand.vmem [shape: f32[1,168], index: 2, kind: input, shape index: {}]
  %s3 = inlined_call_operand.vmem [shape: f32[14,28], index: 3, kind: input, shape index: {}]
  %s4 = inlined_call_operand.vmem [shape: f32[168,84], index: 4, kind: input, shape index: {}]
  %s5 = inlined_call_operand.vmem [shape: f32[5,84,160], index: 5, kind: input, shape index: {}]
  %s6 = inlined_call_operand.vmem [shape: f32[1,160], index: 6, kind: input, shape index: {}]
  %s7 = inlined_call_operand.vmem [shape: f32[5,10], index: 7, kind: input, shape index: {}]
  %s8 = inlined_call_operand.vmem [shape: f32[160,80], index: 8, kind: input, shape index: {}]
  %s9 = inlined_call_operand.vmem [shape: f32[5,80,128], index: 9, kind: input, shape index: {}]
  %s10 = inlined_call_operand.vmem [shape: f32[1,128], index: 10, kind: input, shape index: {}]
  %s11 = inlined_call_operand.vmem [shape: f32[128,128], index: 11, kind: input, shape index: {}]
  %s12 = inlined_call_operand.vmem [shape: f32[1,128], index: 12, kind: input, shape index: {}]
  %s13 = inlined_call_operand.vmem [shape: f32[128,128], index: 13, kind: input, shape index: {}]
  %s14 = inlined_call_operand.vmem [shape: f32[1,128], index: 14, kind: input, shape index: {}]
  %s15 = inlined_call_operand.hbm [shape: f32[2,1,128], index: 15, kind: output, shape index: {}]
  %s16 = sld [smem:[#allocation0]]
  $region93: #{lenet_forward.1} parent=0
    _
  %s18 = ssub.s32 1, %s16
  %s19 = scalar_select 0, %s18, %s16
  $region1: #{lenet_forward.1} parent=0
    #allocation2 [shape = 'u8[1024]{0}', space=vmem, size = 0x400, scoped, tag = 'output window, operand 0']
    #allocation3 [shape = 's32[2]{0}', space=sflag, size = 0x8, scoped, tag = 'scoped memory for lenet_forward.1']
    %20 = vsyncpa [#allocation3], 0
    %s21 = scalar_lea.sflag [#allocation3], 1
    %22 = vsyncpa %s21, 0
    loop: start=0, step=1, limit=4
    $region2: #{lenet_forward.1} parent=1 // loop_pre_header
      _
    $region3: #{lenet_forward.1} parent=1 // loop_header
      %s24 = sphi 0, %s28
      %p25 = scmp.ge.s32.totalorder %s24, 4
      %s34 = sphi 0, %s36
      %s37 = sphi 0, %s34
      %s38 = sphi 0, %s37
      %s54 = sphi 0, %s38
      %s58 = sphi 0, %s58
      %s60 = sphi 0, %s58
      %s61 = sphi 0, %s60
      %s75 = sphi 0, %s61
      %s79 = sphi 0, %s79
      %s81 = sphi 0, %s79
      %s82 = sphi 0, %s81
      %s96 = sphi 0, %s82
      %s100 = sphi 0, %s100
      %s102 = sphi 0, %s100
      %s103 = sphi 0, %s102
      %s117 = sphi 0, %s103
      %s121 = sphi 0, %s121
      %s123 = sphi 0, %s121
      %s124 = sphi 0, %s123
      %s138 = sphi 0, %s124
      %s142 = sphi 0, %s142
      %s144 = sphi 0, %s142
      %s145 = sphi 0, %s144
      %s159 = sphi 0, %s145
      %s163 = sphi 0, %s163
      %s165 = sphi 0, %s163
      %s166 = sphi 0, %s165
      %s180 = sphi 0, %s166
      %s184 = sphi 0, %s184
      %s186 = sphi 0, %s184
      %s187 = sphi 0, %s186
      %s201 = sphi 0, %s187
      %s205 = sphi 0, %s205
      %s207 = sphi 0, %s205
      %s208 = sphi 0, %s207
      %s222 = sphi 0, %s208
      %s226 = sphi 0, %s226
      %s228 = sphi 0, %s226
      %s229 = sphi 0, %s228
      %s243 = sphi 0, %s229
      %s247 = sphi 0, %s247
      %s249 = sphi 0, %s247
      %s250 = sphi 0, %s249
      %s264 = sphi 0, %s250
      %s268 = sphi 0, %s268
      %s270 = sphi 0, %s268
      %s271 = sphi 0, %s270
      %s285 = sphi 0, %s271
      %s289 = sphi 0, %s289
      %s291 = sphi 0, %s289
      %s292 = sphi 0, %s291
      %s306 = sphi 0, %s292
      %s310 = sphi 0, %s310
      %s312 = sphi 0, %s310
      %s313 = sphi 0, %s312
      %s327 = sphi 0, %s313
      %s331 = sphi 0, %s331
      %s333 = sphi 0, %s331
      %s334 = sphi 0, %s333
      %s348 = sphi 0, %s334
      %s354 = sphi 0, %s356
      %s357 = sphi 0, %s354
      %s358 = sphi 0, %s357
      %s374 = sphi 0, %s358
    $region4: #{lenet_forward.1} parent=1 // loop_header_branch
      %27 = sbr.rel (%p25) target = $region8
    $region5: #{lenet_forward.1} parent=1 // loop_body
      %s29 = ssub.s32 %s24, 1
      %s30 = ssub.s32 %s24, 2
      %s31 = sadd.s32 %s24, 1
      %s32 = ssub.s32 %s24, %s31
      %p33 = scmp.eq.s32.totalorder %s32, 0
      %s35 = sadd.s32 %s34, 1
      %s36 = scalar_select %p33, %s34, %s35
      %p39 = pneg %p33
      %p40 = scmp.eq.s32.totalorder %s24, 1
      %p41 = por %p39, %p40
      %p42 = scmp.ne.s32.totalorder %s34, %s37
      %p43 = scmp.eq.s32.totalorder %s24, 0
      %p44 = por %p42, %p43
      %p45 = scmp.ne.s32.totalorder %s34, %s37
      %p46 = scmp.eq.s32.totalorder %s29, 1
      %p47 = por %p45, %p46
      %p48 = scmp.ne.s32.totalorder %s37, %s38
      %p49 = scmp.eq.s32.totalorder %s29, 0
      %p50 = por %p48, %p49
      %p51 = scmp.ne.s32.totalorder %s37, %s38
      %p52 = scmp.eq.s32.totalorder %s30, 1
      %p53 = por %p51, %p52
      %p55 = scmp.ne.s32.totalorder %s38, %s54
      %p56 = scmp.eq.s32.totalorder %s30, 0
      %p57 = por %p55, %p56
      %s59 = sadd.s32 %s58, 1
      %p62 = scmp.eq.s32.totalorder %s24, 1
      %p63 = scmp.ne.s32.totalorder %s58, %s60
      %p64 = scmp.eq.s32.totalorder %s24, 0
      %p65 = por %p63, %p64
      %p66 = scmp.ne.s32.totalorder %s58, %s60
      %p67 = scmp.eq.s32.totalorder %s29, 1
      %p68 = por %p66, %p67
      %p69 = scmp.ne.s32.totalorder %s60, %s61
      %p70 = scmp.eq.s32.totalorder %s29, 0
      %p71 = por %p69, %p70
      %p72 = scmp.ne.s32.totalorder %s60, %s61
      %p73 = scmp.eq.s32.totalorder %s30, 1
      %p74 = por %p72, %p73
      %p76 = scmp.ne.s32.totalorder %s61, %s75
      %p77 = scmp.eq.s32.totalorder %s30, 0
      %p78 = por %p76, %p77
      %s80 = sadd.s32 %s79, 1
      %p83 = scmp.eq.s32.totalorder %s24, 1
      %p84 = scmp.ne.s32.totalorder %s79, %s81
      %p85 = scmp.eq.s32.totalorder %s24, 0
      %p86 = por %p84, %p85
      %p87 = scmp.ne.s32.totalorder %s79, %s81
      %p88 = scmp.eq.s32.totalorder %s29, 1
      %p89 = por %p87, %p88
      %p90 = scmp.ne.s32.totalorder %s81, %s82
      %p91 = scmp.eq.s32.totalorder %s29, 0
      %p92 = por %p90, %p91
      %p93 = scmp.ne.s32.totalorder %s81, %s82
      %p94 = scmp.eq.s32.totalorder %s30, 1
      %p95 = por %p93, %p94
      %p97 = scmp.ne.s32.totalorder %s82, %s96
      %p98 = scmp.eq.s32.totalorder %s30, 0
      %p99 = por %p97, %p98
      %s101 = sadd.s32 %s100, 1
      %p104 = scmp.eq.s32.totalorder %s24, 1
      %p105 = scmp.ne.s32.totalorder %s100, %s102
      %p106 = scmp.eq.s32.totalorder %s24, 0
      %p107 = por %p105, %p106
      %p108 = scmp.ne.s32.totalorder %s100, %s102
      %p109 = scmp.eq.s32.totalorder %s29, 1
      %p110 = por %p108, %p109
      %p111 = scmp.ne.s32.totalorder %s102, %s103
      %p112 = scmp.eq.s32.totalorder %s29, 0
      %p113 = por %p111, %p112
      %p114 = scmp.ne.s32.totalorder %s102, %s103
      %p115 = scmp.eq.s32.totalorder %s30, 1
      %p116 = por %p114, %p115
      %p118 = scmp.ne.s32.totalorder %s103, %s117
      %p119 = scmp.eq.s32.totalorder %s30, 0
      %p120 = por %p118, %p119
      %s122 = sadd.s32 %s121, 1
      %p125 = scmp.eq.s32.totalorder %s24, 1
      %p126 = scmp.ne.s32.totalorder %s121, %s123
      %p127 = scmp.eq.s32.totalorder %s24, 0
      %p128 = por %p126, %p127
      %p129 = scmp.ne.s32.totalorder %s121, %s123
      %p130 = scmp.eq.s32.totalorder %s29, 1
      %p131 = por %p129, %p130
      %p132 = scmp.ne.s32.totalorder %s123, %s124
      %p133 = scmp.eq.s32.totalorder %s29, 0
      %p134 = por %p132, %p133
      %p135 = scmp.ne.s32.totalorder %s123, %s124
      %p136 = scmp.eq.s32.totalorder %s30, 1
      %p137 = por %p135, %p136
      %p139 = scmp.ne.s32.totalorder %s124, %s138
      %p140 = scmp.eq.s32.totalorder %s30, 0
      %p141 = por %p139, %p140
      %s143 = sadd.s32 %s142, 1
      %p146 = scmp.eq.s32.totalorder %s24, 1
      %p147 = scmp.ne.s32.totalorder %s142, %s144
      %p148 = scmp.eq.s32.totalorder %s24, 0
      %p149 = por %p147, %p148
      %p150 = scmp.ne.s32.totalorder %s142, %s144
      %p151 = scmp.eq.s32.totalorder %s29, 1
      %p152 = por %p150, %p151
      %p153 = scmp.ne.s32.totalorder %s144, %s145
      %p154 = scmp.eq.s32.totalorder %s29, 0
      %p155 = por %p153, %p154
      %p156 = scmp.ne.s32.totalorder %s144, %s145
      %p157 = scmp.eq.s32.totalorder %s30, 1
      %p158 = por %p156, %p157
      %p160 = scmp.ne.s32.totalorder %s145, %s159
      %p161 = scmp.eq.s32.totalorder %s30, 0
      %p162 = por %p160, %p161
      %s164 = sadd.s32 %s163, 1
      %p167 = scmp.eq.s32.totalorder %s24, 1
      %p168 = scmp.ne.s32.totalorder %s163, %s165
      %p169 = scmp.eq.s32.totalorder %s24, 0
      %p170 = por %p168, %p169
      %p171 = scmp.ne.s32.totalorder %s163, %s165
      %p172 = scmp.eq.s32.totalorder %s29, 1
      %p173 = por %p171, %p172
      %p174 = scmp.ne.s32.totalorder %s165, %s166
      %p175 = scmp.eq.s32.totalorder %s29, 0
      %p176 = por %p174, %p175
      %p177 = scmp.ne.s32.totalorder %s165, %s166
      %p178 = scmp.eq.s32.totalorder %s30, 1
      %p179 = por %p177, %p178
      %p181 = scmp.ne.s32.totalorder %s166, %s180
      %p182 = scmp.eq.s32.totalorder %s30, 0
      %p183 = por %p181, %p182
      %s185 = sadd.s32 %s184, 1
      %p188 = scmp.eq.s32.totalorder %s24, 1
      %p189 = scmp.ne.s32.totalorder %s184, %s186
      %p190 = scmp.eq.s32.totalorder %s24, 0
      %p191 = por %p189, %p190
      %p192 = scmp.ne.s32.totalorder %s184, %s186
      %p193 = scmp.eq.s32.totalorder %s29, 1
      %p194 = por %p192, %p193
      %p195 = scmp.ne.s32.totalorder %s186, %s187
      %p196 = scmp.eq.s32.totalorder %s29, 0
      %p197 = por %p195, %p196
      %p198 = scmp.ne.s32.totalorder %s186, %s187
      %p199 = scmp.eq.s32.totalorder %s30, 1
      %p200 = por %p198, %p199
      %p202 = scmp.ne.s32.totalorder %s187, %s201
      %p203 = scmp.eq.s32.totalorder %s30, 0
      %p204 = por %p202, %p203
      %s206 = sadd.s32 %s205, 1
      %p209 = scmp.eq.s32.totalorder %s24, 1
      %p210 = scmp.ne.s32.totalorder %s205, %s207
      %p211 = scmp.eq.s32.totalorder %s24, 0
      %p212 = por %p210, %p211
      %p213 = scmp.ne.s32.totalorder %s205, %s207
      %p214 = scmp.eq.s32.totalorder %s29, 1
      %p215 = por %p213, %p214
      %p216 = scmp.ne.s32.totalorder %s207, %s208
      %p217 = scmp.eq.s32.totalorder %s29, 0
      %p218 = por %p216, %p217
      %p219 = scmp.ne.s32.totalorder %s207, %s208
      %p220 = scmp.eq.s32.totalorder %s30, 1
      %p221 = por %p219, %p220
      %p223 = scmp.ne.s32.totalorder %s208, %s222
      %p224 = scmp.eq.s32.totalorder %s30, 0
      %p225 = por %p223, %p224
      %s227 = sadd.s32 %s226, 1
      %p230 = scmp.eq.s32.totalorder %s24, 1
      %p231 = scmp.ne.s32.totalorder %s226, %s228
      %p232 = scmp.eq.s32.totalorder %s24, 0
      %p233 = por %p231, %p232
      %p234 = scmp.ne.s32.totalorder %s226, %s228
      %p235 = scmp.eq.s32.totalorder %s29, 1
      %p236 = por %p234, %p235
      %p237 = scmp.ne.s32.totalorder %s228, %s229
      %p238 = scmp.eq.s32.totalorder %s29, 0
      %p239 = por %p237, %p238
      %p240 = scmp.ne.s32.totalorder %s228, %s229
      %p241 = scmp.eq.s32.totalorder %s30, 1
      %p242 = por %p240, %p241
      %p244 = scmp.ne.s32.totalorder %s229, %s243
      %p245 = scmp.eq.s32.totalorder %s30, 0
      %p246 = por %p244, %p245
      %s248 = sadd.s32 %s247, 1
      %p251 = scmp.eq.s32.totalorder %s24, 1
      %p252 = scmp.ne.s32.totalorder %s247, %s249
      %p253 = scmp.eq.s32.totalorder %s24, 0
      %p254 = por %p252, %p253
      %p255 = scmp.ne.s32.totalorder %s247, %s249
      %p256 = scmp.eq.s32.totalorder %s29, 1
      %p257 = por %p255, %p256
      %p258 = scmp.ne.s32.totalorder %s249, %s250
      %p259 = scmp.eq.s32.totalorder %s29, 0
      %p260 = por %p258, %p259
      %p261 = scmp.ne.s32.totalorder %s249, %s250
      %p262 = scmp.eq.s32.totalorder %s30, 1
      %p263 = por %p261, %p262
      %p265 = scmp.ne.s32.totalorder %s250, %s264
      %p266 = scmp.eq.s32.totalorder %s30, 0
      %p267 = por %p265, %p266
      %s269 = sadd.s32 %s268, 1
      %p272 = scmp.eq.s32.totalorder %s24, 1
      %p273 = scmp.ne.s32.totalorder %s268, %s270
      %p274 = scmp.eq.s32.totalorder %s24, 0
      %p275 = por %p273, %p274
      %p276 = scmp.ne.s32.totalorder %s268, %s270
      %p277 = scmp.eq.s32.totalorder %s29, 1
      %p278 = por %p276, %p277
      %p279 = scmp.ne.s32.totalorder %s270, %s271
      %p280 = scmp.eq.s32.totalorder %s29, 0
      %p281 = por %p279, %p280
      %p282 = scmp.ne.s32.totalorder %s270, %s271
      %p283 = scmp.eq.s32.totalorder %s30, 1
      %p284 = por %p282, %p283
      %p286 = scmp.ne.s32.totalorder %s271, %s285
      %p287 = scmp.eq.s32.totalorder %s30, 0
      %p288 = por %p286, %p287
      %s290 = sadd.s32 %s289, 1
      %p293 = scmp.eq.s32.totalorder %s24, 1
      %p294 = scmp.ne.s32.totalorder %s289, %s291
      %p295 = scmp.eq.s32.totalorder %s24, 0
      %p296 = por %p294, %p295
      %p297 = scmp.ne.s32.totalorder %s289, %s291
      %p298 = scmp.eq.s32.totalorder %s29, 1
      %p299 = por %p297, %p298
      %p300 = scmp.ne.s32.totalorder %s291, %s292
      %p301 = scmp.eq.s32.totalorder %s29, 0
      %p302 = por %p300, %p301
      %p303 = scmp.ne.s32.totalorder %s291, %s292
      %p304 = scmp.eq.s32.totalorder %s30, 1
      %p305 = por %p303, %p304
      %p307 = scmp.ne.s32.totalorder %s292, %s306
      %p308 = scmp.eq.s32.totalorder %s30, 0
      %p309 = por %p307, %p308
      %s311 = sadd.s32 %s310, 1
      %p314 = scmp.eq.s32.totalorder %s24, 1
      %p315 = scmp.ne.s32.totalorder %s310, %s312
      %p316 = scmp.eq.s32.totalorder %s24, 0
      %p317 = por %p315, %p316
      %p318 = scmp.ne.s32.totalorder %s310, %s312
      %p319 = scmp.eq.s32.totalorder %s29, 1
      %p320 = por %p318, %p319
      %p321 = scmp.ne.s32.totalorder %s312, %s313
      %p322 = scmp.eq.s32.totalorder %s29, 0
      %p323 = por %p321, %p322
      %p324 = scmp.ne.s32.totalorder %s312, %s313
      %p325 = scmp.eq.s32.totalorder %s30, 1
      %p326 = por %p324, %p325
      %p328 = scmp.ne.s32.totalorder %s313, %s327
      %p329 = scmp.eq.s32.totalorder %s30, 0
      %p330 = por %p328, %p329
      %s332 = sadd.s32 %s331, 1
      %p335 = scmp.eq.s32.totalorder %s24, 1
      %p336 = scmp.ne.s32.totalorder %s331, %s333
      %p337 = scmp.eq.s32.totalorder %s24, 0
      %p338 = por %p336, %p337
      %p339 = scmp.ne.s32.totalorder %s331, %s333
      %p340 = scmp.eq.s32.totalorder %s29, 1
      %p341 = por %p339, %p340
      %p342 = scmp.ne.s32.totalorder %s333, %s334
      %p343 = scmp.eq.s32.totalorder %s29, 0
      %p344 = por %p342, %p343
      %p345 = scmp.ne.s32.totalorder %s333, %s334
      %p346 = scmp.eq.s32.totalorder %s30, 1
      %p347 = por %p345, %p346
      %p349 = scmp.ne.s32.totalorder %s334, %s348
      %p350 = scmp.eq.s32.totalorder %s30, 0
      %p351 = por %p349, %p350
      %s352 = ssub.s32 %s24, %s31
      %p353 = scmp.eq.s32.totalorder %s352, 0
      %s355 = sadd.s32 %s354, 1
      %s356 = scalar_select %p353, %s354, %s355
      %p359 = pneg %p353
      %p360 = scmp.eq.s32.totalorder %s24, 1
      %p361 = por %p359, %p360
      %p362 = scmp.ne.s32.totalorder %s354, %s357
      %p363 = scmp.eq.s32.totalorder %s24, 0
      %p364 = por %p362, %p363
      %p365 = scmp.ne.s32.totalorder %s354, %s357
      %p366 = scmp.eq.s32.totalorder %s29, 1
      %p367 = por %p365, %p366
      %p368 = scmp.ne.s32.totalorder %s357, %s358
      %p369 = scmp.eq.s32.totalorder %s29, 0
      %p370 = por %p368, %p369
      %p371 = scmp.ne.s32.totalorder %s357, %s358
      %p372 = scmp.eq.s32.totalorder %s30, 1
      %p373 = por %p371, %p372
      %p375 = scmp.ne.s32.totalorder %s358, %s374
      %p376 = scmp.eq.s32.totalorder %s30, 0
      %p377 = por %p375, %p376
      %p378 = scmp.le.s32.totalorder 1, %s24
      %p379 = scmp.lt.s32.totalorder %s24, 3
      %p380 = pnand %p378, %p379
      %p381 = pneg %p380
      // Predicated region
      $region9: #{lenet_forward.1} parent=5 // pred_check
        _
      $region10: #{lenet_forward.1} parent=5 // pred_check_branch
        %383 = sbr.rel (%p380) target = $region12
      $region11: #{lenet_forward.1} parent=5 // pred_region
        %s384 = ssub.s32 %s24, 1
        // Predicated region
        $region13: #{lenet_forward.1} parent=11 // pred_check
          %p385 = pneg %p71
        $region14: #{lenet_forward.1} parent=11 // pred_check_branch
          %387 = sbr.rel (%p385) target = $region16
        $region15: #{lenet_forward.1} parent=11 // pred_region
          _
        $region16: #{lenet_forward.1} parent=11 // pred_fallthru
          _
        // Predicated region
        $region17: #{lenet_forward.1} parent=11 // pred_check
          %p388 = pneg %p92
        $region18: #{lenet_forward.1} parent=11 // pred_check_branch
          %390 = sbr.rel (%p388) target = $region20
        $region19: #{lenet_forward.1} parent=11 // pred_region
          _
        $region20: #{lenet_forward.1} parent=11 // pred_fallthru
          _
        // Predicated region
        $region21: #{lenet_forward.1} parent=11 // pred_check
          %p391 = pneg %p113
        $region22: #{lenet_forward.1} parent=11 // pred_check_branch
          %393 = sbr.rel (%p391) target = $region24
        $region23: #{lenet_forward.1} parent=11 // pred_region
          _
        $region24: #{lenet_forward.1} parent=11 // pred_fallthru
          _
        // Predicated region
        $region25: #{lenet_forward.1} parent=11 // pred_check
          %p394 = pneg %p134
        $region26: #{lenet_forward.1} parent=11 // pred_check_branch
          %396 = sbr.rel (%p394) target = $region28
        $region27: #{lenet_forward.1} parent=11 // pred_region
          _
        $region28: #{lenet_forward.1} parent=11 // pred_fallthru
          _
        // Predicated region
        $region29: #{lenet_forward.1} parent=11 // pred_check
          %p397 = pneg %p155
        $region30: #{lenet_forward.1} parent=11 // pred_check_branch
          %399 = sbr.rel (%p397) target = $region32
        $region31: #{lenet_forward.1} parent=11 // pred_region
          _
        $region32: #{lenet_forward.1} parent=11 // pred_fallthru
          _
        // Predicated region
        $region33: #{lenet_forward.1} parent=11 // pred_check
          %p400 = pneg %p176
        $region34: #{lenet_forward.1} parent=11 // pred_check_branch
          %402 = sbr.rel (%p400) target = $region36
        $region35: #{lenet_forward.1} parent=11 // pred_region
          _
        $region36: #{lenet_forward.1} parent=11 // pred_fallthru
          _
        // Predicated region
        $region37: #{lenet_forward.1} parent=11 // pred_check
          %p403 = pneg %p197
        $region38: #{lenet_forward.1} parent=11 // pred_check_branch
          %405 = sbr.rel (%p403) target = $region40
        $region39: #{lenet_forward.1} parent=11 // pred_region
          _
        $region40: #{lenet_forward.1} parent=11 // pred_fallthru
          _
        // Predicated region
        $region41: #{lenet_forward.1} parent=11 // pred_check
          %p406 = pneg %p218
        $region42: #{lenet_forward.1} parent=11 // pred_check_branch
          %408 = sbr.rel (%p406) target = $region44
        $region43: #{lenet_forward.1} parent=11 // pred_region
          _
        $region44: #{lenet_forward.1} parent=11 // pred_fallthru
          _
        // Predicated region
        $region45: #{lenet_forward.1} parent=11 // pred_check
          %p409 = pneg %p239
        $region46: #{lenet_forward.1} parent=11 // pred_check_branch
          %411 = sbr.rel (%p409) target = $region48
        $region47: #{lenet_forward.1} parent=11 // pred_region
          _
        $region48: #{lenet_forward.1} parent=11 // pred_fallthru
          _
        // Predicated region
        $region49: #{lenet_forward.1} parent=11 // pred_check
          %p412 = pneg %p260
        $region50: #{lenet_forward.1} parent=11 // pred_check_branch
          %414 = sbr.rel (%p412) target = $region52
        $region51: #{lenet_forward.1} parent=11 // pred_region
          _
        $region52: #{lenet_forward.1} parent=11 // pred_fallthru
          _
        // Predicated region
        $region53: #{lenet_forward.1} parent=11 // pred_check
          %p415 = pneg %p281
        $region54: #{lenet_forward.1} parent=11 // pred_check_branch
          %417 = sbr.rel (%p415) target = $region56
        $region55: #{lenet_forward.1} parent=11 // pred_region
          _
        $region56: #{lenet_forward.1} parent=11 // pred_fallthru
          _
        // Predicated region
        $region57: #{lenet_forward.1} parent=11 // pred_check
          %p418 = pneg %p302
        $region58: #{lenet_forward.1} parent=11 // pred_check_branch
          %420 = sbr.rel (%p418) target = $region60
        $region59: #{lenet_forward.1} parent=11 // pred_region
          _
        $region60: #{lenet_forward.1} parent=11 // pred_fallthru
          _
        // Predicated region
        $region61: #{lenet_forward.1} parent=11 // pred_check
          %p421 = pneg %p323
        $region62: #{lenet_forward.1} parent=11 // pred_check_branch
          %423 = sbr.rel (%p421) target = $region64
        $region63: #{lenet_forward.1} parent=11 // pred_region
          _
        $region64: #{lenet_forward.1} parent=11 // pred_fallthru
          _
        // Predicated region
        $region65: #{lenet_forward.1} parent=11 // pred_check
          %p424 = pneg %p344
        $region66: #{lenet_forward.1} parent=11 // pred_check_branch
          %426 = sbr.rel (%p424) target = $region68
        $region67: #{lenet_forward.1} parent=11 // pred_region
          _
        $region68: #{lenet_forward.1} parent=11 // pred_fallthru
          _
      $region12: #{lenet_forward.1} parent=5 // pred_fallthru
        _
      %p427 = scmp.lt.s32.totalorder %s24, 2
      // Predicated region
      $region69: #{lenet_forward.1} parent=5 // pred_check
        %p428 = pneg %p427
      $region70: #{lenet_forward.1} parent=5 // pred_check_branch
        %430 = sbr.rel (%p428) target = $region72
      $region71: #{lenet_forward.1} parent=5 // pred_region
        // Predicated region
        $region73: #{lenet_forward.1} parent=71 // pred_check
          %p431 = pneg %p44
        $region74: #{lenet_forward.1} parent=71 // pred_check_branch
          %433 = sbr.rel (%p431) target = $region76
        $region75: #{lenet_forward.1} parent=71 // pred_region
          %p434 = scmp.lt.s32.totalorder %s24, 1
          %s435 = scalar_select %p434, %s24, 1
          %s436 = smul.addr %s435, 4
          %s437 = smul.addr %s436, 8
          %s438 = scalar_lea.vmem %s0, %s437
        $region76: #{lenet_forward.1} parent=71 // pred_fallthru
          _
      $region72: #{lenet_forward.1} parent=5 // pred_fallthru
        _
      %p439 = scmp.le.s32.totalorder 1, %s24
      %p440 = scmp.lt.s32.totalorder %s24, 3
      %p441 = pnand %p439, %p440
      %p442 = pneg %p441
      // Predicated region
      $region77: #{lenet_forward.1} parent=5 // pred_check
        _
      $region78: #{lenet_forward.1} parent=5 // pred_check_branch
        %444 = sbr.rel (%p441) target = $region80
      $region79: #{lenet_forward.1} parent=5 // pred_region
        %s445 = ssub.s32 %s24, 1
        %p446 = scmp.lt.s32.totalorder %s29, 1
        %s447 = scalar_select %p446, %s29, 1
        %s448 = smul.addr %s447, 4
        %s449 = smul.addr %s448, 8
        %s450 = scalar_lea.vmem %s0, %s449
        %p451 = pneg %p50
        %p452 = pneg %p47
        %p453 = pneg %p71
        %p454 = pneg %p68
        %p455 = pneg %p92
        %p456 = pneg %p89
        %p457 = pneg %p113
        %p458 = pneg %p110
        %p459 = pneg %p134
        %p460 = pneg %p131
        %p461 = pneg %p155
        %p462 = pneg %p152
        %p463 = pneg %p176
        %p464 = pneg %p173
        %p465 = pneg %p197
        %p466 = pneg %p194
        %p467 = pneg %p218
        %p468 = pneg %p215
        %p469 = pneg %p239
        %p470 = pneg %p236
        %p471 = pneg %p260
        %p472 = pneg %p257
        %p473 = pneg %p281
        %p474 = pneg %p278
        %p475 = pneg %p302
        %p476 = pneg %p299
        %p477 = pneg %p323
        %p478 = pneg %p320
        %p479 = pneg %p344
        %p480 = pneg %p341
        %p481 = pneg %p370
        %p482 = pneg %p367
        %s483 = sand.u32 %s357, 1
        %s484 = scalar_lea.sflag [#allocation3], %s483
        %s485 = sand.u32 %s357, 1
        %s486 = scalar_lea.vmem [#allocation2], %s485
        %p487 = scmp.lt.s32.totalorder %s29, 1
        %s488 = scalar_select %p487, %s29, 1
        %s489 = smul.addr %s488, 4
        %s490 = smul.addr %s489, 8
        %s491 = scalar_lea.vmem %s0, %s490
        %v492 = vld [vmem:[%s491] sm:$0xff]
        %v493 = vld [vmem:[%s491 + $0x8] sm:$0xff]
        %v494 = vld [vmem:[%s491 + $0x10] sm:$0xff]
        %v495 = vld [vmem:[%s491 + $0x18] sm:$0xff]
        %v496 = vmax.f32 %v492, 0.0
        %v497 = vmax.f32 %v493, 0.0
        %v498 = vmax.f32 %v494, 0.0
        %v499 = vmax.f32 %v495, 0.0
        %v500 = vmin.f32 %v496, 1.0
        %v501 = vmin.f32 %v497, 1.0
        %v502 = vmin.f32 %v498, 1.0
        %v503 = vmin.f32 %v499, 1.0
        %v504 = vld [vmem:[%s1] sm:$0xff]
        %v505 = vld [vmem:[%s1 + $0x8] sm:$0xff]
        %v506 = vld [vmem:[%s1 + $0x10] sm:$0xff]
        %v507 = vld [vmem:[%s1 + $0x18] sm:$0xff]
        %v508 = vld [vmem:[%s1 + $0x20] sm:$0xff]
        %v509 = vld [vmem:[%s1 + $0x28] sm:$0xff]
        %v510 = vld [vmem:[%s1 + $0x30] sm:$0xff]
        %v511 = vld [vmem:[%s1 + $0x38] sm:$0xff]
        %s512 = scalar_lea.vmem %s1, 64
        %v513 = vld [vmem:[%s512] sm:$0xff]
        %v514 = vld [vmem:[%s512 + $0x8] sm:$0xff]
        %v515 = vld [vmem:[%s512 + $0x10] sm:$0xff]
        %v516 = vld [vmem:[%s512 + $0x18] sm:$0xff]
        %v517 = vld [vmem:[%s512 + $0x20] sm:$0xff]
        %v518 = vld [vmem:[%s512 + $0x28] sm:$0xff]
        %v519 = vld [vmem:[%s512 + $0x30] sm:$0xff]
        %v520 = vld [vmem:[%s512 + $0x38] sm:$0xff]
        %vm525 = vcmask 1046528
        %v526 = vrot.slane %v500, 1
        %v527 = vrot.slane %v501, 1
        %v528 = vsel %vm525, %v526, %v527
        %v529 = vrot.slane %v502, 1
        %v530 = vsel %vm525, %v527, %v529
        %v531 = vrot.slane %v503, 1
        %v532 = vsel %vm525, %v529, %v531
        %vm533 = vcmask 261120
        %v534 = vsel %vm533, %v528, 0
        %v536 = vsel %vm533, %v530, 0
        %v538 = vsel %vm533, %v532, 0
        %v540 = vsel %vm533, %v531, 0
        %542 = vmatprep.subr.mxu0 0.0
        %543 = vmatpush1.msra.mxu0 0.0
        %544 = vmatprep.subr.mxu0 0.0
        %545 = vmatpush1.msra.mxu0 0.0
        %546 = vmatprep.subr.mxu0 0.0
        %547 = vmatpush1.msra.mxu0 0.0
        %548 = vmatprep.subr.mxu0 0.0
        %549 = vmatpush1.msra.mxu0 0.0
        %550 = vmatprep.subr.mxu0 0.0
        %551 = vmatpush1.msra.mxu0 0.0
        %552 = vmatprep.subr.mxu0 0.0
        %553 = vmatpush1.msra.mxu0 0.0
        %554 = vmatprep.subr.mxu0 0.0
        %555 = vmatpush1.msra.mxu0 0.0
        %556 = vmatprep.subr.mxu0 0.0
        %557 = vmatpush1.msra.mxu0 0.0
        %558 = vmatprep.subr.mxu0 0.0
        %559 = vmatpush1.msra.mxu0 0.0
        %560 = vmatprep.subr.mxu0 0.0
        %561 = vmatpush1.msra.mxu0 0.0
        %562 = vmatprep.subr.mxu0 0.0
        %563 = vmatpush1.msra.mxu0 0.0
        %564 = vmatprep.subr.mxu0 0.0
        %565 = vmatpush1.msra.mxu0 0.0
        %566 = vmatprep.subr.mxu0 %v520
        %567 = vmatpush1.msra.mxu0 %v519
        %568 = vmatprep.subr.mxu0 %v518
        %569 = vmatpush1.msra.mxu0 %v517
        %570 = vmatprep.subr.mxu0 %v516
        %571 = vmatpush1.msra.mxu0 %v515
        %572 = vmatprep.subr.mxu0 %v514
        %573 = vmatpush1.msra.mxu0 %v513
        %574 = vmatprep.subr.mxu0 0.0
        %575 = vmatpush2.msra.mxu0 0.0
        %576 = vmatprep.subr.mxu0 0.0
        %577 = vmatpush2.msra.mxu0 0.0
        %578 = vmatprep.subr.mxu0 0.0
        %579 = vmatpush2.msra.mxu0 0.0
        %580 = vmatprep.subr.mxu0 0.0
        %581 = vmatpush2.msra.mxu0 0.0
        %582 = vmatprep.subr.mxu0 0.0
        %583 = vmatpush2.msra.mxu0 0.0
        %584 = vmatprep.subr.mxu0 0.0
        %585 = vmatpush2.msra.mxu0 0.0
        %586 = vmatprep.subr.mxu0 0.0
        %587 = vmatpush2.msra.mxu0 0.0
        %588 = vmatprep.subr.mxu0 0.0
        %589 = vmatpush2.msra.mxu0 0.0
        %590 = vmatprep.subr.mxu0 0.0
        %591 = vmatpush2.msra.mxu0 0.0
        %592 = vmatprep.subr.mxu0 0.0
        %593 = vmatpush2.msra.mxu0 0.0
        %594 = vmatprep.subr.mxu0 0.0
        %595 = vmatpush2.msra.mxu0 0.0
        %596 = vmatprep.subr.mxu0 0.0
        %597 = vmatpush2.msra.mxu0 0.0
        %598 = vmatprep.subr.mxu0 0.0
        %599 = vmatpush2.msra.mxu0 0.0
        %600 = vmatprep.subr.mxu0 0.0
        %601 = vmatpush2.msra.mxu0 0.0
        %602 = vmatprep.subr.mxu0 0.0
        %603 = vmatpush2.msra.mxu0 0.0
        %604 = vmatprep.subr.mxu0 0.0
        %605 = vmatpush2.msra.mxu0 0.0
        %606 = vmatprep.mubr.f32.mxu0 0.0
        %607 = vmatmul.mubr.f32.gmra.mxu0 %v534
        %v608 = vpop.f32.mrf.mxu0
        %v609 = vadd.f32 0.0, %v608
        %v610 = vpop.f32.mrf.mxu0
        %v611 = vadd.f32 0.0, %v610
        %612 = vmatprep.mubr.f32.mxu0 0.0
        %613 = vmatmul.mubr.f32.gmra.mxu0 %v536
        %v614 = vpop.f32.mrf.mxu0
        %v615 = vadd.f32 0.0, %v614
        %v616 = vpop.f32.mrf.mxu0
        %v617 = vadd.f32 0.0, %v616
        %618 = vmatprep.mubr.f32.mxu0 0.0
        %619 = vmatmul.mubr.f32.gmra.mxu0 %v538
        %v620 = vpop.f32.mrf.mxu0
        %v621 = vadd.f32 0.0, %v620
        %v622 = vpop.f32.mrf.mxu0
        %v623 = vadd.f32 0.0, %v622
        %624 = vmatprep.mubr.f32.mxu0 0.0
        %625 = vmatmul.mubr.f32.gmra.mxu0 %v540
        %v626 = vpop.f32.mrf.mxu0
        %v627 = vadd.f32 0.0, %v626
        %v628 = vpop.f32.mrf.mxu0
        %v629 = vadd.f32 0.0, %v628
        %630 = vdwg.mxu0
        %v631 = vsel %vm533, %v500, 0
        %v633 = vsel %vm533, %v501, 0
        %v635 = vsel %vm533, %v502, 0
        %v637 = vsel %vm533, %v503, 0
        %639 = vmatprep.subr.mxu0 0.0
        %640 = vmatpush1.msra.mxu0 0.0
        %641 = vmatprep.subr.mxu0 0.0
        %642 = vmatpush1.msra.mxu0 0.0
        %643 = vmatprep.subr.mxu0 0.0
        %644 = vmatpush1.msra.mxu0 0.0
        %645 = vmatprep.subr.mxu0 0.0
        %646 = vmatpush1.msra.mxu0 0.0
        %647 = vmatprep.subr.mxu0 0.0
        %648 = vmatpush1.msra.mxu0 0.0
        %649 = vmatprep.subr.mxu0 0.0
        %650 = vmatpush1.msra.mxu0 0.0
        %651 = vmatprep.subr.mxu0 0.0
        %652 = vmatpush1.msra.mxu0 0.0
        %653 = vmatprep.subr.mxu0 0.0
        %654 = vmatpush1.msra.mxu0 0.0
        %655 = vmatprep.subr.mxu0 0.0
        %656 = vmatpush1.msra.mxu0 0.0
        %657 = vmatprep.subr.mxu0 0.0
        %658 = vmatpush1.msra.mxu0 0.0
        %659 = vmatprep.subr.mxu0 0.0
        %660 = vmatpush1.msra.mxu0 0.0
        %661 = vmatprep.subr.mxu0 0.0
        %662 = vmatpush1.msra.mxu0 0.0
        %663 = vmatprep.subr.mxu0 %v511
        %664 = vmatpush1.msra.mxu0 %v510
        %665 = vmatprep.subr.mxu0 %v509
        %666 = vmatpush1.msra.mxu0 %v508
        %667 = vmatprep.subr.mxu0 %v507
        %668 = vmatpush1.msra.mxu0 %v506
        %669 = vmatprep.subr.mxu0 %v505
        %670 = vmatpush1.msra.mxu0 %v504
        %671 = vmatprep.subr.mxu0 0.0
        %672 = vmatpush2.msra.mxu0 0.0
        %673 = vmatprep.subr.mxu0 0.0
        %674 = vmatpush2.msra.mxu0 0.0
        %675 = vmatprep.subr.mxu0 0.0
        %676 = vmatpush2.msra.mxu0 0.0
        %677 = vmatprep.subr.mxu0 0.0
        %678 = vmatpush2.msra.mxu0 0.0
        %679 = vmatprep.subr.mxu0 0.0
        %680 = vmatpush2.msra.mxu0 0.0
        %681 = vmatprep.subr.mxu0 0.0
        %682 = vmatpush2.msra.mxu0 0.0
        %683 = vmatprep.subr.mxu0 0.0
        %684 = vmatpush2.msra.mxu0 0.0
        %685 = vmatprep.subr.mxu0 0.0
        %686 = vmatpush2.msra.mxu0 0.0
        %687 = vmatprep.subr.mxu0 0.0
        %688 = vmatpush2.msra.mxu0 0.0
        %689 = vmatprep.subr.mxu0 0.0
        %690 = vmatpush2.msra.mxu0 0.0
        %691 = vmatprep.subr.mxu0 0.0
        %692 = vmatpush2.msra.mxu0 0.0
        %693 = vmatprep.subr.mxu0 0.0
        %694 = vmatpush2.msra.mxu0 0.0
        %695 = vmatprep.subr.mxu0 0.0
        %696 = vmatpush2.msra.mxu0 0.0
        %697 = vmatprep.subr.mxu0 0.0
        %698 = vmatpush2.msra.mxu0 0.0
        %699 = vmatprep.subr.mxu0 0.0
        %700 = vmatpush2.msra.mxu0 0.0
        %701 = vmatprep.subr.mxu0 0.0
        %702 = vmatpush2.msra.mxu0 0.0
        %703 = vmatprep.mubr.f32.mxu0 0.0
        %704 = vmatmul.mubr.f32.gmra.mxu0 %v631
        %v705 = vpop.f32.mrf.mxu0
        %v706 = vadd.f32 %v609, %v705
        %v707 = vpop.f32.mrf.mxu0
        %v708 = vadd.f32 %v611, %v707
        %709 = vmatprep.mubr.f32.mxu0 0.0
        %710 = vmatmul.mubr.f32.gmra.mxu0 %v633
        %v711 = vpop.f32.mrf.mxu0
        %v712 = vadd.f32 %v615, %v711
        %v713 = vpop.f32.mrf.mxu0
        %v714 = vadd.f32 %v617, %v713
        %715 = vmatprep.mubr.f32.mxu0 0.0
        %716 = vmatmul.mubr.f32.gmra.mxu0 %v635
        %v717 = vpop.f32.mrf.mxu0
        %v718 = vadd.f32 %v621, %v717
        %v719 = vpop.f32.mrf.mxu0
        %v720 = vadd.f32 %v623, %v719
        %721 = vmatprep.mubr.f32.mxu0 0.0
        %722 = vmatmul.mubr.f32.gmra.mxu0 %v637
        %v723 = vpop.f32.mrf.mxu0
        %v724 = vadd.f32 %v627, %v723
        %v725 = vpop.f32.mrf.mxu0
        %v726 = vadd.f32 %v629, %v725
        %727 = vdwg.mxu0
        %s728 = scalar_lea.vmem %s1, 128
        %v729 = vld [vmem:[%s728] sm:$0xff]
        %v730 = vld [vmem:[%s728 + $0x8] sm:$0xff]
        %v731 = vld [vmem:[%s728 + $0x10] sm:$0xff]
        %v732 = vld [vmem:[%s728 + $0x18] sm:$0xff]
        %v733 = vld [vmem:[%s728 + $0x20] sm:$0xff]
        %v734 = vld [vmem:[%s728 + $0x28] sm:$0xff]
        %v735 = vld [vmem:[%s728 + $0x30] sm:$0xff]
        %v736 = vld [vmem:[%s728 + $0x38] sm:$0xff]
        %vm737 = vcmask 1045504
        %v738 = vrot.slane %v500, 2
        %v739 = vrot.slane %v501, 2
        %v740 = vsel %vm737, %v738, %v739
        %v741 = vrot.slane %v502, 2
        %v742 = vsel %vm737, %v739, %v741
        %v743 = vrot.slane %v503, 2
        %v744 = vsel %vm737, %v741, %v743
        %v745 = vsel %vm533, %v740, 0
        %v747 = vsel %vm533, %v742, 0
        %v749 = vsel %vm533, %v744, 0
        %v751 = vsel %vm533, %v743, 0
        %753 = vmatprep.subr.mxu0 0.0
        %754 = vmatpush1.msra.mxu0 0.0
        %755 = vmatprep.subr.mxu0 0.0
        %756 = vmatpush1.msra.mxu0 0.0
        %757 = vmatprep.subr.mxu0 0.0
        %758 = vmatpush1.msra.mxu0 0.0
        %759 = vmatprep.subr.mxu0 0.0
        %760 = vmatpush1.msra.mxu0 0.0
        %761 = vmatprep.subr.mxu0 0.0
        %762 = vmatpush1.msra.mxu0 0.0
        %763 = vmatprep.subr.mxu0 0.0
        %764 = vmatpush1.msra.mxu0 0.0
        %765 = vmatprep.subr.mxu0 0.0
        %766 = vmatpush1.msra.mxu0 0.0
        %767 = vmatprep.subr.mxu0 0.0
        %768 = vmatpush1.msra.mxu0 0.0
        %769 = vmatprep.subr.mxu0 0.0
        %770 = vmatpush1.msra.mxu0 0.0
        %771 = vmatprep.subr.mxu0 0.0
        %772 = vmatpush1.msra.mxu0 0.0
        %773 = vmatprep.subr.mxu0 0.0
        %774 = vmatpush1.msra.mxu0 0.0
        %775 = vmatprep.subr.mxu0 0.0
        %776 = vmatpush1.msra.mxu0 0.0
        %777 = vmatprep.subr.mxu0 %v736
        %778 = vmatpush1.msra.mxu0 %v735
        %779 = vmatprep.subr.mxu0 %v734
        %780 = vmatpush1.msra.mxu0 %v733
        %781 = vmatprep.subr.mxu0 %v732
        %782 = vmatpush1.msra.mxu0 %v731
        %783 = vmatprep.subr.mxu0 %v730
        %784 = vmatpush1.msra.mxu0 %v729
        %785 = vmatprep.subr.mxu0 0.0
        %786 = vmatpush2.msra.mxu0 0.0
        %787 = vmatprep.subr.mxu0 0.0
        %788 = vmatpush2.msra.mxu0 0.0
        %789 = vmatprep.subr.mxu0 0.0
        %790 = vmatpush2.msra.mxu0 0.0
        %791 = vmatprep.subr.mxu0 0.0
        %792 = vmatpush2.msra.mxu0 0.0
        %793 = vmatprep.subr.mxu0 0.0
        %794 = vmatpush2.msra.mxu0 0.0
        %795 = vmatprep.subr.mxu0 0.0
        %796 = vmatpush2.msra.mxu0 0.0
        %797 = vmatprep.subr.mxu0 0.0
        %798 = vmatpush2.msra.mxu0 0.0
        %799 = vmatprep.subr.mxu0 0.0
        %800 = vmatpush2.msra.mxu0 0.0
        %801 = vmatprep.subr.mxu0 0.0
        %802 = vmatpush2.msra.mxu0 0.0
        %803 = vmatprep.subr.mxu0 0.0
        %804 = vmatpush2.msra.mxu0 0.0
        %805 = vmatprep.subr.mxu0 0.0
        %806 = vmatpush2.msra.mxu0 0.0
        %807 = vmatprep.subr.mxu0 0.0
        %808 = vmatpush2.msra.mxu0 0.0
        %809 = vmatprep.subr.mxu0 0.0
        %810 = vmatpush2.msra.mxu0 0.0
        %811 = vmatprep.subr.mxu0 0.0
        %812 = vmatpush2.msra.mxu0 0.0
        %813 = vmatprep.subr.mxu0 0.0
        %814 = vmatpush2.msra.mxu0 0.0
        %815 = vmatprep.subr.mxu0 0.0
        %816 = vmatpush2.msra.mxu0 0.0
        %817 = vmatprep.mubr.f32.mxu0 0.0
        %818 = vmatmul.mubr.f32.gmra.mxu0 %v745
        %v819 = vpop.f32.mrf.mxu0
        %v820 = vadd.f32 0.0, %v819
        %v821 = vpop.f32.mrf.mxu0
        %v822 = vadd.f32 0.0, %v821
        %823 = vmatprep.mubr.f32.mxu0 0.0
        %824 = vmatmul.mubr.f32.gmra.mxu0 %v747
        %v825 = vpop.f32.mrf.mxu0
        %v826 = vadd.f32 0.0, %v825
        %v827 = vpop.f32.mrf.mxu0
        %v828 = vadd.f32 0.0, %v827
        %829 = vmatprep.mubr.f32.mxu0 0.0
        %830 = vmatmul.mubr.f32.gmra.mxu0 %v749
        %v831 = vpop.f32.mrf.mxu0
        %v832 = vadd.f32 0.0, %v831
        %v833 = vpop.f32.mrf.mxu0
        %v834 = vadd.f32 0.0, %v833
        %835 = vmatprep.mubr.f32.mxu0 0.0
        %836 = vmatmul.mubr.f32.gmra.mxu0 %v751
        %v837 = vpop.f32.mrf.mxu0
        %v838 = vadd.f32 0.0, %v837
        %v839 = vpop.f32.mrf.mxu0
        %v840 = vadd.f32 0.0, %v839
        %841 = vdwg.mxu0
        %v842 = vadd.f32 %v706, %v820
        %v843 = vadd.f32 %v708, %v822
        %v844 = vadd.f32 %v712, %v826
        %v845 = vadd.f32 %v714, %v828
        %v846 = vadd.f32 %v718, %v832
        %v847 = vadd.f32 %v720, %v834
        %v848 = vadd.f32 %v724, %v838
        %v849 = vadd.f32 %v726, %v840
        %s850 = scalar_lea.vmem %s1, 192
        %v851 = vld [vmem:[%s850] sm:$0xff]
        %v852 = vld [vmem:[%s850 + $0x8] sm:$0xff]
        %v853 = vld [vmem:[%s850 + $0x10] sm:$0xff]
        %v854 = vld [vmem:[%s850 + $0x18] sm:$0xff]
        %v855 = vld [vmem:[%s850 + $0x20] sm:$0xff]
        %v856 = vld [vmem:[%s850 + $0x28] sm:$0xff]
        %v857 = vld [vmem:[%s850 + $0x30] sm:$0xff]
        %v858 = vld [vmem:[%s850 + $0x38] sm:$0xff]
        %vm859 = vcmask 1044480
        %v860 = vrot.slane %v500, 3
        %v861 = vrot.slane %v501, 3
        %v862 = vsel %vm859, %v860, %v861
        %v863 = vrot.slane %v502, 3
        %v864 = vsel %vm859, %v861, %v863
        %v865 = vrot.slane %v503, 3
        %v866 = vsel %vm859, %v863, %v865
        %v867 = vsel %vm533, %v862, 0
        %v869 = vsel %vm533, %v864, 0
        %v871 = vsel %vm533, %v866, 0
        %v873 = vsel %vm533, %v865, 0
        %875 = vmatprep.subr.mxu0 0.0
        %876 = vmatpush1.msra.mxu0 0.0
        %877 = vmatprep.subr.mxu0 0.0
        %878 = vmatpush1.msra.mxu0 0.0
        %879 = vmatprep.subr.mxu0 0.0
        %880 = vmatpush1.msra.mxu0 0.0
        %881 = vmatprep.subr.mxu0 0.0
        %882 = vmatpush1.msra.mxu0 0.0
        %883 = vmatprep.subr.mxu0 0.0
        %884 = vmatpush1.msra.mxu0 0.0
        %885 = vmatprep.subr.mxu0 0.0
        %886 = vmatpush1.msra.mxu0 0.0
        %887 = vmatprep.subr.mxu0 0.0
        %888 = vmatpush1.msra.mxu0 0.0
        %889 = vmatprep.subr.mxu0 0.0
        %890 = vmatpush1.msra.mxu0 0.0
        %891 = vmatprep.subr.mxu0 0.0
        %892 = vmatpush1.msra.mxu0 0.0
        %893 = vmatprep.subr.mxu0 0.0
        %894 = vmatpush1.msra.mxu0 0.0
        %895 = vmatprep.subr.mxu0 0.0
        %896 = vmatpush1.msra.mxu0 0.0
        %897 = vmatprep.subr.mxu0 0.0
        %898 = vmatpush1.msra.mxu0 0.0
        %899 = vmatprep.subr.mxu0 %v858
        %900 = vmatpush1.msra.mxu0 %v857
        %901 = vmatprep.subr.mxu0 %v856
        %902 = vmatpush1.msra.mxu0 %v855
        %903 = vmatprep.subr.mxu0 %v854
        %904 = vmatpush1.msra.mxu0 %v853
        %905 = vmatprep.subr.mxu0 %v852
        %906 = vmatpush1.msra.mxu0 %v851
        %907 = vmatprep.subr.mxu0 0.0
        %908 = vmatpush2.msra.mxu0 0.0
        %909 = vmatprep.subr.mxu0 0.0
        %910 = vmatpush2.msra.mxu0 0.0
        %911 = vmatprep.subr.mxu0 0.0
        %912 = vmatpush2.msra.mxu0 0.0
        %913 = vmatprep.subr.mxu0 0.0
        %914 = vmatpush2.msra.mxu0 0.0
        %915 = vmatprep.subr.mxu0 0.0
        %916 = vmatpush2.msra.mxu0 0.0
        %917 = vmatprep.subr.mxu0 0.0
        %918 = vmatpush2.msra.mxu0 0.0
        %919 = vmatprep.subr.mxu0 0.0
        %920 = vmatpush2.msra.mxu0 0.0
        %921 = vmatprep.subr.mxu0 0.0
        %922 = vmatpush2.msra.mxu0 0.0
        %923 = vmatprep.subr.mxu0 0.0
        %924 = vmatpush2.msra.mxu0 0.0
        %925 = vmatprep.subr.mxu0 0.0
        %926 = vmatpush2.msra.mxu0 0.0
        %927 = vmatprep.subr.mxu0 0.0
        %928 = vmatpush2.msra.mxu0 0.0
        %929 = vmatprep.subr.mxu0 0.0
        %930 = vmatpush2.msra.mxu0 0.0
        %931 = vmatprep.subr.mxu0 0.0
        %932 = vmatpush2.msra.mxu0 0.0
        %933 = vmatprep.subr.mxu0 0.0
        %934 = vmatpush2.msra.mxu0 0.0
        %935 = vmatprep.subr.mxu0 0.0
        %936 = vmatpush2.msra.mxu0 0.0
        %937 = vmatprep.subr.mxu0 0.0
        %938 = vmatpush2.msra.mxu0 0.0
        %939 = vmatprep.mubr.f32.mxu0 0.0
        %940 = vmatmul.mubr.f32.gmra.mxu0 %v867
        %v941 = vpop.f32.mrf.mxu0
        %v942 = vadd.f32 0.0, %v941
        %v943 = vpop.f32.mrf.mxu0
        %v944 = vadd.f32 0.0, %v943
        %945 = vmatprep.mubr.f32.mxu0 0.0
        %946 = vmatmul.mubr.f32.gmra.mxu0 %v869
        %v947 = vpop.f32.mrf.mxu0
        %v948 = vadd.f32 0.0, %v947
        %v949 = vpop.f32.mrf.mxu0
        %v950 = vadd.f32 0.0, %v949
        %951 = vmatprep.mubr.f32.mxu0 0.0
        %952 = vmatmul.mubr.f32.gmra.mxu0 %v871
        %v953 = vpop.f32.mrf.mxu0
        %v954 = vadd.f32 0.0, %v953
        %v955 = vpop.f32.mrf.mxu0
        %v956 = vadd.f32 0.0, %v955
        %957 = vmatprep.mubr.f32.mxu0 0.0
        %958 = vmatmul.mubr.f32.gmra.mxu0 %v873
        %v959 = vpop.f32.mrf.mxu0
        %v960 = vadd.f32 0.0, %v959
        %v961 = vpop.f32.mrf.mxu0
        %v962 = vadd.f32 0.0, %v961
        %963 = vdwg.mxu0
        %v964 = vadd.f32 %v842, %v942
        %v965 = vadd.f32 %v843, %v944
        %v966 = vadd.f32 %v844, %v948
        %v967 = vadd.f32 %v845, %v950
        %v968 = vadd.f32 %v846, %v954
        %v969 = vadd.f32 %v847, %v956
        %v970 = vadd.f32 %v848, %v960
        %v971 = vadd.f32 %v849, %v962
        %s972 = scalar_lea.vmem %s1, 256
        %v973 = vld [vmem:[%s972] sm:$0xff]
        %v974 = vld [vmem:[%s972 + $0x8] sm:$0xff]
        %v975 = vld [vmem:[%s972 + $0x10] sm:$0xff]
        %v976 = vld [vmem:[%s972 + $0x18] sm:$0xff]
        %v977 = vld [vmem:[%s972 + $0x20] sm:$0xff]
        %v978 = vld [vmem:[%s972 + $0x28] sm:$0xff]
        %v979 = vld [vmem:[%s972 + $0x30] sm:$0xff]
        %v980 = vld [vmem:[%s972 + $0x38] sm:$0xff]
        %vm981 = vcmask 1043456
        %v982 = vrot.slane %v500, 4
        %v983 = vrot.slane %v501, 4
        %v984 = vsel %vm981, %v982, %v983
        %v985 = vrot.slane %v502, 4
        %v986 = vsel %vm981, %v983, %v985
        %v987 = vrot.slane %v503, 4
        %v988 = vsel %vm981, %v985, %v987
        %v989 = vsel %vm533, %v984, 0
        %v991 = vsel %vm533, %v986, 0
        %v993 = vsel %vm533, %v988, 0
        %v995 = vsel %vm533, %v987, 0
        %997 = vmatprep.subr.mxu0 0.0
        %998 = vmatpush1.msra.mxu0 0.0
        %999 = vmatprep.subr.mxu0 0.0
        %1000 = vmatpush1.msra.mxu0 0.0
        %1001 = vmatprep.subr.mxu0 0.0
        %1002 = vmatpush1.msra.mxu0 0.0
        %1003 = vmatprep.subr.mxu0 0.0
        %1004 = vmatpush1.msra.mxu0 0.0
        %1005 = vmatprep.subr.mxu0 0.0
        %1006 = vmatpush1.msra.mxu0 0.0
        %1007 = vmatprep.subr.mxu0 0.0
        %1008 = vmatpush1.msra.mxu0 0.0
        %1009 = vmatprep.subr.mxu0 0.0
        %1010 = vmatpush1.msra.mxu0 0.0
        %1011 = vmatprep.subr.mxu0 0.0
        %1012 = vmatpush1.msra.mxu0 0.0
        %1013 = vmatprep.subr.mxu0 0.0
        %1014 = vmatpush1.msra.mxu0 0.0
        %1015 = vmatprep.subr.mxu0 0.0
        %1016 = vmatpush1.msra.mxu0 0.0
        %1017 = vmatprep.subr.mxu0 0.0
        %1018 = vmatpush1.msra.mxu0 0.0
        %1019 = vmatprep.subr.mxu0 0.0
        %1020 = vmatpush1.msra.mxu0 0.0
        %1021 = vmatprep.subr.mxu0 %v980
        %1022 = vmatpush1.msra.mxu0 %v979
        %1023 = vmatprep.subr.mxu0 %v978
        %1024 = vmatpush1.msra.mxu0 %v977
        %1025 = vmatprep.subr.mxu0 %v976
        %1026 = vmatpush1.msra.mxu0 %v975
        %1027 = vmatprep.subr.mxu0 %v974
        %1028 = vmatpush1.msra.mxu0 %v973
        %1029 = vmatprep.subr.mxu0 0.0
        %1030 = vmatpush2.msra.mxu0 0.0
        %1031 = vmatprep.subr.mxu0 0.0
        %1032 = vmatpush2.msra.mxu0 0.0
        %1033 = vmatprep.subr.mxu0 0.0
        %1034 = vmatpush2.msra.mxu0 0.0
        %1035 = vmatprep.subr.mxu0 0.0
        %1036 = vmatpush2.msra.mxu0 0.0
        %1037 = vmatprep.subr.mxu0 0.0
        %1038 = vmatpush2.msra.mxu0 0.0
        %1039 = vmatprep.subr.mxu0 0.0
        %1040 = vmatpush2.msra.mxu0 0.0
        %1041 = vmatprep.subr.mxu0 0.0
        %1042 = vmatpush2.msra.mxu0 0.0
        %1043 = vmatprep.subr.mxu0 0.0
        %1044 = vmatpush2.msra.mxu0 0.0
        %1045 = vmatprep.subr.mxu0 0.0
        %1046 = vmatpush2.msra.mxu0 0.0
        %1047 = vmatprep.subr.mxu0 0.0
        %1048 = vmatpush2.msra.mxu0 0.0
        %1049 = vmatprep.subr.mxu0 0.0
        %1050 = vmatpush2.msra.mxu0 0.0
        %1051 = vmatprep.subr.mxu0 0.0
        %1052 = vmatpush2.msra.mxu0 0.0
        %1053 = vmatprep.subr.mxu0 0.0
        %1054 = vmatpush2.msra.mxu0 0.0
        %1055 = vmatprep.subr.mxu0 0.0
        %1056 = vmatpush2.msra.mxu0 0.0
        %1057 = vmatprep.subr.mxu0 0.0
        %1058 = vmatpush2.msra.mxu0 0.0
        %1059 = vmatprep.subr.mxu0 0.0
        %1060 = vmatpush2.msra.mxu0 0.0
        %1061 = vmatprep.mubr.f32.mxu0 0.0
        %1062 = vmatmul.mubr.f32.gmra.mxu0 %v989
        %v1063 = vpop.f32.mrf.mxu0
        %v1064 = vadd.f32 0.0, %v1063
        %v1065 = vpop.f32.mrf.mxu0
        %v1066 = vadd.f32 0.0, %v1065
        %1067 = vmatprep.mubr.f32.mxu0 0.0
        %1068 = vmatmul.mubr.f32.gmra.mxu0 %v991
        %v1069 = vpop.f32.mrf.mxu0
        %v1070 = vadd.f32 0.0, %v1069
        %v1071 = vpop.f32.mrf.mxu0
        %v1072 = vadd.f32 0.0, %v1071
        %1073 = vmatprep.mubr.f32.mxu0 0.0
        %1074 = vmatmul.mubr.f32.gmra.mxu0 %v993
        %v1075 = vpop.f32.mrf.mxu0
        %v1076 = vadd.f32 0.0, %v1075
        %v1077 = vpop.f32.mrf.mxu0
        %v1078 = vadd.f32 0.0, %v1077
        %1079 = vmatprep.mubr.f32.mxu0 0.0
        %1080 = vmatmul.mubr.f32.gmra.mxu0 %v995
        %v1081 = vpop.f32.mrf.mxu0
        %v1082 = vadd.f32 0.0, %v1081
        %v1083 = vpop.f32.mrf.mxu0
        %v1084 = vadd.f32 0.0, %v1083
        %1085 = vdwg.mxu0
        %v1086 = vadd.f32 %v964, %v1064
        %v1087 = vadd.f32 %v965, %v1066
        %v1088 = vadd.f32 %v966, %v1070
        %v1089 = vadd.f32 %v967, %v1072
        %v1090 = vadd.f32 %v968, %v1076
        %v1091 = vadd.f32 %v969, %v1078
        %v1092 = vadd.f32 %v970, %v1082
        %v1093 = vadd.f32 %v971, %v1084
        %v1094 = vld [vmem:[%s2] sm:$0x3]
        %v1096 = vlaneseq
        %v1097 = vshrl.u32 %v1096, 7
        %v1098 = vsub.s32 0, %v1097
        %v1099 = vrot.slane %v1094, %v1098
        %v1100 = vlaneseq
        %v1101 = vshrl.u32 %v1100, 7
        %v1102 = vsub.s32 1, %v1101
        %v1103 = vrot.slane %v1094, %v1102
        %v1106 = vadd.f32 %v1086, %v1099
        %v1107 = vadd.f32 %v1087, %v1103
        %v1108 = vadd.f32 %v1088, %v1099
        %v1109 = vadd.f32 %v1089, %v1103
        %v1110 = vadd.f32 %v1090, %v1099
        %v1111 = vadd.f32 %v1091, %v1103
        %v1112 = vadd.f32 %v1092, %v1099
        %v1113 = vadd.f32 %v1093, %v1103
        %v1114 = vmax.f32 %v1106, 0.0
        %v1115 = vmax.f32 %v1107, 0.0
        %v1116 = vmax.f32 %v1108, 0.0
        %v1117 = vmax.f32 %v1109, 0.0
        %v1118 = vmax.f32 %v1110, 0.0
        %v1119 = vmax.f32 %v1111, 0.0
        %v1120 = vmax.f32 %v1112, 0.0
        %v1121 = vmax.f32 %v1113, 0.0
        %v1122 = vld [vmem:[%s3] sm:$0xff]
        %v1123 = vld [vmem:[%s3 + $0x8] sm:$0x3f]
        %vm1124 = vcmask 228352
        %v1126 = vsel %vm1124, %v1122, 0
        %v1129 = vsel %vm1124, %v1123, 0
        %v1132 = vsel %vm981, %v1120, 0
        %v1135 = vsel %vm981, %v1121, 0
        %1137 = vmatprep.subr.mxu0 0.0
        %1138 = vmatpush1.msra.mxu0 0.0
        %1139 = vmatprep.subr.mxu0 0.0
        %1140 = vmatpush1.msra.mxu0 0.0
        %1141 = vmatprep.subr.mxu0 0.0
        %1142 = vmatpush1.msra.mxu0 0.0
        %1143 = vmatprep.subr.mxu0 0.0
        %1144 = vmatpush1.msra.mxu0 0.0
        %1145 = vmatprep.subr.mxu0 0.0
        %1146 = vmatpush1.msra.mxu0 0.0
        %1147 = vmatprep.subr.mxu0 0.0
        %1148 = vmatpush1.msra.mxu0 0.0
        %1149 = vmatprep.subr.mxu0 0.0
        %1150 = vmatpush1.msra.mxu0 0.0
        %1151 = vmatprep.subr.mxu0 0.0
        %1152 = vmatpush1.msra.mxu0 0.0
        %1153 = vmatprep.subr.mxu0 0.0
        %1154 = vmatpush1.msra.mxu0 0.0
        %1155 = vmatprep.subr.mxu0 0.0
        %1156 = vmatpush1.msra.mxu0 0.0
        %1157 = vmatprep.subr.mxu0 0.0
        %1158 = vmatpush1.msra.mxu0 0.0
        %1159 = vmatprep.subr.mxu0 0.0
        %1160 = vmatpush1.msra.mxu0 0.0
        %1161 = vmatprep.subr.mxu0 %v1135
        %1162 = vmatpush1.msra.mxu0 %v1132
        %1163 = vmatprep.subr.mxu0 %v1119
        %1164 = vmatpush1.msra.mxu0 %v1118
        %1165 = vmatprep.subr.mxu0 %v1117
        %1166 = vmatpush1.msra.mxu0 %v1116
        %1167 = vmatprep.subr.mxu0 %v1115
        %1168 = vmatpush1.msra.mxu0 %v1114
        %1169 = vmatprep.subr.mxu0 0.0
        %1170 = vmatpush2.msra.mxu0 0.0
        %1171 = vmatprep.subr.mxu0 0.0
        %1172 = vmatpush2.msra.mxu0 0.0
        %1173 = vmatprep.subr.mxu0 0.0
        %1174 = vmatpush2.msra.mxu0 0.0
        %1175 = vmatprep.subr.mxu0 0.0
        %1176 = vmatpush2.msra.mxu0 0.0
        %1177 = vmatprep.subr.mxu0 0.0
        %1178 = vmatpush2.msra.mxu0 0.0
        %1179 = vmatprep.subr.mxu0 0.0
        %1180 = vmatpush2.msra.mxu0 0.0
        %1181 = vmatprep.subr.mxu0 0.0
        %1182 = vmatpush2.msra.mxu0 0.0
        %1183 = vmatprep.subr.mxu0 0.0
        %1184 = vmatpush2.msra.mxu0 0.0
        %1185 = vmatprep.subr.mxu0 0.0
        %1186 = vmatpush2.msra.mxu0 0.0
        %1187 = vmatprep.subr.mxu0 0.0
        %1188 = vmatpush2.msra.mxu0 0.0
        %1189 = vmatprep.subr.mxu0 0.0
        %1190 = vmatpush2.msra.mxu0 0.0
        %1191 = vmatprep.subr.mxu0 0.0
        %1192 = vmatpush2.msra.mxu0 0.0
        %1193 = vmatprep.subr.mxu0 0.0
        %1194 = vmatpush2.msra.mxu0 0.0
        %1195 = vmatprep.subr.mxu0 0.0
        %1196 = vmatpush2.msra.mxu0 0.0
        %1197 = vmatprep.subr.mxu0 0.0
        %1198 = vmatpush2.msra.mxu0 0.0
        %1199 = vmatprep.subr.mxu0 0.0
        %1200 = vmatpush2.msra.mxu0 0.0
        %1201 = vmatprep.mubr.f32.mxu0 0.0
        %1202 = vmatmul.mubr.f32.gmra.mxu0 %v1126
        %v1203 = vpop.f32.mrf.mxu0
        %v1204 = vadd.f32 0.0, %v1203
        %v1205 = vpop.f32.mrf.mxu0
        %v1206 = vadd.f32 0.0, %v1205
        %1207 = vmatprep.mubr.f32.mxu0 0.0
        %1208 = vmatmul.mubr.f32.gmra.mxu0 %v1129
        %v1209 = vpop.f32.mrf.mxu0
        %v1210 = vadd.f32 0.0, %v1209
        %v1211 = vpop.f32.mrf.mxu0
        %v1212 = vadd.f32 0.0, %v1211
        %1213 = vdwg.mxu0
        %v1214 = vld [vmem:[%s4] sm:$0xff]
        %v1215 = vld [vmem:[%s4 + $0x8] sm:$0xff]
        %v1216 = vld [vmem:[%s4 + $0x10] sm:$0xff]
        %v1217 = vld [vmem:[%s4 + $0x18] sm:$0xff]
        %v1218 = vld [vmem:[%s4 + $0x20] sm:$0xff]
        %v1219 = vld [vmem:[%s4 + $0x28] sm:$0xff]
        %v1220 = vld [vmem:[%s4 + $0x30] sm:$0xff]
        %v1221 = vld [vmem:[%s4 + $0x38] sm:$0xff]
        %v1222 = vld [vmem:[%s4 + $0x40] sm:$0xff]
        %v1223 = vld [vmem:[%s4 + $0x48] sm:$0xff]
        %v1224 = vld [vmem:[%s4 + $0x50] sm:$0xff]
        %v1225 = vld [vmem:[%s4 + $0x58] sm:$0xff]
        %v1226 = vld [vmem:[%s4 + $0x60] sm:$0xff]
        %v1227 = vld [vmem:[%s4 + $0x68] sm:$0xff]
        %v1228 = vld [vmem:[%s4 + $0x70] sm:$0xff]
        %v1229 = vld [vmem:[%s4 + $0x78] sm:$0xff]
        %v1230 = vld [vmem:[%s4 + $0x80] sm:$0xff]
        %v1231 = vld [vmem:[%s4 + $0x88] sm:$0xff]
        %v1232 = vld [vmem:[%s4 + $0x90] sm:$0xff]
        %v1233 = vld [vmem:[%s4 + $0x98] sm:$0xff]
        %v1234 = vld [vmem:[%s4 + $0xa0] sm:$0xff]
        %vm1235 = vcmask 326656
        %v1237 = vsel %vm1235, %v1206, 0
        %v1240 = vsel %vm1235, %v1212, 0
        %1242 = vmatprep.subr.mxu0 0.0
        %1243 = vmatpush1.msra.mxu0 %v1229
        %1244 = vmatprep.subr.mxu0 0.0
        %1245 = vmatpush1.msra.mxu0 %v1228
        %1246 = vmatprep.subr.mxu0 0.0
        %1247 = vmatpush1.msra.mxu0 %v1227
        %1248 = vmatprep.subr.mxu0 0.0
        %1249 = vmatpush1.msra.mxu0 %v1226
        %1250 = vmatprep.subr.mxu0 0.0
        %1251 = vmatpush1.msra.mxu0 %v1225
        %1252 = vmatprep.subr.mxu0 0.0
        %1253 = vmatpush1.msra.mxu0 %v1224
        %1254 = vmatprep.subr.mxu0 0.0
        %1255 = vmatpush1.msra.mxu0 %v1223
        %1256 = vmatprep.subr.mxu0 0.0
        %1257 = vmatpush1.msra.mxu0 %v1222
        %1258 = vmatprep.subr.mxu0 0.0
        %1259 = vmatpush1.msra.mxu0 %v1221
        %1260 = vmatprep.subr.mxu0 0.0
        %1261 = vmatpush1.msra.mxu0 %v1220
        %1262 = vmatprep.subr.mxu0 0.0
        %1263 = vmatpush1.msra.mxu0 %v1219
        %1264 = vmatprep.subr.mxu0 0.0
        %1265 = vmatpush1.msra.mxu0 %v1218
        %1266 = vmatprep.subr.mxu0 0.0
        %1267 = vmatpush1.msra.mxu0 %v1217
        %1268 = vmatprep.subr.mxu0 0.0
        %1269 = vmatpush1.msra.mxu0 %v1216
        %1270 = vmatprep.subr.mxu0 0.0
        %1271 = vmatpush1.msra.mxu0 %v1215
        %1272 = vmatprep.subr.mxu0 0.0
        %1273 = vmatpush1.msra.mxu0 %v1214
        %1274 = vmatprep.subr.mxu0 0.0
        %1275 = vmatpush2.msra.mxu0 0.0
        %1276 = vmatprep.subr.mxu0 0.0
        %1277 = vmatpush2.msra.mxu0 0.0
        %1278 = vmatprep.subr.mxu0 0.0
        %1279 = vmatpush2.msra.mxu0 0.0
        %1280 = vmatprep.subr.mxu0 0.0
        %1281 = vmatpush2.msra.mxu0 0.0
        %1282 = vmatprep.subr.mxu0 0.0
        %1283 = vmatpush2.msra.mxu0 0.0
        %1284 = vmatprep.subr.mxu0 0.0
        %1285 = vmatpush2.msra.mxu0 0.0
        %1286 = vmatprep.subr.mxu0 0.0
        %1287 = vmatpush2.msra.mxu0 0.0
        %1288 = vmatprep.subr.mxu0 0.0
        %1289 = vmatpush2.msra.mxu0 0.0
        %1290 = vmatprep.subr.mxu0 0.0
        %1291 = vmatpush2.msra.mxu0 0.0
        %1292 = vmatprep.subr.mxu0 0.0
        %1293 = vmatpush2.msra.mxu0 0.0
        %1294 = vmatprep.subr.mxu0 0.0
        %1295 = vmatpush2.msra.mxu0 0.0
        %1296 = vmatprep.subr.mxu0 0.0
        %1297 = vmatpush2.msra.mxu0 %v1234
        %1298 = vmatprep.subr.mxu0 0.0
        %1299 = vmatpush2.msra.mxu0 %v1233
        %1300 = vmatprep.subr.mxu0 0.0
        %1301 = vmatpush2.msra.mxu0 %v1232
        %1302 = vmatprep.subr.mxu0 0.0
        %1303 = vmatpush2.msra.mxu0 %v1231
        %1304 = vmatprep.subr.mxu0 0.0
        %1305 = vmatpush2.msra.mxu0 %v1230
        %1306 = vmatprep.mubr.f32.mxu0 %v1237
        %1307 = vmatmul.mubr.f32.gmra.mxu0 %v1204
        %v1308 = vpop.f32.mrf.mxu0
        %v1309 = vadd.f32 0.0, %v1308
        %v1310 = vpop.f32.mrf.mxu0
        %1311 = vmatprep.mubr.f32.mxu0 %v1240
        %1312 = vmatmul.mubr.f32.gmra.mxu0 %v1210
        %v1313 = vpop.f32.mrf.mxu0
        %v1314 = vadd.f32 0.0, %v1313
        %v1315 = vpop.f32.mrf.mxu0
        %1316 = vdwg.mxu0
        %v1317 = vld [vmem:[%s5] sm:$0xff]
        %v1318 = vld [vmem:[%s5 + $0x8] sm:$0xff]
        %v1319 = vld [vmem:[%s5 + $0x10] sm:$0xff]
        %v1320 = vld [vmem:[%s5 + $0x18] sm:$0xff]
        %v1321 = vld [vmem:[%s5 + $0x20] sm:$0xff]
        %v1322 = vld [vmem:[%s5 + $0x28] sm:$0xff]
        %v1323 = vld [vmem:[%s5 + $0x30] sm:$0xff]
        %v1324 = vld [vmem:[%s5 + $0x38] sm:$0xff]
        %v1325 = vld [vmem:[%s5 + $0x40] sm:$0xff]
        %v1326 = vld [vmem:[%s5 + $0x48] sm:$0xff]
        %v1327 = vld [vmem:[%s5 + $0x50] sm:$0xff]
        %v1328 = vld [vmem:[%s5 + $0x58] sm:$0xff]
        %v1329 = vld [vmem:[%s5 + $0x60] sm:$0xff]
        %v1330 = vld [vmem:[%s5 + $0x68] sm:$0xff]
        %v1331 = vld [vmem:[%s5 + $0x70] sm:$0xff]
        %v1332 = vld [vmem:[%s5 + $0x78] sm:$0xff]
        %v1333 = vld [vmem:[%s5 + $0x80] sm:$0xff]
        %v1334 = vld [vmem:[%s5 + $0x88] sm:$0xff]
        %v1335 = vld [vmem:[%s5 + $0x90] sm:$0xff]
        %v1336 = vld [vmem:[%s5 + $0x98] sm:$0xff]
        %v1337 = vld [vmem:[%s5 + $0xa0] sm:$0xf]
        %v1338 = vld [vmem:[%s5 + $0xa8] sm:$0xf]
        %s1339 = scalar_lea.vmem %s5, 176
        %v1340 = vld [vmem:[%s1339] sm:$0xff]
        %v1341 = vld [vmem:[%s1339 + $0x8] sm:$0xff]
        %v1342 = vld [vmem:[%s1339 + $0x10] sm:$0xff]
        %v1343 = vld [vmem:[%s1339 + $0x18] sm:$0xff]
        %v1344 = vld [vmem:[%s1339 + $0x20] sm:$0xff]
        %v1345 = vld [vmem:[%s1339 + $0x28] sm:$0xff]
        %v1346 = vld [vmem:[%s1339 + $0x30] sm:$0xff]
        %v1347 = vld [vmem:[%s1339 + $0x38] sm:$0xff]
        %v1348 = vld [vmem:[%s1339 + $0x40] sm:$0xff]
        %v1349 = vld [vmem:[%s1339 + $0x48] sm:$0xff]
        %v1350 = vld [vmem:[%s1339 + $0x50] sm:$0xff]
        %v1351 = vld [vmem:[%s1339 + $0x58] sm:$0xff]
        %v1352 = vld [vmem:[%s1339 + $0x60] sm:$0xff]
        %v1353 = vld [vmem:[%s1339 + $0x68] sm:$0xff]
        %v1354 = vld [vmem:[%s1339 + $0x70] sm:$0xff]
        %v1355 = vld [vmem:[%s1339 + $0x78] sm:$0xff]
        %v1356 = vld [vmem:[%s1339 + $0x80] sm:$0xff]
        %v1357 = vld [vmem:[%s1339 + $0x88] sm:$0xff]
        %v1358 = vld [vmem:[%s1339 + $0x90] sm:$0xff]
        %v1359 = vld [vmem:[%s1339 + $0x98] sm:$0xff]
        %v1360 = vld [vmem:[%s1339 + $0xa0] sm:$0xf]
        %v1361 = vld [vmem:[%s1339 + $0xa8] sm:$0xf]
        %v1364 = vrot.slane %v1309, 1
        %v1365 = vrot.slane %v1314, 1
        %v1366 = vsel %vm525, %v1364, %v1365
        %vm1367 = vcmask 687104
        %v1368 = vsel %vm1367, %v1366, 0
        %v1370 = vsel %vm1367, %v1365, 0
        %v1373 = vsel %vm981, %v1360, 0
        %v1376 = vsel %vm981, %v1361, 0
        %1378 = vmatprep.subr.mxu0 0.0
        %1379 = vmatpush1.msra.mxu0 0.0
        %1380 = vmatprep.subr.mxu0 0.0
        %1381 = vmatpush1.msra.mxu0 0.0
        %1382 = vmatprep.subr.mxu0 0.0
        %1383 = vmatpush1.msra.mxu0 0.0
        %1384 = vmatprep.subr.mxu0 0.0
        %1385 = vmatpush1.msra.mxu0 0.0
        %1386 = vmatprep.subr.mxu0 0.0
        %1387 = vmatpush1.msra.mxu0 0.0
        %1388 = vmatprep.subr.mxu0 %v1376
        %1389 = vmatpush1.msra.mxu0 %v1373
        %1390 = vmatprep.subr.mxu0 %v1359
        %1391 = vmatpush1.msra.mxu0 %v1358
        %1392 = vmatprep.subr.mxu0 %v1357
        %1393 = vmatpush1.msra.mxu0 %v1356
        %1394 = vmatprep.subr.mxu0 %v1355
        %1395 = vmatpush1.msra.mxu0 %v1354
        %1396 = vmatprep.subr.mxu0 %v1353
        %1397 = vmatpush1.msra.mxu0 %v1352
        %1398 = vmatprep.subr.mxu0 %v1351
        %1399 = vmatpush1.msra.mxu0 %v1350
        %1400 = vmatprep.subr.mxu0 %v1349
        %1401 = vmatpush1.msra.mxu0 %v1348
        %1402 = vmatprep.subr.mxu0 %v1347
        %1403 = vmatpush1.msra.mxu0 %v1346
        %1404 = vmatprep.subr.mxu0 %v1345
        %1405 = vmatpush1.msra.mxu0 %v1344
        %1406 = vmatprep.subr.mxu0 %v1343
        %1407 = vmatpush1.msra.mxu0 %v1342
        %1408 = vmatprep.subr.mxu0 %v1341
        %1409 = vmatpush1.msra.mxu0 %v1340
        %1410 = vmatprep.subr.mxu0 0.0
        %1411 = vmatpush2.msra.mxu0 0.0
        %1412 = vmatprep.subr.mxu0 0.0
        %1413 = vmatpush2.msra.mxu0 0.0
        %1414 = vmatprep.subr.mxu0 0.0
        %1415 = vmatpush2.msra.mxu0 0.0
        %1416 = vmatprep.subr.mxu0 0.0
        %1417 = vmatpush2.msra.mxu0 0.0
        %1418 = vmatprep.subr.mxu0 0.0
        %1419 = vmatpush2.msra.mxu0 0.0
        %1420 = vmatprep.subr.mxu0 0.0
        %1421 = vmatpush2.msra.mxu0 0.0
        %1422 = vmatprep.subr.mxu0 0.0
        %1423 = vmatpush2.msra.mxu0 0.0
        %1424 = vmatprep.subr.mxu0 0.0
        %1425 = vmatpush2.msra.mxu0 0.0
        %1426 = vmatprep.subr.mxu0 0.0
        %1427 = vmatpush2.msra.mxu0 0.0
        %1428 = vmatprep.subr.mxu0 0.0
        %1429 = vmatpush2.msra.mxu0 0.0
        %1430 = vmatprep.subr.mxu0 0.0
        %1431 = vmatpush2.msra.mxu0 0.0
        %1432 = vmatprep.subr.mxu0 0.0
        %1433 = vmatpush2.msra.mxu0 0.0
        %1434 = vmatprep.subr.mxu0 0.0
        %1435 = vmatpush2.msra.mxu0 0.0
        %1436 = vmatprep.subr.mxu0 0.0
        %1437 = vmatpush2.msra.mxu0 0.0
        %1438 = vmatprep.subr.mxu0 0.0
        %1439 = vmatpush2.msra.mxu0 0.0
        %1440 = vmatprep.subr.mxu0 0.0
        %1441 = vmatpush2.msra.mxu0 0.0
        %1442 = vmatprep.mubr.f32.mxu0 0.0
        %1443 = vmatmul.mubr.f32.gmra.mxu0 %v1368
        %v1444 = vpop.f32.mrf.mxu0
        %v1445 = vadd.f32 0.0, %v1444
        %v1446 = vpop.f32.mrf.mxu0
        %v1447 = vadd.f32 0.0, %v1446
        %1448 = vmatprep.mubr.f32.mxu0 0.0
        %1449 = vmatmul.mubr.f32.gmra.mxu0 %v1370
        %v1450 = vpop.f32.mrf.mxu0
        %v1451 = vadd.f32 0.0, %v1450
        %v1452 = vpop.f32.mrf.mxu0
        %v1453 = vadd.f32 0.0, %v1452
        %1454 = vdwg.mxu0
        %v1455 = vsel %vm1367, %v1309, 0
        %v1457 = vsel %vm1367, %v1314, 0
        %v1460 = vsel %vm981, %v1337, 0
        %v1463 = vsel %vm981, %v1338, 0
        %1465 = vmatprep.subr.mxu0 0.0
        %1466 = vmatpush1.msra.mxu0 0.0
        %1467 = vmatprep.subr.mxu0 0.0
        %1468 = vmatpush1.msra.mxu0 0.0
        %1469 = vmatprep.subr.mxu0 0.0
        %1470 = vmatpush1.msra.mxu0 0.0
        %1471 = vmatprep.subr.mxu0 0.0
        %1472 = vmatpush1.msra.mxu0 0.0
        %1473 = vmatprep.subr.mxu0 0.0
        %1474 = vmatpush1.msra.mxu0 0.0
        %1475 = vmatprep.subr.mxu0 %v1463
        %1476 = vmatpush1.msra.mxu0 %v1460
        %1477 = vmatprep.subr.mxu0 %v1336
        %1478 = vmatpush1.msra.mxu0 %v1335
        %1479 = vmatprep.subr.mxu0 %v1334
        %1480 = vmatpush1.msra.mxu0 %v1333
        %1481 = vmatprep.subr.mxu0 %v1332
        %1482 = vmatpush1.msra.mxu0 %v1331
        %1483 = vmatprep.subr.mxu0 %v1330
        %1484 = vmatpush1.msra.mxu0 %v1329
        %1485 = vmatprep.subr.mxu0 %v1328
        %1486 = vmatpush1.msra.mxu0 %v1327
        %1487 = vmatprep.subr.mxu0 %v1326
        %1488 = vmatpush1.msra.mxu0 %v1325
        %1489 = vmatprep.subr.mxu0 %v1324
        %1490 = vmatpush1.msra.mxu0 %v1323
        %1491 = vmatprep.subr.mxu0 %v1322
        %1492 = vmatpush1.msra.mxu0 %v1321
        %1493 = vmatprep.subr.mxu0 %v1320
        %1494 = vmatpush1.msra.mxu0 %v1319
        %1495 = vmatprep.subr.mxu0 %v1318
        %1496 = vmatpush1.msra.mxu0 %v1317
        %1497 = vmatprep.subr.mxu0 0.0
        %1498 = vmatpush2.msra.mxu0 0.0
        %1499 = vmatprep.subr.mxu0 0.0
        %1500 = vmatpush2.msra.mxu0 0.0
        %1501 = vmatprep.subr.mxu0 0.0
        %1502 = vmatpush2.msra.mxu0 0.0
        %1503 = vmatprep.subr.mxu0 0.0
        %1504 = vmatpush2.msra.mxu0 0.0
        %1505 = vmatprep.subr.mxu0 0.0
        %1506 = vmatpush2.msra.mxu0 0.0
        %1507 = vmatprep.subr.mxu0 0.0
        %1508 = vmatpush2.msra.mxu0 0.0
        %1509 = vmatprep.subr.mxu0 0.0
        %1510 = vmatpush2.msra.mxu0 0.0
        %1511 = vmatprep.subr.mxu0 0.0
        %1512 = vmatpush2.msra.mxu0 0.0
        %1513 = vmatprep.subr.mxu0 0.0
        %1514 = vmatpush2.msra.mxu0 0.0
        %1515 = vmatprep.subr.mxu0 0.0
        %1516 = vmatpush2.msra.mxu0 0.0
        %1517 = vmatprep.subr.mxu0 0.0
        %1518 = vmatpush2.msra.mxu0 0.0
        %1519 = vmatprep.subr.mxu0 0.0
        %1520 = vmatpush2.msra.mxu0 0.0
        %1521 = vmatprep.subr.mxu0 0.0
        %1522 = vmatpush2.msra.mxu0 0.0
        %1523 = vmatprep.subr.mxu0 0.0
        %1524 = vmatpush2.msra.mxu0 0.0
        %1525 = vmatprep.subr.mxu0 0.0
        %1526 = vmatpush2.msra.mxu0 0.0
        %1527 = vmatprep.subr.mxu0 0.0
        %1528 = vmatpush2.msra.mxu0 0.0
        %1529 = vmatprep.mubr.f32.mxu0 0.0
        %1530 = vmatmul.mubr.f32.gmra.mxu0 %v1455
        %v1531 = vpop.f32.mrf.mxu0
        %v1532 = vadd.f32 %v1445, %v1531
        %v1533 = vpop.f32.mrf.mxu0
        %v1534 = vadd.f32 %v1447, %v1533
        %1535 = vmatprep.mubr.f32.mxu0 0.0
        %1536 = vmatmul.mubr.f32.gmra.mxu0 %v1457
        %v1537 = vpop.f32.mrf.mxu0
        %v1538 = vadd.f32 %v1451, %v1537
        %v1539 = vpop.f32.mrf.mxu0
        %v1540 = vadd.f32 %v1453, %v1539
        %1541 = vdwg.mxu0
        %s1542 = scalar_lea.vmem %s5, 352
        %v1543 = vld [vmem:[%s1542] sm:$0xff]
        %v1544 = vld [vmem:[%s1542 + $0x8] sm:$0xff]
        %v1545 = vld [vmem:[%s1542 + $0x10] sm:$0xff]
        %v1546 = vld [vmem:[%s1542 + $0x18] sm:$0xff]
        %v1547 = vld [vmem:[%s1542 + $0x20] sm:$0xff]
        %v1548 = vld [vmem:[%s1542 + $0x28] sm:$0xff]
        %v1549 = vld [vmem:[%s1542 + $0x30] sm:$0xff]
        %v1550 = vld [vmem:[%s1542 + $0x38] sm:$0xff]
        %v1551 = vld [vmem:[%s1542 + $0x40] sm:$0xff]
        %v1552 = vld [vmem:[%s1542 + $0x48] sm:$0xff]
        %v1553 = vld [vmem:[%s1542 + $0x50] sm:$0xff]
        %v1554 = vld [vmem:[%s1542 + $0x58] sm:$0xff]
        %v1555 = vld [vmem:[%s1542 + $0x60] sm:$0xff]
        %v1556 = vld [vmem:[%s1542 + $0x68] sm:$0xff]
        %v1557 = vld [vmem:[%s1542 + $0x70] sm:$0xff]
        %v1558 = vld [vmem:[%s1542 + $0x78] sm:$0xff]
        %v1559 = vld [vmem:[%s1542 + $0x80] sm:$0xff]
        %v1560 = vld [vmem:[%s1542 + $0x88] sm:$0xff]
        %v1561 = vld [vmem:[%s1542 + $0x90] sm:$0xff]
        %v1562 = vld [vmem:[%s1542 + $0x98] sm:$0xff]
        %v1563 = vld [vmem:[%s1542 + $0xa0] sm:$0xf]
        %v1564 = vld [vmem:[%s1542 + $0xa8] sm:$0xf]
        %v1565 = vrot.slane %v1309, 2
        %v1566 = vrot.slane %v1314, 2
        %v1567 = vsel %vm737, %v1565, %v1566
        %v1568 = vsel %vm1367, %v1567, 0
        %v1570 = vsel %vm1367, %v1566, 0
        %v1573 = vsel %vm981, %v1563, 0
        %v1576 = vsel %vm981, %v1564, 0
        %1578 = vmatprep.subr.mxu0 0.0
        %1579 = vmatpush1.msra.mxu0 0.0
        %1580 = vmatprep.subr.mxu0 0.0
        %1581 = vmatpush1.msra.mxu0 0.0
        %1582 = vmatprep.subr.mxu0 0.0
        %1583 = vmatpush1.msra.mxu0 0.0
        %1584 = vmatprep.subr.mxu0 0.0
        %1585 = vmatpush1.msra.mxu0 0.0
        %1586 = vmatprep.subr.mxu0 0.0
        %1587 = vmatpush1.msra.mxu0 0.0
        %1588 = vmatprep.subr.mxu0 %v1576
        %1589 = vmatpush1.msra.mxu0 %v1573
        %1590 = vmatprep.subr.mxu0 %v1562
        %1591 = vmatpush1.msra.mxu0 %v1561
        %1592 = vmatprep.subr.mxu0 %v1560
        %1593 = vmatpush1.msra.mxu0 %v1559
        %1594 = vmatprep.subr.mxu0 %v1558
        %1595 = vmatpush1.msra.mxu0 %v1557
        %1596 = vmatprep.subr.mxu0 %v1556
        %1597 = vmatpush1.msra.mxu0 %v1555
        %1598 = vmatprep.subr.mxu0 %v1554
        %1599 = vmatpush1.msra.mxu0 %v1553
        %1600 = vmatprep.subr.mxu0 %v1552
        %1601 = vmatpush1.msra.mxu0 %v1551
        %1602 = vmatprep.subr.mxu0 %v1550
        %1603 = vmatpush1.msra.mxu0 %v1549
        %1604 = vmatprep.subr.mxu0 %v1548
        %1605 = vmatpush1.msra.mxu0 %v1547
        %1606 = vmatprep.subr.mxu0 %v1546
        %1607 = vmatpush1.msra.mxu0 %v1545
        %1608 = vmatprep.subr.mxu0 %v1544
        %1609 = vmatpush1.msra.mxu0 %v1543
        %1610 = vmatprep.subr.mxu0 0.0
        %1611 = vmatpush2.msra.mxu0 0.0
        %1612 = vmatprep.subr.mxu0 0.0
        %1613 = vmatpush2.msra.mxu0 0.0
        %1614 = vmatprep.subr.mxu0 0.0
        %1615 = vmatpush2.msra.mxu0 0.0
        %1616 = vmatprep.subr.mxu0 0.0
        %1617 = vmatpush2.msra.mxu0 0.0
        %1618 = vmatprep.subr.mxu0 0.0
        %1619 = vmatpush2.msra.mxu0 0.0
        %1620 = vmatprep.subr.mxu0 0.0
        %1621 = vmatpush2.msra.mxu0 0.0
        %1622 = vmatprep.subr.mxu0 0.0
        %1623 = vmatpush2.msra.mxu0 0.0
        %1624 = vmatprep.subr.mxu0 0.0
        %1625 = vmatpush2.msra.mxu0 0.0
        %1626 = vmatprep.subr.mxu0 0.0
        %1627 = vmatpush2.msra.mxu0 0.0
        %1628 = vmatprep.subr.mxu0 0.0
        %1629 = vmatpush2.msra.mxu0 0.0
        %1630 = vmatprep.subr.mxu0 0.0
        %1631 = vmatpush2.msra.mxu0 0.0
        %1632 = vmatprep.subr.mxu0 0.0
        %1633 = vmatpush2.msra.mxu0 0.0
        %1634 = vmatprep.subr.mxu0 0.0
        %1635 = vmatpush2.msra.mxu0 0.0
        %1636 = vmatprep.subr.mxu0 0.0
        %1637 = vmatpush2.msra.mxu0 0.0
        %1638 = vmatprep.subr.mxu0 0.0
        %1639 = vmatpush2.msra.mxu0 0.0
        %1640 = vmatprep.subr.mxu0 0.0
        %1641 = vmatpush2.msra.mxu0 0.0
        %1642 = vmatprep.mubr.f32.mxu0 0.0
        %1643 = vmatmul.mubr.f32.gmra.mxu0 %v1568
        %v1644 = vpop.f32.mrf.mxu0
        %v1645 = vadd.f32 0.0, %v1644
        %v1646 = vpop.f32.mrf.mxu0
        %v1647 = vadd.f32 0.0, %v1646
        %1648 = vmatprep.mubr.f32.mxu0 0.0
        %1649 = vmatmul.mubr.f32.gmra.mxu0 %v1570
        %v1650 = vpop.f32.mrf.mxu0
        %v1651 = vadd.f32 0.0, %v1650
        %v1652 = vpop.f32.mrf.mxu0
        %v1653 = vadd.f32 0.0, %v1652
        %1654 = vdwg.mxu0
        %v1655 = vadd.f32 %v1532, %v1645
        %v1656 = vadd.f32 %v1534, %v1647
        %v1657 = vadd.f32 %v1538, %v1651
        %v1658 = vadd.f32 %v1540, %v1653
        %s1659 = scalar_lea.vmem %s5, 528
        %v1660 = vld [vmem:[%s1659] sm:$0xff]
        %v1661 = vld [vmem:[%s1659 + $0x8] sm:$0xff]
        %v1662 = vld [vmem:[%s1659 + $0x10] sm:$0xff]
        %v1663 = vld [vmem:[%s1659 + $0x18] sm:$0xff]
        %v1664 = vld [vmem:[%s1659 + $0x20] sm:$0xff]
        %v1665 = vld [vmem:[%s1659 + $0x28] sm:$0xff]
        %v1666 = vld [vmem:[%s1659 + $0x30] sm:$0xff]
        %v1667 = vld [vmem:[%s1659 + $0x38] sm:$0xff]
        %v1668 = vld [vmem:[%s1659 + $0x40] sm:$0xff]
        %v1669 = vld [vmem:[%s1659 + $0x48] sm:$0xff]
        %v1670 = vld [vmem:[%s1659 + $0x50] sm:$0xff]
        %v1671 = vld [vmem:[%s1659 + $0x58] sm:$0xff]
        %v1672 = vld [vmem:[%s1659 + $0x60] sm:$0xff]
        %v1673 = vld [vmem:[%s1659 + $0x68] sm:$0xff]
        %v1674 = vld [vmem:[%s1659 + $0x70] sm:$0xff]
        %v1675 = vld [vmem:[%s1659 + $0x78] sm:$0xff]
        %v1676 = vld [vmem:[%s1659 + $0x80] sm:$0xff]
        %v1677 = vld [vmem:[%s1659 + $0x88] sm:$0xff]
        %v1678 = vld [vmem:[%s1659 + $0x90] sm:$0xff]
        %v1679 = vld [vmem:[%s1659 + $0x98] sm:$0xff]
        %v1680 = vld [vmem:[%s1659 + $0xa0] sm:$0xf]
        %v1681 = vld [vmem:[%s1659 + $0xa8] sm:$0xf]
        %v1682 = vrot.slane %v1309, 3
        %v1683 = vrot.slane %v1314, 3
        %v1684 = vsel %vm859, %v1682, %v1683
        %v1685 = vsel %vm1367, %v1684, 0
        %v1687 = vsel %vm1367, %v1683, 0
        %v1690 = vsel %vm981, %v1680, 0
        %v1693 = vsel %vm981, %v1681, 0
        %1695 = vmatprep.subr.mxu0 0.0
        %1696 = vmatpush1.msra.mxu0 0.0
        %1697 = vmatprep.subr.mxu0 0.0
        %1698 = vmatpush1.msra.mxu0 0.0
        %1699 = vmatprep.subr.mxu0 0.0
        %1700 = vmatpush1.msra.mxu0 0.0
        %1701 = vmatprep.subr.mxu0 0.0
        %1702 = vmatpush1.msra.mxu0 0.0
        %1703 = vmatprep.subr.mxu0 0.0
        %1704 = vmatpush1.msra.mxu0 0.0
        %1705 = vmatprep.subr.mxu0 %v1693
        %1706 = vmatpush1.msra.mxu0 %v1690
        %1707 = vmatprep.subr.mxu0 %v1679
        %1708 = vmatpush1.msra.mxu0 %v1678
        %1709 = vmatprep.subr.mxu0 %v1677
        %1710 = vmatpush1.msra.mxu0 %v1676
        %1711 = vmatprep.subr.mxu0 %v1675
        %1712 = vmatpush1.msra.mxu0 %v1674
        %1713 = vmatprep.subr.mxu0 %v1673
        %1714 = vmatpush1.msra.mxu0 %v1672
        %1715 = vmatprep.subr.mxu0 %v1671
        %1716 = vmatpush1.msra.mxu0 %v1670
        %1717 = vmatprep.subr.mxu0 %v1669
        %1718 = vmatpush1.msra.mxu0 %v1668
        %1719 = vmatprep.subr.mxu0 %v1667
        %1720 = vmatpush1.msra.mxu0 %v1666
        %1721 = vmatprep.subr.mxu0 %v1665
        %1722 = vmatpush1.msra.mxu0 %v1664
        %1723 = vmatprep.subr.mxu0 %v1663
        %1724 = vmatpush1.msra.mxu0 %v1662
        %1725 = vmatprep.subr.mxu0 %v1661
        %1726 = vmatpush1.msra.mxu0 %v1660
        %1727 = vmatprep.subr.mxu0 0.0
        %1728 = vmatpush2.msra.mxu0 0.0
        %1729 = vmatprep.subr.mxu0 0.0
        %1730 = vmatpush2.msra.mxu0 0.0
        %1731 = vmatprep.subr.mxu0 0.0
        %1732 = vmatpush2.msra.mxu0 0.0
        %1733 = vmatprep.subr.mxu0 0.0
        %1734 = vmatpush2.msra.mxu0 0.0
        %1735 = vmatprep.subr.mxu0 0.0
        %1736 = vmatpush2.msra.mxu0 0.0
        %1737 = vmatprep.subr.mxu0 0.0
        %1738 = vmatpush2.msra.mxu0 0.0
        %1739 = vmatprep.subr.mxu0 0.0
        %1740 = vmatpush2.msra.mxu0 0.0
        %1741 = vmatprep.subr.mxu0 0.0
        %1742 = vmatpush2.msra.mxu0 0.0
        %1743 = vmatprep.subr.mxu0 0.0
        %1744 = vmatpush2.msra.mxu0 0.0
        %1745 = vmatprep.subr.mxu0 0.0
        %1746 = vmatpush2.msra.mxu0 0.0
        %1747 = vmatprep.subr.mxu0 0.0
        %1748 = vmatpush2.msra.mxu0 0.0
        %1749 = vmatprep.subr.mxu0 0.0
        %1750 = vmatpush2.msra.mxu0 0.0
        %1751 = vmatprep.subr.mxu0 0.0
        %1752 = vmatpush2.msra.mxu0 0.0
        %1753 = vmatprep.subr.mxu0 0.0
        %1754 = vmatpush2.msra.mxu0 0.0
        %1755 = vmatprep.subr.mxu0 0.0
        %1756 = vmatpush2.msra.mxu0 0.0
        %1757 = vmatprep.subr.mxu0 0.0
        %1758 = vmatpush2.msra.mxu0 0.0
        %1759 = vmatprep.mubr.f32.mxu0 0.0
        %1760 = vmatmul.mubr.f32.gmra.mxu0 %v1685
        %v1761 = vpop.f32.mrf.mxu0
        %v1762 = vadd.f32 0.0, %v1761
        %v1763 = vpop.f32.mrf.mxu0
        %v1764 = vadd.f32 0.0, %v1763
        %1765 = vmatprep.mubr.f32.mxu0 0.0
        %1766 = vmatmul.mubr.f32.gmra.mxu0 %v1687
        %v1767 = vpop.f32.mrf.mxu0
        %v1768 = vadd.f32 0.0, %v1767
        %v1769 = vpop.f32.mrf.mxu0
        %v1770 = vadd.f32 0.0, %v1769
        %1771 = vdwg.mxu0
        %v1772 = vadd.f32 %v1655, %v1762
        %v1773 = vadd.f32 %v1656, %v1764
        %v1774 = vadd.f32 %v1657, %v1768
        %v1775 = vadd.f32 %v1658, %v1770
        %s1776 = scalar_lea.vmem %s5, 704
        %v1777 = vld [vmem:[%s1776] sm:$0xff]
        %v1778 = vld [vmem:[%s1776 + $0x8] sm:$0xff]
        %v1779 = vld [vmem:[%s1776 + $0x10] sm:$0xff]
        %v1780 = vld [vmem:[%s1776 + $0x18] sm:$0xff]
        %v1781 = vld [vmem:[%s1776 + $0x20] sm:$0xff]
        %v1782 = vld [vmem:[%s1776 + $0x28] sm:$0xff]
        %v1783 = vld [vmem:[%s1776 + $0x30] sm:$0xff]
        %v1784 = vld [vmem:[%s1776 + $0x38] sm:$0xff]
        %v1785 = vld [vmem:[%s1776 + $0x40] sm:$0xff]
        %v1786 = vld [vmem:[%s1776 + $0x48] sm:$0xff]
        %v1787 = vld [vmem:[%s1776 + $0x50] sm:$0xff]
        %v1788 = vld [vmem:[%s1776 + $0x58] sm:$0xff]
        %v1789 = vld [vmem:[%s1776 + $0x60] sm:$0xff]
        %v1790 = vld [vmem:[%s1776 + $0x68] sm:$0xff]
        %v1791 = vld [vmem:[%s1776 + $0x70] sm:$0xff]
        %v1792 = vld [vmem:[%s1776 + $0x78] sm:$0xff]
        %v1793 = vld [vmem:[%s1776 + $0x80] sm:$0xff]
        %v1794 = vld [vmem:[%s1776 + $0x88] sm:$0xff]
        %v1795 = vld [vmem:[%s1776 + $0x90] sm:$0xff]
        %v1796 = vld [vmem:[%s1776 + $0x98] sm:$0xff]
        %v1797 = vld [vmem:[%s1776 + $0xa0] sm:$0xf]
        %v1798 = vld [vmem:[%s1776 + $0xa8] sm:$0xf]
        %v1799 = vrot.slane %v1309, 4
        %v1800 = vrot.slane %v1314, 4
        %v1801 = vsel %vm981, %v1799, %v1800
        %v1802 = vsel %vm1367, %v1801, 0
        %v1804 = vsel %vm1367, %v1800, 0
        %v1807 = vsel %vm981, %v1797, 0
        %v1810 = vsel %vm981, %v1798, 0
        %1812 = vmatprep.subr.mxu0 0.0
        %1813 = vmatpush1.msra.mxu0 0.0
        %1814 = vmatprep.subr.mxu0 0.0
        %1815 = vmatpush1.msra.mxu0 0.0
        %1816 = vmatprep.subr.mxu0 0.0
        %1817 = vmatpush1.msra.mxu0 0.0
        %1818 = vmatprep.subr.mxu0 0.0
        %1819 = vmatpush1.msra.mxu0 0.0
        %1820 = vmatprep.subr.mxu0 0.0
        %1821 = vmatpush1.msra.mxu0 0.0
        %1822 = vmatprep.subr.mxu0 %v1810
        %1823 = vmatpush1.msra.mxu0 %v1807
        %1824 = vmatprep.subr.mxu0 %v1796
        %1825 = vmatpush1.msra.mxu0 %v1795
        %1826 = vmatprep.subr.mxu0 %v1794
        %1827 = vmatpush1.msra.mxu0 %v1793
        %1828 = vmatprep.subr.mxu0 %v1792
        %1829 = vmatpush1.msra.mxu0 %v1791
        %1830 = vmatprep.subr.mxu0 %v1790
        %1831 = vmatpush1.msra.mxu0 %v1789
        %1832 = vmatprep.subr.mxu0 %v1788
        %1833 = vmatpush1.msra.mxu0 %v1787
        %1834 = vmatprep.subr.mxu0 %v1786
        %1835 = vmatpush1.msra.mxu0 %v1785
        %1836 = vmatprep.subr.mxu0 %v1784
        %1837 = vmatpush1.msra.mxu0 %v1783
        %1838 = vmatprep.subr.mxu0 %v1782
        %1839 = vmatpush1.msra.mxu0 %v1781
        %1840 = vmatprep.subr.mxu0 %v1780
        %1841 = vmatpush1.msra.mxu0 %v1779
        %1842 = vmatprep.subr.mxu0 %v1778
        %1843 = vmatpush1.msra.mxu0 %v1777
        %1844 = vmatprep.subr.mxu0 0.0
        %1845 = vmatpush2.msra.mxu0 0.0
        %1846 = vmatprep.subr.mxu0 0.0
        %1847 = vmatpush2.msra.mxu0 0.0
        %1848 = vmatprep.subr.mxu0 0.0
        %1849 = vmatpush2.msra.mxu0 0.0
        %1850 = vmatprep.subr.mxu0 0.0
        %1851 = vmatpush2.msra.mxu0 0.0
        %1852 = vmatprep.subr.mxu0 0.0
        %1853 = vmatpush2.msra.mxu0 0.0
        %1854 = vmatprep.subr.mxu0 0.0
        %1855 = vmatpush2.msra.mxu0 0.0
        %1856 = vmatprep.subr.mxu0 0.0
        %1857 = vmatpush2.msra.mxu0 0.0
        %1858 = vmatprep.subr.mxu0 0.0
        %1859 = vmatpush2.msra.mxu0 0.0
        %1860 = vmatprep.subr.mxu0 0.0
        %1861 = vmatpush2.msra.mxu0 0.0
        %1862 = vmatprep.subr.mxu0 0.0
        %1863 = vmatpush2.msra.mxu0 0.0
        %1864 = vmatprep.subr.mxu0 0.0
        %1865 = vmatpush2.msra.mxu0 0.0
        %1866 = vmatprep.subr.mxu0 0.0
        %1867 = vmatpush2.msra.mxu0 0.0
        %1868 = vmatprep.subr.mxu0 0.0
        %1869 = vmatpush2.msra.mxu0 0.0
        %1870 = vmatprep.subr.mxu0 0.0
        %1871 = vmatpush2.msra.mxu0 0.0
        %1872 = vmatprep.subr.mxu0 0.0
        %1873 = vmatpush2.msra.mxu0 0.0
        %1874 = vmatprep.subr.mxu0 0.0
        %1875 = vmatpush2.msra.mxu0 0.0
        %1876 = vmatprep.mubr.f32.mxu0 0.0
        %1877 = vmatmul.mubr.f32.gmra.mxu0 %v1802
        %v1878 = vpop.f32.mrf.mxu0
        %v1879 = vadd.f32 0.0, %v1878
        %v1880 = vpop.f32.mrf.mxu0
        %v1881 = vadd.f32 0.0, %v1880
        %1882 = vmatprep.mubr.f32.mxu0 0.0
        %1883 = vmatmul.mubr.f32.gmra.mxu0 %v1804
        %v1884 = vpop.f32.mrf.mxu0
        %v1885 = vadd.f32 0.0, %v1884
        %v1886 = vpop.f32.mrf.mxu0
        %v1887 = vadd.f32 0.0, %v1886
        %1888 = vdwg.mxu0
        %v1889 = vadd.f32 %v1772, %v1879
        %v1890 = vadd.f32 %v1773, %v1881
        %v1891 = vadd.f32 %v1774, %v1885
        %v1892 = vadd.f32 %v1775, %v1887
        %v1893 = vld [vmem:[%s6] sm:$0x3]
        %v1895 = vlaneseq
        %v1896 = vshrl.u32 %v1895, 7
        %v1897 = vsub.s32 0, %v1896
        %v1898 = vrot.slane %v1893, %v1897
        %v1899 = vlaneseq
        %v1900 = vshrl.u32 %v1899, 7
        %v1901 = vsub.s32 1, %v1900
        %v1902 = vrot.slane %v1893, %v1901
        %v1905 = vadd.f32 %v1889, %v1898
        %v1906 = vadd.f32 %v1890, %v1902
        %v1907 = vadd.f32 %v1891, %v1898
        %v1908 = vadd.f32 %v1892, %v1902
        %v1909 = vmax.f32 %v1905, 0.0
        %v1910 = vmax.f32 %v1906, 0.0
        %v1911 = vmax.f32 %v1907, 0.0
        %v1912 = vmax.f32 %v1908, 0.0
        %v1913 = vld [vmem:[%s7] sm:$0x1f]
        %vm1914 = vcmask 80896
        %v1916 = vsel %vm1914, %v1913, 0
        %vm1918 = vcmask 1041408
        %v1920 = vsel %vm1918, %v1911, 0
        %v1923 = vsel %vm1918, %v1912, 0
        %1925 = vmatprep.subr.mxu0 0.0
        %1926 = vmatpush1.msra.mxu0 0.0
        %1927 = vmatprep.subr.mxu0 0.0
        %1928 = vmatpush1.msra.mxu0 0.0
        %1929 = vmatprep.subr.mxu0 0.0
        %1930 = vmatpush1.msra.mxu0 0.0
        %1931 = vmatprep.subr.mxu0 0.0
        %1932 = vmatpush1.msra.mxu0 0.0
        %1933 = vmatprep.subr.mxu0 0.0
        %1934 = vmatpush1.msra.mxu0 0.0
        %1935 = vmatprep.subr.mxu0 0.0
        %1936 = vmatpush1.msra.mxu0 0.0
        %1937 = vmatprep.subr.mxu0 0.0
        %1938 = vmatpush1.msra.mxu0 0.0
        %1939 = vmatprep.subr.mxu0 0.0
        %1940 = vmatpush1.msra.mxu0 0.0
        %1941 = vmatprep.subr.mxu0 0.0
        %1942 = vmatpush1.msra.mxu0 0.0
        %1943 = vmatprep.subr.mxu0 0.0
        %1944 = vmatpush1.msra.mxu0 0.0
        %1945 = vmatprep.subr.mxu0 0.0
        %1946 = vmatpush1.msra.mxu0 0.0
        %1947 = vmatprep.subr.mxu0 0.0
        %1948 = vmatpush1.msra.mxu0 0.0
        %1949 = vmatprep.subr.mxu0 0.0
        %1950 = vmatpush1.msra.mxu0 0.0
        %1951 = vmatprep.subr.mxu0 0.0
        %1952 = vmatpush1.msra.mxu0 0.0
        %1953 = vmatprep.subr.mxu0 %v1923
        %1954 = vmatpush1.msra.mxu0 %v1920
        %1955 = vmatprep.subr.mxu0 %v1910
        %1956 = vmatpush1.msra.mxu0 %v1909
        %1957 = vmatprep.subr.mxu0 0.0
        %1958 = vmatpush2.msra.mxu0 0.0
        %1959 = vmatprep.subr.mxu0 0.0
        %1960 = vmatpush2.msra.mxu0 0.0
        %1961 = vmatprep.subr.mxu0 0.0
        %1962 = vmatpush2.msra.mxu0 0.0
        %1963 = vmatprep.subr.mxu0 0.0
        %1964 = vmatpush2.msra.mxu0 0.0
        %1965 = vmatprep.subr.mxu0 0.0
        %1966 = vmatpush2.msra.mxu0 0.0
        %1967 = vmatprep.subr.mxu0 0.0
        %1968 = vmatpush2.msra.mxu0 0.0
        %1969 = vmatprep.subr.mxu0 0.0
        %1970 = vmatpush2.msra.mxu0 0.0
        %1971 = vmatprep.subr.mxu0 0.0
        %1972 = vmatpush2.msra.mxu0 0.0
        %1973 = vmatprep.subr.mxu0 0.0
        %1974 = vmatpush2.msra.mxu0 0.0
        %1975 = vmatprep.subr.mxu0 0.0
        %1976 = vmatpush2.msra.mxu0 0.0
        %1977 = vmatprep.subr.mxu0 0.0
        %1978 = vmatpush2.msra.mxu0 0.0
        %1979 = vmatprep.subr.mxu0 0.0
        %1980 = vmatpush2.msra.mxu0 0.0
        %1981 = vmatprep.subr.mxu0 0.0
        %1982 = vmatpush2.msra.mxu0 0.0
        %1983 = vmatprep.subr.mxu0 0.0
        %1984 = vmatpush2.msra.mxu0 0.0
        %1985 = vmatprep.subr.mxu0 0.0
        %1986 = vmatpush2.msra.mxu0 0.0
        %1987 = vmatprep.subr.mxu0 0.0
        %1988 = vmatpush2.msra.mxu0 0.0
        %1989 = vmatprep.mubr.f32.mxu0 0.0
        %1990 = vmatmul.mubr.f32.gmra.mxu0 %v1916
        %v1991 = vpop.f32.mrf.mxu0
        %v1992 = vadd.f32 0.0, %v1991
        %v1993 = vpop.f32.mrf.mxu0
        %v1994 = vadd.f32 0.0, %v1993
        %1995 = vdwg.mxu0
        %v1996 = vld [vmem:[%s8] sm:$0xff]
        %v1997 = vld [vmem:[%s8 + $0x8] sm:$0xff]
        %v1998 = vld [vmem:[%s8 + $0x10] sm:$0xff]
        %v1999 = vld [vmem:[%s8 + $0x18] sm:$0xff]
        %v2000 = vld [vmem:[%s8 + $0x20] sm:$0xff]
        %v2001 = vld [vmem:[%s8 + $0x28] sm:$0xff]
        %v2002 = vld [vmem:[%s8 + $0x30] sm:$0xff]
        %v2003 = vld [vmem:[%s8 + $0x38] sm:$0xff]
        %v2004 = vld [vmem:[%s8 + $0x40] sm:$0xff]
        %v2005 = vld [vmem:[%s8 + $0x48] sm:$0xff]
        %v2006 = vld [vmem:[%s8 + $0x50] sm:$0xff]
        %v2007 = vld [vmem:[%s8 + $0x58] sm:$0xff]
        %v2008 = vld [vmem:[%s8 + $0x60] sm:$0xff]
        %v2009 = vld [vmem:[%s8 + $0x68] sm:$0xff]
        %v2010 = vld [vmem:[%s8 + $0x70] sm:$0xff]
        %v2011 = vld [vmem:[%s8 + $0x78] sm:$0xff]
        %v2012 = vld [vmem:[%s8 + $0x80] sm:$0xff]
        %v2013 = vld [vmem:[%s8 + $0x88] sm:$0xff]
        %v2014 = vld [vmem:[%s8 + $0x90] sm:$0xff]
        %v2015 = vld [vmem:[%s8 + $0x98] sm:$0xff]
        %v2017 = vsel %vm533, %v1994, 0
        %2019 = vmatprep.subr.mxu0 0.0
        %2020 = vmatpush1.msra.mxu0 %v2011
        %2021 = vmatprep.subr.mxu0 0.0
        %2022 = vmatpush1.msra.mxu0 %v2010
        %2023 = vmatprep.subr.mxu0 0.0
        %2024 = vmatpush1.msra.mxu0 %v2009
        %2025 = vmatprep.subr.mxu0 0.0
        %2026 = vmatpush1.msra.mxu0 %v2008
        %2027 = vmatprep.subr.mxu0 0.0
        %2028 = vmatpush1.msra.mxu0 %v2007
        %2029 = vmatprep.subr.mxu0 0.0
        %2030 = vmatpush1.msra.mxu0 %v2006
        %2031 = vmatprep.subr.mxu0 0.0
        %2032 = vmatpush1.msra.mxu0 %v2005
        %2033 = vmatprep.subr.mxu0 0.0
        %2034 = vmatpush1.msra.mxu0 %v2004
        %2035 = vmatprep.subr.mxu0 0.0
        %2036 = vmatpush1.msra.mxu0 %v2003
        %2037 = vmatprep.subr.mxu0 0.0
        %2038 = vmatpush1.msra.mxu0 %v2002
        %2039 = vmatprep.subr.mxu0 0.0
        %2040 = vmatpush1.msra.mxu0 %v2001
        %2041 = vmatprep.subr.mxu0 0.0
        %2042 = vmatpush1.msra.mxu0 %v2000
        %2043 = vmatprep.subr.mxu0 0.0
        %2044 = vmatpush1.msra.mxu0 %v1999
        %2045 = vmatprep.subr.mxu0 0.0
        %2046 = vmatpush1.msra.mxu0 %v1998
        %2047 = vmatprep.subr.mxu0 0.0
        %2048 = vmatpush1.msra.mxu0 %v1997
        %2049 = vmatprep.subr.mxu0 0.0
        %2050 = vmatpush1.msra.mxu0 %v1996
        %2051 = vmatprep.subr.mxu0 0.0
        %2052 = vmatpush2.msra.mxu0 0.0
        %2053 = vmatprep.subr.mxu0 0.0
        %2054 = vmatpush2.msra.mxu0 0.0
        %2055 = vmatprep.subr.mxu0 0.0
        %2056 = vmatpush2.msra.mxu0 0.0
        %2057 = vmatprep.subr.mxu0 0.0
        %2058 = vmatpush2.msra.mxu0 0.0
        %2059 = vmatprep.subr.mxu0 0.0
        %2060 = vmatpush2.msra.mxu0 0.0
        %2061 = vmatprep.subr.mxu0 0.0
        %2062 = vmatpush2.msra.mxu0 0.0
        %2063 = vmatprep.subr.mxu0 0.0
        %2064 = vmatpush2.msra.mxu0 0.0
        %2065 = vmatprep.subr.mxu0 0.0
        %2066 = vmatpush2.msra.mxu0 0.0
        %2067 = vmatprep.subr.mxu0 0.0
        %2068 = vmatpush2.msra.mxu0 0.0
        %2069 = vmatprep.subr.mxu0 0.0
        %2070 = vmatpush2.msra.mxu0 0.0
        %2071 = vmatprep.subr.mxu0 0.0
        %2072 = vmatpush2.msra.mxu0 0.0
        %2073 = vmatprep.subr.mxu0 0.0
        %2074 = vmatpush2.msra.mxu0 0.0
        %2075 = vmatprep.subr.mxu0 0.0
        %2076 = vmatpush2.msra.mxu0 %v2015
        %2077 = vmatprep.subr.mxu0 0.0
        %2078 = vmatpush2.msra.mxu0 %v2014
        %2079 = vmatprep.subr.mxu0 0.0
        %2080 = vmatpush2.msra.mxu0 %v2013
        %2081 = vmatprep.subr.mxu0 0.0
        %2082 = vmatpush2.msra.mxu0 %v2012
        %2083 = vmatprep.mubr.f32.mxu0 %v2017
        %2084 = vmatmul.mubr.f32.gmra.mxu0 %v1992
        %v2085 = vpop.f32.mrf.mxu0
        %v2086 = vadd.f32 0.0, %v2085
        %v2087 = vpop.f32.mrf.mxu0
        %2088 = vdwg.mxu0
        %v2089 = vld [vmem:[%s9] sm:$0xff]
        %v2090 = vld [vmem:[%s9 + $0x8] sm:$0xff]
        %v2091 = vld [vmem:[%s9 + $0x10] sm:$0xff]
        %v2092 = vld [vmem:[%s9 + $0x18] sm:$0xff]
        %v2093 = vld [vmem:[%s9 + $0x20] sm:$0xff]
        %v2094 = vld [vmem:[%s9 + $0x28] sm:$0xff]
        %v2095 = vld [vmem:[%s9 + $0x30] sm:$0xff]
        %v2096 = vld [vmem:[%s9 + $0x38] sm:$0xff]
        %v2097 = vld [vmem:[%s9 + $0x40] sm:$0xff]
        %v2098 = vld [vmem:[%s9 + $0x48] sm:$0xff]
        %s2099 = scalar_lea.vmem %s9, 80
        %v2100 = vld [vmem:[%s2099] sm:$0xff]
        %v2101 = vld [vmem:[%s2099 + $0x8] sm:$0xff]
        %v2102 = vld [vmem:[%s2099 + $0x10] sm:$0xff]
        %v2103 = vld [vmem:[%s2099 + $0x18] sm:$0xff]
        %v2104 = vld [vmem:[%s2099 + $0x20] sm:$0xff]
        %v2105 = vld [vmem:[%s2099 + $0x28] sm:$0xff]
        %v2106 = vld [vmem:[%s2099 + $0x30] sm:$0xff]
        %v2107 = vld [vmem:[%s2099 + $0x38] sm:$0xff]
        %v2108 = vld [vmem:[%s2099 + $0x40] sm:$0xff]
        %v2109 = vld [vmem:[%s2099 + $0x48] sm:$0xff]
        %v2111 = vrot.slane %v2086, 1
        %vm2112 = vcmask 654336
        %v2113 = vsel %vm2112, %v2111, 0
        %2115 = vmatprep.subr.mxu0 0.0
        %2116 = vmatpush1.msra.mxu0 0.0
        %2117 = vmatprep.subr.mxu0 0.0
        %2118 = vmatpush1.msra.mxu0 0.0
        %2119 = vmatprep.subr.mxu0 0.0
        %2120 = vmatpush1.msra.mxu0 0.0
        %2121 = vmatprep.subr.mxu0 0.0
        %2122 = vmatpush1.msra.mxu0 0.0
        %2123 = vmatprep.subr.mxu0 0.0
        %2124 = vmatpush1.msra.mxu0 0.0
        %2125 = vmatprep.subr.mxu0 0.0
        %2126 = vmatpush1.msra.mxu0 0.0
        %2127 = vmatprep.subr.mxu0 0.0
        %2128 = vmatpush1.msra.mxu0 %v2109
        %2129 = vmatprep.subr.mxu0 0.0
        %2130 = vmatpush1.msra.mxu0 %v2108
        %2131 = vmatprep.subr.mxu0 0.0
        %2132 = vmatpush1.msra.mxu0 %v2107
        %2133 = vmatprep.subr.mxu0 0.0
        %2134 = vmatpush1.msra.mxu0 %v2106
        %2135 = vmatprep.subr.mxu0 0.0
        %2136 = vmatpush1.msra.mxu0 %v2105
        %2137 = vmatprep.subr.mxu0 0.0
        %2138 = vmatpush1.msra.mxu0 %v2104
        %2139 = vmatprep.subr.mxu0 0.0
        %2140 = vmatpush1.msra.mxu0 %v2103
        %2141 = vmatprep.subr.mxu0 0.0
        %2142 = vmatpush1.msra.mxu0 %v2102
        %2143 = vmatprep.subr.mxu0 0.0
        %2144 = vmatpush1.msra.mxu0 %v2101
        %2145 = vmatprep.subr.mxu0 0.0
        %2146 = vmatpush1.msra.mxu0 %v2100
        %2147 = vmatprep.subr.mxu0 0.0
        %2148 = vmatpush2.msra.mxu0 0.0
        %2149 = vmatprep.subr.mxu0 0.0
        %2150 = vmatpush2.msra.mxu0 0.0
        %2151 = vmatprep.subr.mxu0 0.0
        %2152 = vmatpush2.msra.mxu0 0.0
        %2153 = vmatprep.subr.mxu0 0.0
        %2154 = vmatpush2.msra.mxu0 0.0
        %2155 = vmatprep.subr.mxu0 0.0
        %2156 = vmatpush2.msra.mxu0 0.0
        %2157 = vmatprep.subr.mxu0 0.0
        %2158 = vmatpush2.msra.mxu0 0.0
        %2159 = vmatprep.subr.mxu0 0.0
        %2160 = vmatpush2.msra.mxu0 0.0
        %2161 = vmatprep.subr.mxu0 0.0
        %2162 = vmatpush2.msra.mxu0 0.0
        %2163 = vmatprep.subr.mxu0 0.0
        %2164 = vmatpush2.msra.mxu0 0.0
        %2165 = vmatprep.subr.mxu0 0.0
        %2166 = vmatpush2.msra.mxu0 0.0
        %2167 = vmatprep.subr.mxu0 0.0
        %2168 = vmatpush2.msra.mxu0 0.0
        %2169 = vmatprep.subr.mxu0 0.0
        %2170 = vmatpush2.msra.mxu0 0.0
        %2171 = vmatprep.subr.mxu0 0.0
        %2172 = vmatpush2.msra.mxu0 0.0
        %2173 = vmatprep.subr.mxu0 0.0
        %2174 = vmatpush2.msra.mxu0 0.0
        %2175 = vmatprep.subr.mxu0 0.0
        %2176 = vmatpush2.msra.mxu0 0.0
        %2177 = vmatprep.subr.mxu0 0.0
        %2178 = vmatpush2.msra.mxu0 0.0
        %2179 = vmatprep.mubr.f32.mxu0 0.0
        %2180 = vmatmul.mubr.f32.gmra.mxu0 %v2113
        %v2181 = vpop.f32.mrf.mxu0
        %v2182 = vadd.f32 0.0, %v2181
        %v2183 = vpop.f32.mrf.mxu0
        %2184 = vdwg.mxu0
        %v2185 = vsel %vm2112, %v2086, 0
        %2187 = vmatprep.subr.mxu0 0.0
        %2188 = vmatpush1.msra.mxu0 0.0
        %2189 = vmatprep.subr.mxu0 0.0
        %2190 = vmatpush1.msra.mxu0 0.0
        %2191 = vmatprep.subr.mxu0 0.0
        %2192 = vmatpush1.msra.mxu0 0.0
        %2193 = vmatprep.subr.mxu0 0.0
        %2194 = vmatpush1.msra.mxu0 0.0
        %2195 = vmatprep.subr.mxu0 0.0
        %2196 = vmatpush1.msra.mxu0 0.0
        %2197 = vmatprep.subr.mxu0 0.0
        %2198 = vmatpush1.msra.mxu0 0.0
        %2199 = vmatprep.subr.mxu0 0.0
        %2200 = vmatpush1.msra.mxu0 %v2098
        %2201 = vmatprep.subr.mxu0 0.0
        %2202 = vmatpush1.msra.mxu0 %v2097
        %2203 = vmatprep.subr.mxu0 0.0
        %2204 = vmatpush1.msra.mxu0 %v2096
        %2205 = vmatprep.subr.mxu0 0.0
        %2206 = vmatpush1.msra.mxu0 %v2095
        %2207 = vmatprep.subr.mxu0 0.0
        %2208 = vmatpush1.msra.mxu0 %v2094
        %2209 = vmatprep.subr.mxu0 0.0
        %2210 = vmatpush1.msra.mxu0 %v2093
        %2211 = vmatprep.subr.mxu0 0.0
        %2212 = vmatpush1.msra.mxu0 %v2092
        %2213 = vmatprep.subr.mxu0 0.0
        %2214 = vmatpush1.msra.mxu0 %v2091
        %2215 = vmatprep.subr.mxu0 0.0
        %2216 = vmatpush1.msra.mxu0 %v2090
        %2217 = vmatprep.subr.mxu0 0.0
        %2218 = vmatpush1.msra.mxu0 %v2089
        %2219 = vmatprep.subr.mxu0 0.0
        %2220 = vmatpush2.msra.mxu0 0.0
        %2221 = vmatprep.subr.mxu0 0.0
        %2222 = vmatpush2.msra.mxu0 0.0
        %2223 = vmatprep.subr.mxu0 0.0
        %2224 = vmatpush2.msra.mxu0 0.0
        %2225 = vmatprep.subr.mxu0 0.0
        %2226 = vmatpush2.msra.mxu0 0.0
        %2227 = vmatprep.subr.mxu0 0.0
        %2228 = vmatpush2.msra.mxu0 0.0
        %2229 = vmatprep.subr.mxu0 0.0
        %2230 = vmatpush2.msra.mxu0 0.0
        %2231 = vmatprep.subr.mxu0 0.0
        %2232 = vmatpush2.msra.mxu0 0.0
        %2233 = vmatprep.subr.mxu0 0.0
        %2234 = vmatpush2.msra.mxu0 0.0
        %2235 = vmatprep.subr.mxu0 0.0
        %2236 = vmatpush2.msra.mxu0 0.0
        %2237 = vmatprep.subr.mxu0 0.0
        %2238 = vmatpush2.msra.mxu0 0.0
        %2239 = vmatprep.subr.mxu0 0.0
        %2240 = vmatpush2.msra.mxu0 0.0
        %2241 = vmatprep.subr.mxu0 0.0
        %2242 = vmatpush2.msra.mxu0 0.0
        %2243 = vmatprep.subr.mxu0 0.0
        %2244 = vmatpush2.msra.mxu0 0.0
        %2245 = vmatprep.subr.mxu0 0.0
        %2246 = vmatpush2.msra.mxu0 0.0
        %2247 = vmatprep.subr.mxu0 0.0
        %2248 = vmatpush2.msra.mxu0 0.0
        %2249 = vmatprep.subr.mxu0 0.0
        %2250 = vmatpush2.msra.mxu0 0.0
        %2251 = vmatprep.mubr.f32.mxu0 0.0
        %2252 = vmatmul.mubr.f32.gmra.mxu0 %v2185
        %v2253 = vpop.f32.mrf.mxu0
        %v2254 = vadd.f32 %v2182, %v2253
        %v2255 = vpop.f32.mrf.mxu0
        %2256 = vdwg.mxu0
        %s2257 = scalar_lea.vmem %s9, 160
        %v2258 = vld [vmem:[%s2257] sm:$0xff]
        %v2259 = vld [vmem:[%s2257 + $0x8] sm:$0xff]
        %v2260 = vld [vmem:[%s2257 + $0x10] sm:$0xff]
        %v2261 = vld [vmem:[%s2257 + $0x18] sm:$0xff]
        %v2262 = vld [vmem:[%s2257 + $0x20] sm:$0xff]
        %v2263 = vld [vmem:[%s2257 + $0x28] sm:$0xff]
        %v2264 = vld [vmem:[%s2257 + $0x30] sm:$0xff]
        %v2265 = vld [vmem:[%s2257 + $0x38] sm:$0xff]
        %v2266 = vld [vmem:[%s2257 + $0x40] sm:$0xff]
        %v2267 = vld [vmem:[%s2257 + $0x48] sm:$0xff]
        %v2268 = vrot.slane %v2086, 2
        %v2269 = vsel %vm2112, %v2268, 0
        %2271 = vmatprep.subr.mxu0 0.0
        %2272 = vmatpush1.msra.mxu0 0.0
        %2273 = vmatprep.subr.mxu0 0.0
        %2274 = vmatpush1.msra.mxu0 0.0
        %2275 = vmatprep.subr.mxu0 0.0
        %2276 = vmatpush1.msra.mxu0 0.0
        %2277 = vmatprep.subr.mxu0 0.0
        %2278 = vmatpush1.msra.mxu0 0.0
        %2279 = vmatprep.subr.mxu0 0.0
        %2280 = vmatpush1.msra.mxu0 0.0
        %2281 = vmatprep.subr.mxu0 0.0
        %2282 = vmatpush1.msra.mxu0 0.0
        %2283 = vmatprep.subr.mxu0 0.0
        %2284 = vmatpush1.msra.mxu0 %v2267
        %2285 = vmatprep.subr.mxu0 0.0
        %2286 = vmatpush1.msra.mxu0 %v2266
        %2287 = vmatprep.subr.mxu0 0.0
        %2288 = vmatpush1.msra.mxu0 %v2265
        %2289 = vmatprep.subr.mxu0 0.0
        %2290 = vmatpush1.msra.mxu0 %v2264
        %2291 = vmatprep.subr.mxu0 0.0
        %2292 = vmatpush1.msra.mxu0 %v2263
        %2293 = vmatprep.subr.mxu0 0.0
        %2294 = vmatpush1.msra.mxu0 %v2262
        %2295 = vmatprep.subr.mxu0 0.0
        %2296 = vmatpush1.msra.mxu0 %v2261
        %2297 = vmatprep.subr.mxu0 0.0
        %2298 = vmatpush1.msra.mxu0 %v2260
        %2299 = vmatprep.subr.mxu0 0.0
        %2300 = vmatpush1.msra.mxu0 %v2259
        %2301 = vmatprep.subr.mxu0 0.0
        %2302 = vmatpush1.msra.mxu0 %v2258
        %2303 = vmatprep.subr.mxu0 0.0
        %2304 = vmatpush2.msra.mxu0 0.0
        %2305 = vmatprep.subr.mxu0 0.0
        %2306 = vmatpush2.msra.mxu0 0.0
        %2307 = vmatprep.subr.mxu0 0.0
        %2308 = vmatpush2.msra.mxu0 0.0
        %2309 = vmatprep.subr.mxu0 0.0
        %2310 = vmatpush2.msra.mxu0 0.0
        %2311 = vmatprep.subr.mxu0 0.0
        %2312 = vmatpush2.msra.mxu0 0.0
        %2313 = vmatprep.subr.mxu0 0.0
        %2314 = vmatpush2.msra.mxu0 0.0
        %2315 = vmatprep.subr.mxu0 0.0
        %2316 = vmatpush2.msra.mxu0 0.0
        %2317 = vmatprep.subr.mxu0 0.0
        %2318 = vmatpush2.msra.mxu0 0.0
        %2319 = vmatprep.subr.mxu0 0.0
        %2320 = vmatpush2.msra.mxu0 0.0
        %2321 = vmatprep.subr.mxu0 0.0
        %2322 = vmatpush2.msra.mxu0 0.0
        %2323 = vmatprep.subr.mxu0 0.0
        %2324 = vmatpush2.msra.mxu0 0.0
        %2325 = vmatprep.subr.mxu0 0.0
        %2326 = vmatpush2.msra.mxu0 0.0
        %2327 = vmatprep.subr.mxu0 0.0
        %2328 = vmatpush2.msra.mxu0 0.0
        %2329 = vmatprep.subr.mxu0 0.0
        %2330 = vmatpush2.msra.mxu0 0.0
        %2331 = vmatprep.subr.mxu0 0.0
        %2332 = vmatpush2.msra.mxu0 0.0
        %2333 = vmatprep.subr.mxu0 0.0
        %2334 = vmatpush2.msra.mxu0 0.0
        %2335 = vmatprep.mubr.f32.mxu0 0.0
        %2336 = vmatmul.mubr.f32.gmra.mxu0 %v2269
        %v2337 = vpop.f32.mrf.mxu0
        %v2338 = vadd.f32 0.0, %v2337
        %v2339 = vpop.f32.mrf.mxu0
        %2340 = vdwg.mxu0
        %v2341 = vadd.f32 %v2254, %v2338
        %s2342 = scalar_lea.vmem %s9, 240
        %v2343 = vld [vmem:[%s2342] sm:$0xff]
        %v2344 = vld [vmem:[%s2342 + $0x8] sm:$0xff]
        %v2345 = vld [vmem:[%s2342 + $0x10] sm:$0xff]
        %v2346 = vld [vmem:[%s2342 + $0x18] sm:$0xff]
        %v2347 = vld [vmem:[%s2342 + $0x20] sm:$0xff]
        %v2348 = vld [vmem:[%s2342 + $0x28] sm:$0xff]
        %v2349 = vld [vmem:[%s2342 + $0x30] sm:$0xff]
        %v2350 = vld [vmem:[%s2342 + $0x38] sm:$0xff]
        %v2351 = vld [vmem:[%s2342 + $0x40] sm:$0xff]
        %v2352 = vld [vmem:[%s2342 + $0x48] sm:$0xff]
        %v2353 = vrot.slane %v2086, 3
        %v2354 = vsel %vm2112, %v2353, 0
        %2356 = vmatprep.subr.mxu0 0.0
        %2357 = vmatpush1.msra.mxu0 0.0
        %2358 = vmatprep.subr.mxu0 0.0
        %2359 = vmatpush1.msra.mxu0 0.0
        %2360 = vmatprep.subr.mxu0 0.0
        %2361 = vmatpush1.msra.mxu0 0.0
        %2362 = vmatprep.subr.mxu0 0.0
        %2363 = vmatpush1.msra.mxu0 0.0
        %2364 = vmatprep.subr.mxu0 0.0
        %2365 = vmatpush1.msra.mxu0 0.0
        %2366 = vmatprep.subr.mxu0 0.0
        %2367 = vmatpush1.msra.mxu0 0.0
        %2368 = vmatprep.subr.mxu0 0.0
        %2369 = vmatpush1.msra.mxu0 %v2352
        %2370 = vmatprep.subr.mxu0 0.0
        %2371 = vmatpush1.msra.mxu0 %v2351
        %2372 = vmatprep.subr.mxu0 0.0
        %2373 = vmatpush1.msra.mxu0 %v2350
        %2374 = vmatprep.subr.mxu0 0.0
        %2375 = vmatpush1.msra.mxu0 %v2349
        %2376 = vmatprep.subr.mxu0 0.0
        %2377 = vmatpush1.msra.mxu0 %v2348
        %2378 = vmatprep.subr.mxu0 0.0
        %2379 = vmatpush1.msra.mxu0 %v2347
        %2380 = vmatprep.subr.mxu0 0.0
        %2381 = vmatpush1.msra.mxu0 %v2346
        %2382 = vmatprep.subr.mxu0 0.0
        %2383 = vmatpush1.msra.mxu0 %v2345
        %2384 = vmatprep.subr.mxu0 0.0
        %2385 = vmatpush1.msra.mxu0 %v2344
        %2386 = vmatprep.subr.mxu0 0.0
        %2387 = vmatpush1.msra.mxu0 %v2343
        %2388 = vmatprep.subr.mxu0 0.0
        %2389 = vmatpush2.msra.mxu0 0.0
        %2390 = vmatprep.subr.mxu0 0.0
        %2391 = vmatpush2.msra.mxu0 0.0
        %2392 = vmatprep.subr.mxu0 0.0
        %2393 = vmatpush2.msra.mxu0 0.0
        %2394 = vmatprep.subr.mxu0 0.0
        %2395 = vmatpush2.msra.mxu0 0.0
        %2396 = vmatprep.subr.mxu0 0.0
        %2397 = vmatpush2.msra.mxu0 0.0
        %2398 = vmatprep.subr.mxu0 0.0
        %2399 = vmatpush2.msra.mxu0 0.0
        %2400 = vmatprep.subr.mxu0 0.0
        %2401 = vmatpush2.msra.mxu0 0.0
        %2402 = vmatprep.subr.mxu0 0.0
        %2403 = vmatpush2.msra.mxu0 0.0
        %2404 = vmatprep.subr.mxu0 0.0
        %2405 = vmatpush2.msra.mxu0 0.0
        %2406 = vmatprep.subr.mxu0 0.0
        %2407 = vmatpush2.msra.mxu0 0.0
        %2408 = vmatprep.subr.mxu0 0.0
        %2409 = vmatpush2.msra.mxu0 0.0
        %2410 = vmatprep.subr.mxu0 0.0
        %2411 = vmatpush2.msra.mxu0 0.0
        %2412 = vmatprep.subr.mxu0 0.0
        %2413 = vmatpush2.msra.mxu0 0.0
        %2414 = vmatprep.subr.mxu0 0.0
        %2415 = vmatpush2.msra.mxu0 0.0
        %2416 = vmatprep.subr.mxu0 0.0
        %2417 = vmatpush2.msra.mxu0 0.0
        %2418 = vmatprep.subr.mxu0 0.0
        %2419 = vmatpush2.msra.mxu0 0.0
        %2420 = vmatprep.mubr.f32.mxu0 0.0
        %2421 = vmatmul.mubr.f32.gmra.mxu0 %v2354
        %v2422 = vpop.f32.mrf.mxu0
        %v2423 = vadd.f32 0.0, %v2422
        %v2424 = vpop.f32.mrf.mxu0
        %2425 = vdwg.mxu0
        %v2426 = vadd.f32 %v2341, %v2423
        %s2427 = scalar_lea.vmem %s9, 320
        %v2428 = vld [vmem:[%s2427] sm:$0xff]
        %v2429 = vld [vmem:[%s2427 + $0x8] sm:$0xff]
        %v2430 = vld [vmem:[%s2427 + $0x10] sm:$0xff]
        %v2431 = vld [vmem:[%s2427 + $0x18] sm:$0xff]
        %v2432 = vld [vmem:[%s2427 + $0x20] sm:$0xff]
        %v2433 = vld [vmem:[%s2427 + $0x28] sm:$0xff]
        %v2434 = vld [vmem:[%s2427 + $0x30] sm:$0xff]
        %v2435 = vld [vmem:[%s2427 + $0x38] sm:$0xff]
        %v2436 = vld [vmem:[%s2427 + $0x40] sm:$0xff]
        %v2437 = vld [vmem:[%s2427 + $0x48] sm:$0xff]
        %v2438 = vrot.slane %v2086, 4
        %v2439 = vsel %vm2112, %v2438, 0
        %2441 = vmatprep.subr.mxu0 0.0
        %2442 = vmatpush1.msra.mxu0 0.0
        %2443 = vmatprep.subr.mxu0 0.0
        %2444 = vmatpush1.msra.mxu0 0.0
        %2445 = vmatprep.subr.mxu0 0.0
        %2446 = vmatpush1.msra.mxu0 0.0
        %2447 = vmatprep.subr.mxu0 0.0
        %2448 = vmatpush1.msra.mxu0 0.0
        %2449 = vmatprep.subr.mxu0 0.0
        %2450 = vmatpush1.msra.mxu0 0.0
        %2451 = vmatprep.subr.mxu0 0.0
        %2452 = vmatpush1.msra.mxu0 0.0
        %2453 = vmatprep.subr.mxu0 0.0
        %2454 = vmatpush1.msra.mxu0 %v2437
        %2455 = vmatprep.subr.mxu0 0.0
        %2456 = vmatpush1.msra.mxu0 %v2436
        %2457 = vmatprep.subr.mxu0 0.0
        %2458 = vmatpush1.msra.mxu0 %v2435
        %2459 = vmatprep.subr.mxu0 0.0
        %2460 = vmatpush1.msra.mxu0 %v2434
        %2461 = vmatprep.subr.mxu0 0.0
        %2462 = vmatpush1.msra.mxu0 %v2433
        %2463 = vmatprep.subr.mxu0 0.0
        %2464 = vmatpush1.msra.mxu0 %v2432
        %2465 = vmatprep.subr.mxu0 0.0
        %2466 = vmatpush1.msra.mxu0 %v2431
        %2467 = vmatprep.subr.mxu0 0.0
        %2468 = vmatpush1.msra.mxu0 %v2430
        %2469 = vmatprep.subr.mxu0 0.0
        %2470 = vmatpush1.msra.mxu0 %v2429
        %2471 = vmatprep.subr.mxu0 0.0
        %2472 = vmatpush1.msra.mxu0 %v2428
        %2473 = vmatprep.subr.mxu0 0.0
        %2474 = vmatpush2.msra.mxu0 0.0
        %2475 = vmatprep.subr.mxu0 0.0
        %2476 = vmatpush2.msra.mxu0 0.0
        %2477 = vmatprep.subr.mxu0 0.0
        %2478 = vmatpush2.msra.mxu0 0.0
        %2479 = vmatprep.subr.mxu0 0.0
        %2480 = vmatpush2.msra.mxu0 0.0
        %2481 = vmatprep.subr.mxu0 0.0
        %2482 = vmatpush2.msra.mxu0 0.0
        %2483 = vmatprep.subr.mxu0 0.0
        %2484 = vmatpush2.msra.mxu0 0.0
        %2485 = vmatprep.subr.mxu0 0.0
        %2486 = vmatpush2.msra.mxu0 0.0
        %2487 = vmatprep.subr.mxu0 0.0
        %2488 = vmatpush2.msra.mxu0 0.0
        %2489 = vmatprep.subr.mxu0 0.0
        %2490 = vmatpush2.msra.mxu0 0.0
        %2491 = vmatprep.subr.mxu0 0.0
        %2492 = vmatpush2.msra.mxu0 0.0
        %2493 = vmatprep.subr.mxu0 0.0
        %2494 = vmatpush2.msra.mxu0 0.0
        %2495 = vmatprep.subr.mxu0 0.0
        %2496 = vmatpush2.msra.mxu0 0.0
        %2497 = vmatprep.subr.mxu0 0.0
        %2498 = vmatpush2.msra.mxu0 0.0
        %2499 = vmatprep.subr.mxu0 0.0
        %2500 = vmatpush2.msra.mxu0 0.0
        %2501 = vmatprep.subr.mxu0 0.0
        %2502 = vmatpush2.msra.mxu0 0.0
        %2503 = vmatprep.subr.mxu0 0.0
        %2504 = vmatpush2.msra.mxu0 0.0
        %2505 = vmatprep.mubr.f32.mxu0 0.0
        %2506 = vmatmul.mubr.f32.gmra.mxu0 %v2439
        %v2507 = vpop.f32.mrf.mxu0
        %v2508 = vadd.f32 0.0, %v2507
        %v2509 = vpop.f32.mrf.mxu0
        %2510 = vdwg.mxu0
        %v2511 = vadd.f32 %v2426, %v2508
        %v2512 = vld [vmem:[%s10] sm:$0x1]
        %v2513 = vadd.f32 %v2511, %v2512
        %v2514 = vmax.f32 %v2513, 0.0
        %v2515 = vld [vmem:[%s11] sm:$0xff]
        %v2516 = vld [vmem:[%s11 + $0x8] sm:$0xff]
        %v2517 = vld [vmem:[%s11 + $0x10] sm:$0xff]
        %v2518 = vld [vmem:[%s11 + $0x18] sm:$0xff]
        %v2519 = vld [vmem:[%s11 + $0x20] sm:$0xff]
        %v2520 = vld [vmem:[%s11 + $0x28] sm:$0xff]
        %v2521 = vld [vmem:[%s11 + $0x30] sm:$0xff]
        %v2522 = vld [vmem:[%s11 + $0x38] sm:$0xff]
        %v2523 = vld [vmem:[%s11 + $0x40] sm:$0xff]
        %v2524 = vld [vmem:[%s11 + $0x48] sm:$0xff]
        %v2525 = vld [vmem:[%s11 + $0x50] sm:$0xff]
        %v2526 = vld [vmem:[%s11 + $0x58] sm:$0xff]
        %v2527 = vld [vmem:[%s11 + $0x60] sm:$0xff]
        %v2528 = vld [vmem:[%s11 + $0x68] sm:$0xff]
        %v2529 = vld [vmem:[%s11 + $0x70] sm:$0xff]
        %v2530 = vld [vmem:[%s11 + $0x78] sm:$0xff]
        %v2531 = vld [vmem:[%s12] sm:$0x1]
        %2532 = vmatprep.subr.mxu0 0.0
        %2533 = vmatpush1.msra.mxu0 %v2530
        %2534 = vmatprep.subr.mxu0 0.0
        %2535 = vmatpush1.msra.mxu0 %v2529
        %2536 = vmatprep.subr.mxu0 0.0
        %2537 = vmatpush1.msra.mxu0 %v2528
        %2538 = vmatprep.subr.mxu0 0.0
        %2539 = vmatpush1.msra.mxu0 %v2527
        %2540 = vmatprep.subr.mxu0 0.0
        %2541 = vmatpush1.msra.mxu0 %v2526
        %2542 = vmatprep.subr.mxu0 0.0
        %2543 = vmatpush1.msra.mxu0 %v2525
        %2544 = vmatprep.subr.mxu0 0.0
        %2545 = vmatpush1.msra.mxu0 %v2524
        %2546 = vmatprep.subr.mxu0 0.0
        %2547 = vmatpush1.msra.mxu0 %v2523
        %2548 = vmatprep.subr.mxu0 0.0
        %2549 = vmatpush1.msra.mxu0 %v2522
        %2550 = vmatprep.subr.mxu0 0.0
        %2551 = vmatpush1.msra.mxu0 %v2521
        %2552 = vmatprep.subr.mxu0 0.0
        %2553 = vmatpush1.msra.mxu0 %v2520
        %2554 = vmatprep.subr.mxu0 0.0
        %2555 = vmatpush1.msra.mxu0 %v2519
        %2556 = vmatprep.subr.mxu0 0.0
        %2557 = vmatpush1.msra.mxu0 %v2518
        %2558 = vmatprep.subr.mxu0 0.0
        %2559 = vmatpush1.msra.mxu0 %v2517
        %2560 = vmatprep.subr.mxu0 0.0
        %2561 = vmatpush1.msra.mxu0 %v2516
        %2562 = vmatprep.subr.mxu0 0.0
        %2563 = vmatpush1.msra.mxu0 %v2515
        %2564 = vmatprep.subr.mxu0 0.0
        %2565 = vmatpush2.msra.mxu0 0.0
        %2566 = vmatprep.subr.mxu0 0.0
        %2567 = vmatpush2.msra.mxu0 0.0
        %2568 = vmatprep.subr.mxu0 0.0
        %2569 = vmatpush2.msra.mxu0 0.0
        %2570 = vmatprep.subr.mxu0 0.0
        %2571 = vmatpush2.msra.mxu0 0.0
        %2572 = vmatprep.subr.mxu0 0.0
        %2573 = vmatpush2.msra.mxu0 0.0
        %2574 = vmatprep.subr.mxu0 0.0
        %2575 = vmatpush2.msra.mxu0 0.0
        %2576 = vmatprep.subr.mxu0 0.0
        %2577 = vmatpush2.msra.mxu0 0.0
        %2578 = vmatprep.subr.mxu0 0.0
        %2579 = vmatpush2.msra.mxu0 0.0
        %2580 = vmatprep.subr.mxu0 0.0
        %2581 = vmatpush2.msra.mxu0 0.0
        %2582 = vmatprep.subr.mxu0 0.0
        %2583 = vmatpush2.msra.mxu0 0.0
        %2584 = vmatprep.subr.mxu0 0.0
        %2585 = vmatpush2.msra.mxu0 0.0
        %2586 = vmatprep.subr.mxu0 0.0
        %2587 = vmatpush2.msra.mxu0 0.0
        %2588 = vmatprep.subr.mxu0 0.0
        %2589 = vmatpush2.msra.mxu0 0.0
        %2590 = vmatprep.subr.mxu0 0.0
        %2591 = vmatpush2.msra.mxu0 0.0
        %2592 = vmatprep.subr.mxu0 0.0
        %2593 = vmatpush2.msra.mxu0 0.0
        %2594 = vmatprep.subr.mxu0 0.0
        %2595 = vmatpush2.msra.mxu0 0.0
        %2596 = vmatprep.mubr.f32.mxu0 0.0
        %2597 = vmatmul.mubr.f32.gmra.mxu0 %v2514
        %v2598 = vpop.f32.mrf.mxu0
        %v2599 = vadd.f32 %v2531, %v2598
        %v2600 = vpop.f32.mrf.mxu0
        %2601 = vdwg.mxu0
        %v2602 = vmax.f32 %v2599, 0.0
        %v2603 = vld [vmem:[%s13] sm:$0xff]
        %v2604 = vld [vmem:[%s13 + $0x8] sm:$0xff]
        %v2605 = vld [vmem:[%s13 + $0x10] sm:$0xff]
        %v2606 = vld [vmem:[%s13 + $0x18] sm:$0xff]
        %v2607 = vld [vmem:[%s13 + $0x20] sm:$0xff]
        %v2608 = vld [vmem:[%s13 + $0x28] sm:$0xff]
        %v2609 = vld [vmem:[%s13 + $0x30] sm:$0xff]
        %v2610 = vld [vmem:[%s13 + $0x38] sm:$0xff]
        %v2611 = vld [vmem:[%s13 + $0x40] sm:$0xff]
        %v2612 = vld [vmem:[%s13 + $0x48] sm:$0xff]
        %v2613 = vld [vmem:[%s13 + $0x50] sm:$0xff]
        %v2614 = vld [vmem:[%s13 + $0x58] sm:$0xff]
        %v2615 = vld [vmem:[%s13 + $0x60] sm:$0xff]
        %v2616 = vld [vmem:[%s13 + $0x68] sm:$0xff]
        %v2617 = vld [vmem:[%s13 + $0x70] sm:$0xff]
        %v2618 = vld [vmem:[%s13 + $0x78] sm:$0xff]
        %v2619 = vld [vmem:[%s14] sm:$0x1]
        %2620 = vmatprep.subr.mxu0 0.0
        %2621 = vmatpush1.msra.mxu0 %v2618
        %2622 = vmatprep.subr.mxu0 0.0
        %2623 = vmatpush1.msra.mxu0 %v2617
        %2624 = vmatprep.subr.mxu0 0.0
        %2625 = vmatpush1.msra.mxu0 %v2616
        %2626 = vmatprep.subr.mxu0 0.0
        %2627 = vmatpush1.msra.mxu0 %v2615
        %2628 = vmatprep.subr.mxu0 0.0
        %2629 = vmatpush1.msra.mxu0 %v2614
        %2630 = vmatprep.subr.mxu0 0.0
        %2631 = vmatpush1.msra.mxu0 %v2613
        %2632 = vmatprep.subr.mxu0 0.0
        %2633 = vmatpush1.msra.mxu0 %v2612
        %2634 = vmatprep.subr.mxu0 0.0
        %2635 = vmatpush1.msra.mxu0 %v2611
        %2636 = vmatprep.subr.mxu0 0.0
        %2637 = vmatpush1.msra.mxu0 %v2610
        %2638 = vmatprep.subr.mxu0 0.0
        %2639 = vmatpush1.msra.mxu0 %v2609
        %2640 = vmatprep.subr.mxu0 0.0
        %2641 = vmatpush1.msra.mxu0 %v2608
        %2642 = vmatprep.subr.mxu0 0.0
        %2643 = vmatpush1.msra.mxu0 %v2607
        %2644 = vmatprep.subr.mxu0 0.0
        %2645 = vmatpush1.msra.mxu0 %v2606
        %2646 = vmatprep.subr.mxu0 0.0
        %2647 = vmatpush1.msra.mxu0 %v2605
        %2648 = vmatprep.subr.mxu0 0.0
        %2649 = vmatpush1.msra.mxu0 %v2604
        %2650 = vmatprep.subr.mxu0 0.0
        %2651 = vmatpush1.msra.mxu0 %v2603
        %2652 = vmatprep.subr.mxu0 0.0
        %2653 = vmatpush2.msra.mxu0 0.0
        %2654 = vmatprep.subr.mxu0 0.0
        %2655 = vmatpush2.msra.mxu0 0.0
        %2656 = vmatprep.subr.mxu0 0.0
        %2657 = vmatpush2.msra.mxu0 0.0
        %2658 = vmatprep.subr.mxu0 0.0
        %2659 = vmatpush2.msra.mxu0 0.0
        %2660 = vmatprep.subr.mxu0 0.0
        %2661 = vmatpush2.msra.mxu0 0.0
        %2662 = vmatprep.subr.mxu0 0.0
        %2663 = vmatpush2.msra.mxu0 0.0
        %2664 = vmatprep.subr.mxu0 0.0
        %2665 = vmatpush2.msra.mxu0 0.0
        %2666 = vmatprep.subr.mxu0 0.0
        %2667 = vmatpush2.msra.mxu0 0.0
        %2668 = vmatprep.subr.mxu0 0.0
        %2669 = vmatpush2.msra.mxu0 0.0
        %2670 = vmatprep.subr.mxu0 0.0
        %2671 = vmatpush2.msra.mxu0 0.0
        %2672 = vmatprep.subr.mxu0 0.0
        %2673 = vmatpush2.msra.mxu0 0.0
        %2674 = vmatprep.subr.mxu0 0.0
        %2675 = vmatpush2.msra.mxu0 0.0
        %2676 = vmatprep.subr.mxu0 0.0
        %2677 = vmatpush2.msra.mxu0 0.0
        %2678 = vmatprep.subr.mxu0 0.0
        %2679 = vmatpush2.msra.mxu0 0.0
        %2680 = vmatprep.subr.mxu0 0.0
        %2681 = vmatpush2.msra.mxu0 0.0
        %2682 = vmatprep.subr.mxu0 0.0
        %2683 = vmatpush2.msra.mxu0 0.0
        %2684 = vmatprep.mubr.f32.mxu0 0.0
        %2685 = vmatmul.mubr.f32.gmra.mxu0 %v2602
        %v2686 = vpop.f32.mrf.mxu0
        %v2687 = vadd.f32 %v2619, %v2686
        %v2688 = vpop.f32.mrf.mxu0
        %2689 = vdwg.mxu0
        %2690 = vst [vmem:[%s486] sm:$0x1] %v2687
        %s2691 = sand.u32 %s357, 1
        %s2692 = scalar_lea.sflag [#allocation3], %s2691
        %s2693 = sand.u32 %s357, 1
        %s2694 = scalar_lea.vmem [#allocation2], %s2693
        // Predicated region
        $region81: #{lenet_forward.1} parent=79 // pred_check
          %p2695 = pneg %p367
        $region82: #{lenet_forward.1} parent=79 // pred_check_branch
          %2697 = sbr.rel (%p2695) target = $region84
        $region83: #{lenet_forward.1} parent=79 // pred_region
          %s2699 = ssub.s32 16, 16
          %2700 = vsyncadd %s2692, %s2699
          %s2701 = smul.addr %s29, 16
          %s2702 = scalar_lea.hbm %s15, %s2701
          %s2704 = sshll.u32 %s2694, 4
          %s2705 = int_to_ptr.vmem [resolvable:$true] %s2704
          %2707 = dma.vmem_to_hbm [thread:$0]  %s2705, 16, %s2702, %s2692
        $region84: #{lenet_forward.1} parent=79 // pred_fallthru
          _
      $region80: #{lenet_forward.1} parent=5 // pred_fallthru
        _
      %p2708 = scmp.le.s32.totalorder 2, %s24
      // Predicated region
      $region85: #{lenet_forward.1} parent=5 // pred_check
        %p2709 = pneg %p2708
      $region86: #{lenet_forward.1} parent=5 // pred_check_branch
        %2711 = sbr.rel (%p2709) target = $region88
      $region87: #{lenet_forward.1} parent=5 // pred_region
        %s2712 = ssub.s32 %s24, 2
        // Predicated region
        $region89: #{lenet_forward.1} parent=87 // pred_check
          %p2713 = pneg %p373
        $region90: #{lenet_forward.1} parent=87 // pred_check_branch
          %2715 = sbr.rel (%p2713) target = $region92
        $region91: #{lenet_forward.1} parent=87 // pred_region
          %s2716 = sand.u32 %s358, 1
          %s2717 = scalar_lea.sflag [#allocation3], %s2716
          %s2718 = sand.u32 %s358, 1
          %s2719 = scalar_lea.vmem [#allocation2], %s2718
          %2720 = dma.done %s2717, 16
        $region92: #{lenet_forward.1} parent=87 // pred_fallthru
          _
      $region88: #{lenet_forward.1} parent=5 // pred_fallthru
        _
    $region6: #{lenet_forward.1} parent=1 // loop_footer
      %s28 = sadd.s32 1, %s24
    $region7: #{lenet_forward.1} parent=1 // loop_footer_branch
      %23 = sbr.rel target = $region3
    $region8: #{lenet_forward.1} parent=1 // loop_exit
      _
    %2721 = vsyncpa [#allocation3], 1
    %s2722 = scalar_lea.sflag [#allocation3], 1
    %2723 = vsyncpa %s2722, 1

</llo_original>
